<compile_context>
chip_gen: v6e
topology: v6e:2x2x1
jax: 0.10.0
libtpu: 0.0.40
codegen_flags: <defaults>
</compile_context>

<pallas_src>
from functools import partial
from typing import NamedTuple

import jax
import jax.numpy as jnp
from jax.experimental import pallas as pl
from jax.experimental.pallas import tpu as pltpu


def _round_up(x, m):
    return ((x + m - 1) // m) * m


# ---------------------------------------------------------------------------
# Pallas kernels: tiled (cols @ weight) matmul + fused LeakyReLU(0.2) epilogue
#
#   grid = (N_tiles, M_tiles, K_tiles); N/M "parallel", K "arbitrary".
#   Grid order (N, M, K) keeps one (TK, TN) weight block resident in VMEM
#   across the whole M sweep (its block index is constant in M).
# ---------------------------------------------------------------------------
def _mm_kernel_single_k(x_ref, w_ref, o_ref, *, apply_lrelu, slope):
    acc = jnp.dot(x_ref[...], w_ref[...], preferred_element_type=jnp.float32)
    if apply_lrelu:
        acc = jnp.where(acc >= 0.0, acc, slope * acc)
    o_ref[...] = acc.astype(o_ref.dtype)


def _mm_kernel_multi_k(x_ref, w_ref, o_ref, acc_ref, *, apply_lrelu, slope):
    k = pl.program_id(2)

    @pl.when(k == 0)
    def _():
        acc_ref[...] = jnp.zeros_like(acc_ref)

    acc_ref[...] += jnp.dot(x_ref[...], w_ref[...], preferred_element_type=jnp.float32)

    @pl.when(k == pl.num_programs(2) - 1)
    def _():
        acc = acc_ref[...]
        if apply_lrelu:
            acc = jnp.where(acc >= 0.0, acc, slope * acc)
        o_ref[...] = acc.astype(o_ref.dtype)


def _choose_tm(m):
    """Largest multiple-of-16 tile <= 1024 that divides the (16-padded) M."""
    m_pad = _round_up(m, 16)
    tm = min(1024, m_pad)
    tm -= tm % 16
    while m_pad % tm:
        tm -= 16
    return tm, m_pad


def _choose_tk(k_pad):
    tk = min(2048, k_pad)
    while k_pad % tk:
        tk -= 128
    return tk


def _choose_tn(n_pad, m_tiles):
    if n_pad <= 256:
        return n_pad
    if m_tiles >= 2:
        tn = min(512, n_pad)
    else:
        # Single M tile: split N so the second TensorCore (v7x) gets work, but
        # keep the per-step N width >= 256 for the 256-wide v6e/v7x MXU.
        tn = max(256, _round_up(n_pad // 2, 128))
    while n_pad % tn:
        tn -= 128
    return tn


def _weight_block_spec(tk, tn, n_tiles, k_tiles):
    if n_tiles == 1 and k_tiles == 1:
        # Constant block index: the whole weight is DMA'd into VMEM once and
        # stays resident across the M sweep -> a single buffer suffices.
        try:
            return pl.BlockSpec((tk, tn), lambda j, i, k: (0, 0),
                                pipeline_mode=pl.Buffered(1))
        except Exception:  # older jax without pipeline_mode / Buffered
            return pl.BlockSpec((tk, tn), lambda j, i, k: (0, 0))
    return pl.BlockSpec((tk, tn), lambda j, i, k: (k, j))


def _matmul_act(x2d, w_mat, *, apply_lrelu, out_dtype):
    """x2d: (M, K) bf16 cols; w_mat: (K_pad, N_pad) bf16 pre-padded weight.

    Returns (M, N_pad) in out_dtype; the caller slices the valid OC columns.
    """
    M, K = x2d.shape
    K_pad, N_pad = w_mat.shape
    assert K_pad == _round_up(K, 128) and K_pad >= K

    TM, M_pad = _choose_tm(M)
    TK = _choose_tk(K_pad)
    m_tiles = M_pad // TM
    TN = _choose_tn(N_pad, m_tiles)
    n_tiles = N_pad // TN
    k_tiles = K_pad // TK

    if M_pad != M or K_pad != K:
        # No-op for the hidden layers (channels are multiples of 8 and TM | M);
        # only the tiny head layer (M = batch) actually pads here.
        x2d = jnp.pad(x2d, ((0, M_pad - M), (0, K_pad - K)))

    if k_tiles == 1:
        kernel = partial(_mm_kernel_single_k, apply_lrelu=apply_lrelu, slope=0.2)
        scratch = []
    else:
        kernel = partial(_mm_kernel_multi_k, apply_lrelu=apply_lrelu, slope=0.2)
        scratch = [pltpu.VMEM((TM, TN), jnp.float32)]

    out = pl.pallas_call(
        kernel,
        out_shape=jax.ShapeDtypeStruct((M_pad, N_pad), out_dtype),
        grid_spec=pltpu.PrefetchScalarGridSpec(
            num_scalar_prefetch=0,
            grid=(n_tiles, m_tiles, k_tiles),
            in_specs=[
                pl.BlockSpec((TM, TK), lambda j, i, k: (i, k)),
                _weight_block_spec(TK, TN, n_tiles, k_tiles),
            ],
            out_specs=pl.BlockSpec((TM, TN), lambda j, i, k: (i, j)),
            scratch_shapes=scratch,
        ),
        compiler_params=pltpu.CompilerParams(
            dimension_semantics=("parallel", "parallel", "arbitrary"),
            vmem_limit_bytes=32 * 1024 * 1024,
        ),
    )(x2d, w_mat)
    return out[:M]


# ---------------------------------------------------------------------------
# Glue: channels-last im2col (pure slicing/concat, no arithmetic, no transposes)
# ---------------------------------------------------------------------------
def _im2col_nhwc(x, kh, kw, stride, pad):
    """x: (B, H, W, C) -> (B*OH*OW, kh*kw*C) with K ordered (kh, kw, c)."""
    B, H, W, C = x.shape
    xp = jnp.pad(x, ((0, 0), (pad, pad), (pad, pad), (0, 0)))
    OH = (H + 2 * pad - kh) // stride + 1
    OW = (W + 2 * pad - kw) // stride + 1
    patches = []
    for i in range(kh):
        for j in range(kw):
            patches.append(
                xp[:, i : i + stride * OH : stride, j : j + stride * OW : stride, :]
            )  # (B, OH, OW, C)
    col = jnp.concatenate(patches, axis=-1)  # (B, OH, OW, kh*kw*C)
    return col.reshape(B * OH * OW, kh * kw * C), OH, OW


class _LayerCfg(NamedTuple):
    kh: int
    kw: int
    cin: int          # channels of the activation fed to this layer (padded)
    oc: int           # true output channels
    stride: int
    pad: int
    lrelu: bool
    out_dtype: object


def _conv2d_layer(h, w_mat, cfg):
    """h: (B, H, W, cfg.cin) NHWC -> (B, OH, OW, cfg.oc) NHWC."""
    B, H, W, C = h.shape
    assert C == cfg.cin, (C, cfg)
    if cfg.pad == 0 and H == cfg.kh and W == cfg.kw:
        # 4x4 valid conv on a 4x4 map (the head): im2col is a pure reshape.
        cols, OH, OW = h.reshape(B, cfg.kh * cfg.kw * C), 1, 1
    else:
        cols, OH, OW = _im2col_nhwc(h, cfg.kh, cfg.kw, cfg.stride, cfg.pad)
    out = _matmul_act(cols, w_mat, apply_lrelu=cfg.lrelu, out_dtype=cfg.out_dtype)
    return out[:, : cfg.oc].reshape(B, OH, OW, cfg.oc)


# ---------------------------------------------------------------------------
# WGANDiscriminator: params, one-time weight prep, forward
# ---------------------------------------------------------------------------
_LAYER_STRIDE_PAD = ((2, 1), (2, 1), (2, 1), (2, 1), (1, 0))


def init_params(key, img_channels=3, feature_d=64):
    """Conv weights (PyTorch OIHW layout), N(0, 0.02) init, bias-free."""
    fd = feature_d
    shapes = [
        (fd,     img_channels, 4, 4),
        (fd * 2, fd,           4, 4),
        (fd * 4, fd * 2,       4, 4),
        (fd * 8, fd * 4,       4, 4),
        (1,      fd * 8,       4, 4),
    ]
    keys = jax.random.split(key, len(shapes))
    return [0.02 * jax.random.normal(k, s, dtype=jnp.float32) for k, s in zip(keys, shapes)]


def prepare_params(params, img_channels=3):
    """One-time weight prep: pad C, (OC,C,KH,KW)->(K,OC), bf16, pad to (K_pad, N_pad)."""
    w_mats, cfgs = [], []
    cin = _round_up(img_channels, 8)        # image channels padded once (3 -> 8)
    for li, (w, (stride, pad)) in enumerate(zip(params, _LAYER_STRIDE_PAD)):
        oc, c, kh, kw = w.shape
        assert c <= cin
        wp = jnp.pad(w, ((0, 0), (0, cin - c), (0, 0), (0, 0)))   # zero-pad input C
        k = kh * kw * cin
        k_pad = _round_up(k, 128)
        n_pad = _round_up(oc, 128)
        w_mat = jnp.transpose(wp, (2, 3, 1, 0)).reshape(k, oc).astype(jnp.bfloat16)
        w_mat = jnp.pad(w_mat, ((0, k_pad - k), (0, n_pad - oc)))
        w_mats.append(w_mat)
        last = li == len(params) - 1
        cfgs.append(_LayerCfg(kh, kw, cin, oc, stride, pad,
                              lrelu=not last,
                              out_dtype=jnp.float32 if last else jnp.bfloat16))
        cin = oc   # next layer's activation channels (DCGAN widths are multiples of 8)
    return tuple(w_mats), tuple(cfgs)


def wgan_discriminator_forward(w_mats, x, cfgs):
    """x: (B, img_channels, 64, 64) NCHW (PyTorch layout). Returns (B,) scores."""
    B, C, H, W = x.shape
    # NCHW -> NHWC once; bf16 activations end-to-end; pad image channels once so
    # K = KH*KW*C is a multiple of 128 for every layer (no cols re-pad copies).
    h = jnp.transpose(x, (0, 2, 3, 1)).astype(jnp.bfloat16)
    cin0 = cfgs[0].cin
    if cin0 > C:
        h = jnp.pad(h, ((0, 0), (0, 0), (0, 0), (0, cin0 - C)))
    for w_mat, cfg in zip(w_mats, cfgs):
        h = _conv2d_layer(h, w_mat, cfg)
    return h.reshape(-1).astype(jnp.float32)    # (B,1,1,1) -> (B,), like .view(-1)


# ---------------------------------------------------------------------------
# Pure-JAX f32 reference (correctness sanity check)
# ---------------------------------------------------------------------------
def _reference_forward(params, x):
    def conv(v, w, stride, pad):
        return jax.lax.conv_general_dilated(
            v, w, window_strides=(stride, stride),
            padding=[(pad, pad), (pad, pad)],
            dimension_numbers=("NCHW", "OIHW", "NCHW"),
        )

    def lrelu(v):
        return jnp.where(v >= 0.0, v, 0.2 * v)

    h = x
    for i, (w, (stride, pad)) in enumerate(zip(params, _LAYER_STRIDE_PAD)):
        h = conv(h, w, stride, pad)
        if i < len(params) - 1:
            h = lrelu(h)
    return h.reshape(-1)


if __name__ == "__main__":
    # DCGAN critic expects 64x64 input so the final 4x4 valid conv collapses the
    # spatial dims to 1x1; feature_d=8 keeps the channel counts small.
    B, C, H, W = 2, 3, 64, 64
    FEATURE_D = 8

    key = jax.random.PRNGKey(0)
    kx, kp = jax.random.split(key)
    x = jax.random.normal(kx, (B, C, H, W), dtype=jnp.float32)
    params = init_params(kp, img_channels=C, feature_d=FEATURE_D)

    # One-time weight transform (transpose/reshape/cast/pad) outside the forward.
    w_mats, cfgs = prepare_params(params, img_channels=C)

    fwd = jax.jit(partial(wgan_discriminator_forward, cfgs=cfgs))
    out = jax.block_until_ready(fwd(w_mats, x))
    assert out.shape == (B,), out.shape

    ref = jax.block_until_ready(_reference_forward(params, x))
    err = float(jnp.max(jnp.abs(out - ref)))
    scale = float(jnp.max(jnp.abs(ref))) + 1e-8
    # bf16 activations/weights with f32 MXU accumulation -> a few % drift over 5 layers.
    assert err / scale < 0.08, (out, ref, err, scale)

    print("KERNEL_OK")
</pallas_src>

<mosaic_0001>
module attributes {stable_mosaic.version = 11 : i64} {
  func.func @_mm_kernel_single_k(%arg0: i32, %arg1: i32, %arg2: i32, %arg3: memref<1024x128xbf16, #tpu.memory_space<vmem>>, %arg4: memref<128x128xbf16, #tpu.memory_space<vmem>>, %arg5: memref<1024x128xbf16, #tpu.memory_space<vmem>>) attributes {dimension_semantics = [#tpu.dimension_semantics<parallel>, #tpu.dimension_semantics<parallel>, #tpu.dimension_semantics<arbitrary>], iteration_bounds = array<i64: 1, 2, 1>, scalar_prefetch = 0 : i64, scratch_operands = 0 : i64, tpu.core_type = #tpu.core_type<tc>, window_params = [{transform_indices = @transform_0, window_bounds = array<i64: 1024, 128>}, {pipeline_mode = #tpu.pipeline_mode<synchronous>, transform_indices = @transform_1, window_bounds = array<i64: 128, 128>}, {transform_indices = @transform_2, window_bounds = array<i64: 1024, 128>}]} {
    %c0 = arith.constant 0 : index
    %c0_0 = arith.constant 0 : index
    %0 = vector.load %arg3[%c0, %c0_0] : memref<1024x128xbf16, #tpu.memory_space<vmem>>, vector<1024x128xbf16>
    %c0_1 = arith.constant 0 : index
    %c0_2 = arith.constant 0 : index
    %1 = vector.load %arg4[%c0_1, %c0_2] : memref<128x128xbf16, #tpu.memory_space<vmem>>, vector<128x128xbf16>
    %cst = arith.constant dense<0.000000e+00> : vector<1024x128xf32>
    %2 = tpu.matmul %0, %1, %cst {dimension_numbers = #tpu.dot_dimension_numbers<[1], [0], [0], [1], [0, 0, 1, 1], [], []>} : vector<1024x128xbf16>, vector<128x128xbf16>, vector<1024x128xf32> -> vector<1024x128xf32>
    %cst_3 = arith.constant 0.000000e+00 : f32
    %3 = vector.broadcast %cst_3 : f32 to vector<1024x128xf32>
    %4 = arith.cmpf oge, %2, %3 : vector<1024x128xf32>
    %cst_4 = arith.constant 2.000000e-01 : f32
    %5 = vector.broadcast %cst_4 : f32 to vector<1024x128xf32>
    %6 = arith.mulf %5, %2 : vector<1024x128xf32>
    %7 = arith.select %4, %2, %6 : vector<1024x128xi1>, vector<1024x128xf32>
    %8 = arith.truncf %7 : vector<1024x128xf32> to vector<1024x128xbf16>
    %c0_5 = arith.constant 0 : index
    %c0_6 = arith.constant 0 : index
    %9 = vector.load %arg5[%c0_5, %c0_6] : memref<1024x128xbf16, #tpu.memory_space<vmem>>, vector<1024x128xbf16>
    tpu.vector_store %arg5[%c0_5, %c0_6], %8 {strides = array<i32>} : memref<1024x128xbf16, #tpu.memory_space<vmem>>, vector<1024x128xbf16>,
    return
  }
  func.func @transform_0(%arg0: i32, %arg1: i32, %arg2: i32) -> (i32, i32) {
    %c0_i32 = arith.constant 0 : i32
    return %arg1, %arg2 : i32, i32
  }
  func.func @transform_1(%arg0: i32, %arg1: i32, %arg2: i32) -> (i32, i32) {
    %c0_i32 = arith.constant 0 : i32
    %c0_i32_0 = arith.constant 0 : i32
    %c0_i32_1 = arith.constant 0 : i32
    return %c0_i32, %c0_i32_0 : i32, i32
  }
  func.func @transform_2(%arg0: i32, %arg1: i32, %arg2: i32) -> (i32, i32) {
    %c0_i32 = arith.constant 0 : i32
    return %arg1, %arg0 : i32, i32
  }
}

module attributes {stable_mosaic.version = 11 : i64} {
  func.func @_mm_kernel_single_k(%arg0: i32, %arg1: i32, %arg2: i32, %arg3: memref<512x128xbf16, #tpu.memory_space<vmem>>, %arg4: memref<128x128xbf16, #tpu.memory_space<vmem>>, %arg5: memref<512x128xbf16, #tpu.memory_space<vmem>>) attributes {dimension_semantics = [#tpu.dimension_semantics<parallel>, #tpu.dimension_semantics<parallel>, #tpu.dimension_semantics<arbitrary>], iteration_bounds = array<i64: 1, 1, 1>, scalar_prefetch = 0 : i64, scratch_operands = 0 : i64, tpu.core_type = #tpu.core_type<tc>, window_params = [{transform_indices = @transform_0, window_bounds = array<i64: 512, 128>}, {pipeline_mode = #tpu.pipeline_mode<synchronous>, transform_indices = @transform_1, window_bounds = array<i64: 128, 128>}, {transform_indices = @transform_2, window_bounds = array<i64: 512, 128>}]} {
    %c0 = arith.constant 0 : index
    %c0_0 = arith.constant 0 : index
    %0 = vector.load %arg3[%c0, %c0_0] : memref<512x128xbf16, #tpu.memory_space<vmem>>, vector<512x128xbf16>
    %c0_1 = arith.constant 0 : index
    %c0_2 = arith.constant 0 : index
    %1 = vector.load %arg4[%c0_1, %c0_2] : memref<128x128xbf16, #tpu.memory_space<vmem>>, vector<128x128xbf16>
    %cst = arith.constant dense<0.000000e+00> : vector<512x128xf32>
    %2 = tpu.matmul %0, %1, %cst {dimension_numbers = #tpu.dot_dimension_numbers<[1], [0], [0], [1], [0, 0, 1, 1], [], []>} : vector<512x128xbf16>, vector<128x128xbf16>, vector<512x128xf32> -> vector<512x128xf32>
    %cst_3 = arith.constant 0.000000e+00 : f32
    %3 = vector.broadcast %cst_3 : f32 to vector<512x128xf32>
    %4 = arith.cmpf oge, %2, %3 : vector<512x128xf32>
    %cst_4 = arith.constant 2.000000e-01 : f32
    %5 = vector.broadcast %cst_4 : f32 to vector<512x128xf32>
    %6 = arith.mulf %5, %2 : vector<512x128xf32>
    %7 = arith.select %4, %2, %6 : vector<512x128xi1>, vector<512x128xf32>
    %8 = arith.truncf %7 : vector<512x128xf32> to vector<512x128xbf16>
    %c0_5 = arith.constant 0 : index
    %c0_6 = arith.constant 0 : index
    %9 = vector.load %arg5[%c0_5, %c0_6] : memref<512x128xbf16, #tpu.memory_space<vmem>>, vector<512x128xbf16>
    tpu.vector_store %arg5[%c0_5, %c0_6], %8 {strides = array<i32>} : memref<512x128xbf16, #tpu.memory_space<vmem>>, vector<512x128xbf16>,
    return
  }
  func.func @transform_0(%arg0: i32, %arg1: i32, %arg2: i32) -> (i32, i32) {
    %c0_i32 = arith.constant 0 : i32
    return %arg1, %arg2 : i32, i32
  }
  func.func @transform_1(%arg0: i32, %arg1: i32, %arg2: i32) -> (i32, i32) {
    %c0_i32 = arith.constant 0 : i32
    %c0_i32_0 = arith.constant 0 : i32
    %c0_i32_1 = arith.constant 0 : i32
    return %c0_i32, %c0_i32_0 : i32, i32
  }
  func.func @transform_2(%arg0: i32, %arg1: i32, %arg2: i32) -> (i32, i32) {
    %c0_i32 = arith.constant 0 : i32
    return %arg1, %arg0 : i32, i32
  }
}

module attributes {stable_mosaic.version = 11 : i64} {
  func.func @_mm_kernel_single_k(%arg0: i32, %arg1: i32, %arg2: i32, %arg3: memref<128x256xbf16, #tpu.memory_space<vmem>>, %arg4: memref<256x128xbf16, #tpu.memory_space<vmem>>, %arg5: memref<128x128xbf16, #tpu.memory_space<vmem>>) attributes {dimension_semantics = [#tpu.dimension_semantics<parallel>, #tpu.dimension_semantics<parallel>, #tpu.dimension_semantics<arbitrary>], iteration_bounds = array<i64: 1, 1, 1>, scalar_prefetch = 0 : i64, scratch_operands = 0 : i64, tpu.core_type = #tpu.core_type<tc>, window_params = [{transform_indices = @transform_0, window_bounds = array<i64: 128, 256>}, {pipeline_mode = #tpu.pipeline_mode<synchronous>, transform_indices = @transform_1, window_bounds = array<i64: 256, 128>}, {transform_indices = @transform_2, window_bounds = array<i64: 128, 128>}]} {
    %c0 = arith.constant 0 : index
    %c0_0 = arith.constant 0 : index
    %0 = vector.load %arg3[%c0, %c0_0] : memref<128x256xbf16, #tpu.memory_space<vmem>>, vector<128x256xbf16>
    %c0_1 = arith.constant 0 : index
    %c0_2 = arith.constant 0 : index
    %1 = vector.load %arg4[%c0_1, %c0_2] : memref<256x128xbf16, #tpu.memory_space<vmem>>, vector<256x128xbf16>
    %cst = arith.constant dense<0.000000e+00> : vector<128x128xf32>
    %2 = tpu.matmul %0, %1, %cst {dimension_numbers = #tpu.dot_dimension_numbers<[1], [0], [0], [1], [0, 0, 1, 1], [], []>} : vector<128x256xbf16>, vector<256x128xbf16>, vector<128x128xf32> -> vector<128x128xf32>
    %cst_3 = arith.constant 0.000000e+00 : f32
    %3 = vector.broadcast %cst_3 : f32 to vector<128x128xf32>
    %4 = arith.cmpf oge, %2, %3 : vector<128x128xf32>
    %cst_4 = arith.constant 2.000000e-01 : f32
    %5 = vector.broadcast %cst_4 : f32 to vector<128x128xf32>
    %6 = arith.mulf %5, %2 : vector<128x128xf32>
    %7 = arith.select %4, %2, %6 : vector<128x128xi1>, vector<128x128xf32>
    %8 = arith.truncf %7 : vector<128x128xf32> to vector<128x128xbf16>
    %c0_5 = arith.constant 0 : index
    %c0_6 = arith.constant 0 : index
    %9 = vector.load %arg5[%c0_5, %c0_6] : memref<128x128xbf16, #tpu.memory_space<vmem>>, vector<128x128xbf16>
    tpu.vector_store %arg5[%c0_5, %c0_6], %8 {strides = array<i32>} : memref<128x128xbf16, #tpu.memory_space<vmem>>, vector<128x128xbf16>,
    return
  }
  func.func @transform_0(%arg0: i32, %arg1: i32, %arg2: i32) -> (i32, i32) {
    %c0_i32 = arith.constant 0 : i32
    return %arg1, %arg2 : i32, i32
  }
  func.func @transform_1(%arg0: i32, %arg1: i32, %arg2: i32) -> (i32, i32) {
    %c0_i32 = arith.constant 0 : i32
    %c0_i32_0 = arith.constant 0 : i32
    %c0_i32_1 = arith.constant 0 : i32
    return %c0_i32, %c0_i32_0 : i32, i32
  }
  func.func @transform_2(%arg0: i32, %arg1: i32, %arg2: i32) -> (i32, i32) {
    %c0_i32 = arith.constant 0 : i32
    return %arg1, %arg0 : i32, i32
  }
}

module attributes {stable_mosaic.version = 11 : i64} {
  func.func @_mm_kernel_single_k(%arg0: i32, %arg1: i32, %arg2: i32, %arg3: memref<16x1024xbf16, #tpu.memory_space<vmem>>, %arg4: memref<1024x128xbf16, #tpu.memory_space<vmem>>, %arg5: memref<16x128xf32, #tpu.memory_space<vmem>>) attributes {dimension_semantics = [#tpu.dimension_semantics<parallel>, #tpu.dimension_semantics<parallel>, #tpu.dimension_semantics<arbitrary>], iteration_bounds = array<i64: 1, 1, 1>, scalar_prefetch = 0 : i64, scratch_operands = 0 : i64, tpu.core_type = #tpu.core_type<tc>, window_params = [{transform_indices = @transform_0, window_bounds = array<i64: 16, 1024>}, {pipeline_mode = #tpu.pipeline_mode<synchronous>, transform_indices = @transform_1, window_bounds = array<i64: 1024, 128>}, {transform_indices = @transform_2, window_bounds = array<i64: 16, 128>}]} {
    %c0 = arith.constant 0 : index
    %c0_0 = arith.constant 0 : index
    %0 = vector.load %arg3[%c0, %c0_0] : memref<16x1024xbf16, #tpu.memory_space<vmem>>, vector<16x1024xbf16>
    %c0_1 = arith.constant 0 : index
    %c0_2 = arith.constant 0 : index
    %1 = vector.load %arg4[%c0_1, %c0_2] : memref<1024x128xbf16, #tpu.memory_space<vmem>>, vector<1024x128xbf16>
    %cst = arith.constant dense<0.000000e+00> : vector<16x128xf32>
    %2 = tpu.matmul %0, %1, %cst {dimension_numbers = #tpu.dot_dimension_numbers<[1], [0], [0], [1], [0, 0, 1, 1], [], []>} : vector<16x1024xbf16>, vector<1024x128xbf16>, vector<16x128xf32> -> vector<16x128xf32>
    %c0_3 = arith.constant 0 : index
    %c0_4 = arith.constant 0 : index
    %3 = vector.load %arg5[%c0_3, %c0_4] : memref<16x128xf32, #tpu.memory_space<vmem>>, vector<16x128xf32>
    tpu.vector_store %arg5[%c0_3, %c0_4], %2 {strides = array<i32>} : memref<16x128xf32, #tpu.memory_space<vmem>>, vector<16x128xf32>,
    return
  }
  func.func @transform_0(%arg0: i32, %arg1: i32, %arg2: i32) -> (i32, i32) {
    %c0_i32 = arith.constant 0 : i32
    return %arg1, %arg2 : i32, i32
  }
  func.func @transform_1(%arg0: i32, %arg1: i32, %arg2: i32) -> (i32, i32) {
    %c0_i32 = arith.constant 0 : i32
    %c0_i32_0 = arith.constant 0 : i32
    %c0_i32_1 = arith.constant 0 : i32
    return %c0_i32, %c0_i32_0 : i32, i32
  }
  func.func @transform_2(%arg0: i32, %arg1: i32, %arg2: i32) -> (i32, i32) {
    %c0_i32 = arith.constant 0 : i32
    return %arg1, %arg0 : i32, i32
  }
}

module attributes {stable_mosaic.version = 11 : i64} {
  func.func @_mm_kernel_single_k(%arg0: i32, %arg1: i32, %arg2: i32, %arg3: memref<32x512xbf16, #tpu.memory_space<vmem>>, %arg4: memref<512x128xbf16, #tpu.memory_space<vmem>>, %arg5: memref<32x128xbf16, #tpu.memory_space<vmem>>) attributes {dimension_semantics = [#tpu.dimension_semantics<parallel>, #tpu.dimension_semantics<parallel>, #tpu.dimension_semantics<arbitrary>], iteration_bounds = array<i64: 1, 1, 1>, scalar_prefetch = 0 : i64, scratch_operands = 0 : i64, tpu.core_type = #tpu.core_type<tc>, window_params = [{transform_indices = @transform_0, window_bounds = array<i64: 32, 512>}, {pipeline_mode = #tpu.pipeline_mode<synchronous>, transform_indices = @transform_1, window_bounds = array<i64: 512, 128>}, {transform_indices = @transform_2, window_bounds = array<i64: 32, 128>}]} {
    %c0 = arith.constant 0 : index
    %c0_0 = arith.constant 0 : index
    %0 = vector.load %arg3[%c0, %c0_0] : memref<32x512xbf16, #tpu.memory_space<vmem>>, vector<32x512xbf16>
    %c0_1 = arith.constant 0 : index
    %c0_2 = arith.constant 0 : index
    %1 = vector.load %arg4[%c0_1, %c0_2] : memref<512x128xbf16, #tpu.memory_space<vmem>>, vector<512x128xbf16>
    %cst = arith.constant dense<0.000000e+00> : vector<32x128xf32>
    %2 = tpu.matmul %0, %1, %cst {dimension_numbers = #tpu.dot_dimension_numbers<[1], [0], [0], [1], [0, 0, 1, 1], [], []>} : vector<32x512xbf16>, vector<512x128xbf16>, vector<32x128xf32> -> vector<32x128xf32>
    %cst_3 = arith.constant 0.000000e+00 : f32
    %3 = vector.broadcast %cst_3 : f32 to vector<32x128xf32>
    %4 = arith.cmpf oge, %2, %3 : vector<32x128xf32>
    %cst_4 = arith.constant 2.000000e-01 : f32
    %5 = vector.broadcast %cst_4 : f32 to vector<32x128xf32>
    %6 = arith.mulf %5, %2 : vector<32x128xf32>
    %7 = arith.select %4, %2, %6 : vector<32x128xi1>, vector<32x128xf32>
    %8 = arith.truncf %7 : vector<32x128xf32> to vector<32x128xbf16>
    %c0_5 = arith.constant 0 : index
    %c0_6 = arith.constant 0 : index
    %9 = vector.load %arg5[%c0_5, %c0_6] : memref<32x128xbf16, #tpu.memory_space<vmem>>, vector<32x128xbf16>
    tpu.vector_store %arg5[%c0_5, %c0_6], %8 {strides = array<i32>} : memref<32x128xbf16, #tpu.memory_space<vmem>>, vector<32x128xbf16>,
    return
  }
  func.func @transform_0(%arg0: i32, %arg1: i32, %arg2: i32) -> (i32, i32) {
    %c0_i32 = arith.constant 0 : i32
    return %arg1, %arg2 : i32, i32
  }
  func.func @transform_1(%arg0: i32, %arg1: i32, %arg2: i32) -> (i32, i32) {
    %c0_i32 = arith.constant 0 : i32
    %c0_i32_0 = arith.constant 0 : i32
    %c0_i32_1 = arith.constant 0 : i32
    return %c0_i32, %c0_i32_0 : i32, i32
  }
  func.func @transform_2(%arg0: i32, %arg1: i32, %arg2: i32) -> (i32, i32) {
    %c0_i32 = arith.constant 0 : i32
    return %arg1, %arg0 : i32, i32
  }
}

</mosaic_0001>

<llo_original>
// kernel: wgan_discriminator_forward.5
$region0: #{wgan_discriminator_forward.5}
  #allocation0 [shape = 'u32[]', space=smem, size = 0x4, offset = 0x4, fixed_abs, tag = 'smem constant byte address 0x4 - core index']
  #allocation1 [shape = 'u32[144,128]{1,0:T(1,128)}', space=vmem, size = 0x12000, scoped, tag = 'internal scratch']
  %s0 = inlined_call_operand.vmem [shape: bf16[2048,128], index: 0, kind: input, shape index: {}]
  %s1 = inlined_call_operand.vmem [shape: bf16[128,128], index: 1, kind: input, shape index: {}]
  %s2 = inlined_call_operand.vmem [shape: bf16[2048,128], index: 2, kind: output, shape index: {}]
  %s3 = sld [smem:[#allocation0]]
  $region41: #{wgan_discriminator_forward.5} parent=0
    _
  %s5 = ssub.s32 1, %s3
  %s6 = scalar_select 0, %s5, %s3
  loop: start=0, step=1, limit=4
  $region2: #{wgan_discriminator_forward.5} parent=0 // loop_pre_header
    _
  $region3: #{wgan_discriminator_forward.5} parent=0 // loop_header
    %s8 = sphi 0, %s12
    %p9 = scmp.ge.s32.totalorder %s8, 4
    %s15 = sphi 0, %s34
    %s16 = sphi 0, %s30
    %s17 = sphi 0, %s26
    %s18 = sphi 0, %s15
    %s19 = sphi 0, %s16
    %s20 = sphi 0, %s17
    %s21 = sphi 0, %s18
    %s22 = sphi 0, %s19
    %s23 = sphi 0, %s20
    %s39 = sphi 0, %s41
    %s42 = sphi 0, %s39
    %s43 = sphi 0, %s42
    %s59 = sphi 0, %s43
    %s63 = sphi 0, %s63
    %s65 = sphi 0, %s63
    %s66 = sphi 0, %s65
    %s80 = sphi 0, %s66
    %s88 = sphi 0, %s90
    %s91 = sphi 0, %s88
    %s92 = sphi 0, %s91
    %s108 = sphi 0, %s92
  $region4: #{wgan_discriminator_forward.5} parent=0 // loop_header_branch
    %11 = sbr.rel (%p9) target = $region8
  $region5: #{wgan_discriminator_forward.5} parent=0 // loop_body
    %s13 = ssub.s32 %s8, 1
    %s14 = ssub.s32 %s8, 2
    %s24 = sadd.s32 1, %s17
    %p25 = scmp.ge.s32.totalorder %s24, 1
    %s26 = scalar_select %p25, 0, %s24
    %s27 = sadd.s32 1, %s16
    %s28 = scalar_select %p25, %s27, %s16
    %p29 = scmp.ge.s32.totalorder %s28, 2
    %s30 = scalar_select %p29, 0, %s28
    %s31 = sadd.s32 1, %s15
    %s32 = scalar_select %p29, %s31, %s15
    %p33 = scmp.ge.s32.totalorder %s32, 1
    %s34 = scalar_select %p33, 0, %s32
    %s35 = ssub.s32 %s16, %s30
    %s36 = ssub.s32 %s17, %s26
    %s37 = sor.u32 %s35, %s36
    %p38 = scmp.eq.s32.totalorder %s37, 0
    %s40 = sadd.s32 %s39, 1
    %s41 = scalar_select %p38, %s39, %s40
    %p44 = pneg %p38
    %p45 = scmp.eq.s32.totalorder %s8, 1
    %p46 = por %p44, %p45
    %p47 = scmp.ne.s32.totalorder %s39, %s42
    %p48 = scmp.eq.s32.totalorder %s8, 0
    %p49 = por %p47, %p48
    %p50 = scmp.ne.s32.totalorder %s39, %s42
    %p51 = scmp.eq.s32.totalorder %s13, 1
    %p52 = por %p50, %p51
    %p53 = scmp.ne.s32.totalorder %s42, %s43
    %p54 = scmp.eq.s32.totalorder %s13, 0
    %p55 = por %p53, %p54
    %p56 = scmp.ne.s32.totalorder %s42, %s43
    %p57 = scmp.eq.s32.totalorder %s14, 1
    %p58 = por %p56, %p57
    %p60 = scmp.ne.s32.totalorder %s43, %s59
    %p61 = scmp.eq.s32.totalorder %s14, 0
    %p62 = por %p60, %p61
    %s64 = sadd.s32 %s63, 1
    %p67 = scmp.eq.s32.totalorder %s8, 1
    %p68 = scmp.ne.s32.totalorder %s63, %s65
    %p69 = scmp.eq.s32.totalorder %s8, 0
    %p70 = por %p68, %p69
    %p71 = scmp.ne.s32.totalorder %s63, %s65
    %p72 = scmp.eq.s32.totalorder %s13, 1
    %p73 = por %p71, %p72
    %p74 = scmp.ne.s32.totalorder %s65, %s66
    %p75 = scmp.eq.s32.totalorder %s13, 0
    %p76 = por %p74, %p75
    %p77 = scmp.ne.s32.totalorder %s65, %s66
    %p78 = scmp.eq.s32.totalorder %s14, 1
    %p79 = por %p77, %p78
    %p81 = scmp.ne.s32.totalorder %s66, %s80
    %p82 = scmp.eq.s32.totalorder %s14, 0
    %p83 = por %p81, %p82
    %s84 = ssub.s32 %s16, %s30
    %s85 = ssub.s32 %s15, %s34
    %s86 = sor.u32 %s84, %s85
    %p87 = scmp.eq.s32.totalorder %s86, 0
    %s89 = sadd.s32 %s88, 1
    %s90 = scalar_select %p87, %s88, %s89
    %p93 = pneg %p87
    %p94 = scmp.eq.s32.totalorder %s8, 1
    %p95 = por %p93, %p94
    %p96 = scmp.ne.s32.totalorder %s88, %s91
    %p97 = scmp.eq.s32.totalorder %s8, 0
    %p98 = por %p96, %p97
    %p99 = scmp.ne.s32.totalorder %s88, %s91
    %p100 = scmp.eq.s32.totalorder %s13, 1
    %p101 = por %p99, %p100
    %p102 = scmp.ne.s32.totalorder %s91, %s92
    %p103 = scmp.eq.s32.totalorder %s13, 0
    %p104 = por %p102, %p103
    %p105 = scmp.ne.s32.totalorder %s91, %s92
    %p106 = scmp.eq.s32.totalorder %s14, 1
    %p107 = por %p105, %p106
    %p109 = scmp.ne.s32.totalorder %s92, %s108
    %p110 = scmp.eq.s32.totalorder %s14, 0
    %p111 = por %p109, %p110
    %p112 = scmp.le.s32.totalorder 1, %s8
    %p113 = scmp.lt.s32.totalorder %s8, 3
    %p114 = pnand %p112, %p113
    %p115 = pneg %p114
    // Predicated region
    $region9: #{wgan_discriminator_forward.5} parent=5 // pred_check
      _
    $region10: #{wgan_discriminator_forward.5} parent=5 // pred_check_branch
      %117 = sbr.rel (%p114) target = $region12
    $region11: #{wgan_discriminator_forward.5} parent=5 // pred_region
      %s118 = ssub.s32 %s8, 1
      // Predicated region
      $region13: #{wgan_discriminator_forward.5} parent=11 // pred_check
        %p119 = pneg %p76
      $region14: #{wgan_discriminator_forward.5} parent=11 // pred_check_branch
        %121 = sbr.rel (%p119) target = $region16
      $region15: #{wgan_discriminator_forward.5} parent=11 // pred_region
        _
      $region16: #{wgan_discriminator_forward.5} parent=11 // pred_fallthru
        _
    $region12: #{wgan_discriminator_forward.5} parent=5 // pred_fallthru
      _
    %p122 = scmp.lt.s32.totalorder %s8, 2
    // Predicated region
    $region17: #{wgan_discriminator_forward.5} parent=5 // pred_check
      %p123 = pneg %p122
    $region18: #{wgan_discriminator_forward.5} parent=5 // pred_check_branch
      %125 = sbr.rel (%p123) target = $region20
    $region19: #{wgan_discriminator_forward.5} parent=5 // pred_region
      // Predicated region
      $region21: #{wgan_discriminator_forward.5} parent=19 // pred_check
        %p126 = pneg %p49
      $region22: #{wgan_discriminator_forward.5} parent=19 // pred_check_branch
        %128 = sbr.rel (%p126) target = $region24
      $region23: #{wgan_discriminator_forward.5} parent=19 // pred_region
        %s129 = smul.u32 128, %s16
        %p130 = scmp.lt.s32.totalorder %s129, 255
        %s131 = scalar_select %p130, %s129, 255
        %p132 = scmp.lt.s32.totalorder %s17, 0
        %s133 = scalar_select %p132, %s17, 0
        %s134 = sadd.s32 %s133, %s131
        %s135 = smul.addr %s134, 4
        %s136 = scalar_lea.vmem %s0, %s135
        %s137 = smul.u32 128, %s16
      $region24: #{wgan_discriminator_forward.5} parent=19 // pred_fallthru
        _
    $region20: #{wgan_discriminator_forward.5} parent=5 // pred_fallthru
      _
    %p138 = scmp.le.s32.totalorder 1, %s8
    %p139 = scmp.lt.s32.totalorder %s8, 3
    %p140 = pnand %p138, %p139
    %p141 = pneg %p140
    // Predicated region
    $region25: #{wgan_discriminator_forward.5} parent=5 // pred_check
      _
    $region26: #{wgan_discriminator_forward.5} parent=5 // pred_check_branch
      %143 = sbr.rel (%p140) target = $region28
    $region27: #{wgan_discriminator_forward.5} parent=5 // pred_region
      %s144 = ssub.s32 %s8, 1
      %s145 = smul.u32 128, %s19
      %p146 = scmp.lt.s32.totalorder %s145, 255
      %s147 = scalar_select %p146, %s145, 255
      %p148 = scmp.lt.s32.totalorder %s20, 0
      %s149 = scalar_select %p148, %s20, 0
      %s150 = sadd.s32 %s149, %s147
      %s151 = smul.addr %s150, 4
      %s152 = scalar_lea.vmem %s0, %s151
      %p153 = pneg %p55
      %p154 = pneg %p52
      %p155 = pneg %p76
      %p156 = pneg %p73
      %p157 = pneg %p104
      %p158 = pneg %p101
      %s159 = smul.u32 128, %s19
      %p160 = scmp.lt.s32.totalorder %s159, 255
      %s161 = scalar_select %p160, %s159, 255
      %p162 = scmp.lt.s32.totalorder %s18, 0
      %s163 = scalar_select %p162, %s18, 0
      %s164 = sadd.s32 %s163, %s161
      %s165 = smul.addr %s164, 4
      %s166 = scalar_lea.vmem %s2, %s165
      %s167 = smul.u32 128, %s19
      %p168 = scmp.lt.s32.totalorder %s167, 255
      %s169 = scalar_select %p168, %s167, 255
      %p170 = scmp.lt.s32.totalorder %s20, 0
      %s171 = scalar_select %p170, %s20, 0
      %s172 = sadd.s32 %s171, %s169
      %s173 = smul.addr %s172, 4
      %s174 = scalar_lea.vmem %s0, %s173
      %s175 = smul.u32 128, %s19
      %s176 = smul.u32 128, %s19
      %p177 = scmp.lt.s32.totalorder %s176, 255
      %s178 = scalar_select %p177, %s176, 255
      %p179 = scmp.lt.s32.totalorder %s18, 0
      %s180 = scalar_select %p179, %s18, 0
      %s181 = sadd.s32 %s180, %s178
      %s182 = smul.addr %s181, 4
      %s183 = scalar_lea.vmem %s2, %s182
      %s184 = smul.u32 128, %s19
      %v186 = vld [vmem:[%s174] sm:$0xf]
      %v187 = vld [vmem:[%s174 + $0x4] sm:$0xf]
      %v188 = vld [vmem:[%s174 + $0x8] sm:$0xf]
      %v189 = vld [vmem:[%s174 + $0xc] sm:$0xf]
      %v190 = vld [vmem:[%s174 + $0x10] sm:$0xf]
      %v191 = vld [vmem:[%s174 + $0x14] sm:$0xf]
      %v192 = vld [vmem:[%s174 + $0x18] sm:$0xf]
      %v193 = vld [vmem:[%s174 + $0x1c] sm:$0xf]
      %v194 = vld [vmem:[%s174 + $0x20] sm:$0xf]
      %v195 = vld [vmem:[%s174 + $0x24] sm:$0xf]
      %v196 = vld [vmem:[%s174 + $0x28] sm:$0xf]
      %v197 = vld [vmem:[%s174 + $0x2c] sm:$0xf]
      %v198 = vld [vmem:[%s174 + $0x30] sm:$0xf]
      %v199 = vld [vmem:[%s174 + $0x34] sm:$0xf]
      %v200 = vld [vmem:[%s174 + $0x38] sm:$0xf]
      %v201 = vld [vmem:[%s174 + $0x3c] sm:$0xf]
      %v202 = vld [vmem:[%s174 + $0x40] sm:$0xf]
      %v203 = vld [vmem:[%s174 + $0x44] sm:$0xf]
      %v204 = vld [vmem:[%s174 + $0x48] sm:$0xf]
      %v205 = vld [vmem:[%s174 + $0x4c] sm:$0xf]
      %v206 = vld [vmem:[%s174 + $0x50] sm:$0xf]
      %v207 = vld [vmem:[%s174 + $0x54] sm:$0xf]
      %v208 = vld [vmem:[%s174 + $0x58] sm:$0xf]
      %v209 = vld [vmem:[%s174 + $0x5c] sm:$0xf]
      %v210 = vld [vmem:[%s174 + $0x60] sm:$0xf]
      %v211 = vld [vmem:[%s174 + $0x64] sm:$0xf]
      %v212 = vld [vmem:[%s174 + $0x68] sm:$0xf]
      %v213 = vld [vmem:[%s174 + $0x6c] sm:$0xf]
      %v214 = vld [vmem:[%s174 + $0x70] sm:$0xf]
      %v215 = vld [vmem:[%s174 + $0x74] sm:$0xf]
      %v216 = vld [vmem:[%s174 + $0x78] sm:$0xf]
      %v217 = vld [vmem:[%s174 + $0x7c] sm:$0xf]
      %v218 = vld [vmem:[%s174 + $0x80] sm:$0xf]
      %v219 = vld [vmem:[%s174 + $0x84] sm:$0xf]
      %v220 = vld [vmem:[%s174 + $0x88] sm:$0xf]
      %v221 = vld [vmem:[%s174 + $0x8c] sm:$0xf]
      %v222 = vld [vmem:[%s174 + $0x90] sm:$0xf]
      %v223 = vld [vmem:[%s174 + $0x94] sm:$0xf]
      %v224 = vld [vmem:[%s174 + $0x98] sm:$0xf]
      %v225 = vld [vmem:[%s174 + $0x9c] sm:$0xf]
      %v226 = vld [vmem:[%s174 + $0xa0] sm:$0xf]
      %v227 = vld [vmem:[%s174 + $0xa4] sm:$0xf]
      %v228 = vld [vmem:[%s174 + $0xa8] sm:$0xf]
      %v229 = vld [vmem:[%s174 + $0xac] sm:$0xf]
      %v230 = vld [vmem:[%s174 + $0xb0] sm:$0xf]
      %v231 = vld [vmem:[%s174 + $0xb4] sm:$0xf]
      %v232 = vld [vmem:[%s174 + $0xb8] sm:$0xf]
      %v233 = vld [vmem:[%s174 + $0xbc] sm:$0xf]
      %v234 = vld [vmem:[%s174 + $0xc0] sm:$0xf]
      %v235 = vld [vmem:[%s174 + $0xc4] sm:$0xf]
      %v236 = vld [vmem:[%s174 + $0xc8] sm:$0xf]
      %v237 = vld [vmem:[%s174 + $0xcc] sm:$0xf]
      %v238 = vld [vmem:[%s174 + $0xd0] sm:$0xf]
      %v239 = vld [vmem:[%s174 + $0xd4] sm:$0xf]
      %v240 = vld [vmem:[%s174 + $0xd8] sm:$0xf]
      %v241 = vld [vmem:[%s174 + $0xdc] sm:$0xf]
      %v242 = vld [vmem:[%s174 + $0xe0] sm:$0xf]
      %v243 = vld [vmem:[%s174 + $0xe4] sm:$0xf]
      %v244 = vld [vmem:[%s174 + $0xe8] sm:$0xf]
      %v245 = vld [vmem:[%s174 + $0xec] sm:$0xf]
      %v246 = vld [vmem:[%s174 + $0xf0] sm:$0xf]
      %v247 = vld [vmem:[%s174 + $0xf4] sm:$0xf]
      %v248 = vld [vmem:[%s174 + $0xf8] sm:$0xf]
      %v249 = vld [vmem:[%s174 + $0xfc] sm:$0xf]
      %v250 = vld [vmem:[%s174 + $0x100] sm:$0xf]
      %v251 = vld [vmem:[%s174 + $0x104] sm:$0xf]
      %v252 = vld [vmem:[%s174 + $0x108] sm:$0xf]
      %v253 = vld [vmem:[%s174 + $0x10c] sm:$0xf]
      %v254 = vld [vmem:[%s174 + $0x110] sm:$0xf]
      %v255 = vld [vmem:[%s174 + $0x114] sm:$0xf]
      %v256 = vld [vmem:[%s174 + $0x118] sm:$0xf]
      %v257 = vld [vmem:[%s174 + $0x11c] sm:$0xf]
      %v258 = vld [vmem:[%s174 + $0x120] sm:$0xf]
      %v259 = vld [vmem:[%s174 + $0x124] sm:$0xf]
      %v260 = vld [vmem:[%s174 + $0x128] sm:$0xf]
      %v261 = vld [vmem:[%s174 + $0x12c] sm:$0xf]
      %v262 = vld [vmem:[%s174 + $0x130] sm:$0xf]
      %v263 = vld [vmem:[%s174 + $0x134] sm:$0xf]
      %v264 = vld [vmem:[%s174 + $0x138] sm:$0xf]
      %v265 = vld [vmem:[%s174 + $0x13c] sm:$0xf]
      %v266 = vld [vmem:[%s174 + $0x140] sm:$0xf]
      %v267 = vld [vmem:[%s174 + $0x144] sm:$0xf]
      %v268 = vld [vmem:[%s174 + $0x148] sm:$0xf]
      %v269 = vld [vmem:[%s174 + $0x14c] sm:$0xf]
      %v270 = vld [vmem:[%s174 + $0x150] sm:$0xf]
      %v271 = vld [vmem:[%s174 + $0x154] sm:$0xf]
      %v272 = vld [vmem:[%s174 + $0x158] sm:$0xf]
      %v273 = vld [vmem:[%s174 + $0x15c] sm:$0xf]
      %v274 = vld [vmem:[%s174 + $0x160] sm:$0xf]
      %v275 = vld [vmem:[%s174 + $0x164] sm:$0xf]
      %v276 = vld [vmem:[%s174 + $0x168] sm:$0xf]
      %v277 = vld [vmem:[%s174 + $0x16c] sm:$0xf]
      %v278 = vld [vmem:[%s174 + $0x170] sm:$0xf]
      %v279 = vld [vmem:[%s174 + $0x174] sm:$0xf]
      %v280 = vld [vmem:[%s174 + $0x178] sm:$0xf]
      %v281 = vld [vmem:[%s174 + $0x17c] sm:$0xf]
      %v282 = vld [vmem:[%s174 + $0x180] sm:$0xf]
      %v283 = vld [vmem:[%s174 + $0x184] sm:$0xf]
      %v284 = vld [vmem:[%s174 + $0x188] sm:$0xf]
      %v285 = vld [vmem:[%s174 + $0x18c] sm:$0xf]
      %v286 = vld [vmem:[%s174 + $0x190] sm:$0xf]
      %v287 = vld [vmem:[%s174 + $0x194] sm:$0xf]
      %v288 = vld [vmem:[%s174 + $0x198] sm:$0xf]
      %v289 = vld [vmem:[%s174 + $0x19c] sm:$0xf]
      %v290 = vld [vmem:[%s174 + $0x1a0] sm:$0xf]
      %v291 = vld [vmem:[%s174 + $0x1a4] sm:$0xf]
      %v292 = vld [vmem:[%s174 + $0x1a8] sm:$0xf]
      %v293 = vld [vmem:[%s174 + $0x1ac] sm:$0xf]
      %v294 = vld [vmem:[%s174 + $0x1b0] sm:$0xf]
      %v295 = vld [vmem:[%s174 + $0x1b4] sm:$0xf]
      %v296 = vld [vmem:[%s174 + $0x1b8] sm:$0xf]
      %v297 = vld [vmem:[%s174 + $0x1bc] sm:$0xf]
      %v298 = vld [vmem:[%s174 + $0x1c0] sm:$0xf]
      %v299 = vld [vmem:[%s174 + $0x1c4] sm:$0xf]
      %v300 = vld [vmem:[%s174 + $0x1c8] sm:$0xf]
      %v301 = vld [vmem:[%s174 + $0x1cc] sm:$0xf]
      %v302 = vld [vmem:[%s174 + $0x1d0] sm:$0xf]
      %v303 = vld [vmem:[%s174 + $0x1d4] sm:$0xf]
      %v304 = vld [vmem:[%s174 + $0x1d8] sm:$0xf]
      %v305 = vld [vmem:[%s174 + $0x1dc] sm:$0xf]
      %v306 = vld [vmem:[%s174 + $0x1e0] sm:$0xf]
      %v307 = vld [vmem:[%s174 + $0x1e4] sm:$0xf]
      %v308 = vld [vmem:[%s174 + $0x1e8] sm:$0xf]
      %v309 = vld [vmem:[%s174 + $0x1ec] sm:$0xf]
      %v310 = vld [vmem:[%s174 + $0x1f0] sm:$0xf]
      %v311 = vld [vmem:[%s174 + $0x1f4] sm:$0xf]
      %v312 = vld [vmem:[%s174 + $0x1f8] sm:$0xf]
      %v313 = vld [vmem:[%s174 + $0x1fc] sm:$0xf]
      %v314 = vld [vmem:[%s1] sm:$0xf]
      %v315 = vld [vmem:[%s1 + $0x4] sm:$0xf]
      %v316 = vld [vmem:[%s1 + $0x8] sm:$0xf]
      %v317 = vld [vmem:[%s1 + $0xc] sm:$0xf]
      %v318 = vld [vmem:[%s1 + $0x10] sm:$0xf]
      %v319 = vld [vmem:[%s1 + $0x14] sm:$0xf]
      %v320 = vld [vmem:[%s1 + $0x18] sm:$0xf]
      %v321 = vld [vmem:[%s1 + $0x1c] sm:$0xf]
      %v322 = vld [vmem:[%s1 + $0x20] sm:$0xf]
      %v323 = vld [vmem:[%s1 + $0x24] sm:$0xf]
      %v324 = vld [vmem:[%s1 + $0x28] sm:$0xf]
      %v325 = vld [vmem:[%s1 + $0x2c] sm:$0xf]
      %v326 = vld [vmem:[%s1 + $0x30] sm:$0xf]
      %v327 = vld [vmem:[%s1 + $0x34] sm:$0xf]
      %v328 = vld [vmem:[%s1 + $0x38] sm:$0xf]
      %v329 = vld [vmem:[%s1 + $0x3c] sm:$0xf]
      %v458 = vunpack.c.l.b16 %v186
      %v459 = vunpack.c.l.b16 %v187
      %v460 = vunpack.c.l.b16 %v188
      %v461 = vunpack.c.l.b16 %v189
      %v462 = vunpack.c.l.b16 %v190
      %v463 = vunpack.c.l.b16 %v191
      %v464 = vunpack.c.l.b16 %v192
      %v465 = vunpack.c.l.b16 %v193
      %v466 = vunpack.c.l.b16 %v194
      %v467 = vunpack.c.l.b16 %v195
      %v468 = vunpack.c.l.b16 %v196
      %v469 = vunpack.c.l.b16 %v197
      %v470 = vunpack.c.l.b16 %v198
      %v471 = vunpack.c.l.b16 %v199
      %v472 = vunpack.c.l.b16 %v200
      %v473 = vunpack.c.l.b16 %v201
      %v474 = vunpack.c.l.b16 %v202
      %v475 = vunpack.c.l.b16 %v203
      %v476 = vunpack.c.l.b16 %v204
      %v477 = vunpack.c.l.b16 %v205
      %v478 = vunpack.c.l.b16 %v206
      %v479 = vunpack.c.l.b16 %v207
      %v480 = vunpack.c.l.b16 %v208
      %v481 = vunpack.c.l.b16 %v209
      %v482 = vunpack.c.l.b16 %v210
      %v483 = vunpack.c.l.b16 %v211
      %v484 = vunpack.c.l.b16 %v212
      %v485 = vunpack.c.l.b16 %v213
      %v486 = vunpack.c.l.b16 %v214
      %v487 = vunpack.c.l.b16 %v215
      %v488 = vunpack.c.l.b16 %v216
      %v489 = vunpack.c.l.b16 %v217
      %v490 = vunpack.c.l.b16 %v218
      %v491 = vunpack.c.l.b16 %v219
      %v492 = vunpack.c.l.b16 %v220
      %v493 = vunpack.c.l.b16 %v221
      %v494 = vunpack.c.l.b16 %v222
      %v495 = vunpack.c.l.b16 %v223
      %v496 = vunpack.c.l.b16 %v224
      %v497 = vunpack.c.l.b16 %v225
      %v498 = vunpack.c.l.b16 %v226
      %v499 = vunpack.c.l.b16 %v227
      %v500 = vunpack.c.l.b16 %v228
      %v501 = vunpack.c.l.b16 %v229
      %v502 = vunpack.c.l.b16 %v230
      %v503 = vunpack.c.l.b16 %v231
      %v504 = vunpack.c.l.b16 %v232
      %v505 = vunpack.c.l.b16 %v233
      %v506 = vunpack.c.l.b16 %v234
      %v507 = vunpack.c.l.b16 %v235
      %v508 = vunpack.c.l.b16 %v236
      %v509 = vunpack.c.l.b16 %v237
      %v510 = vunpack.c.l.b16 %v238
      %v511 = vunpack.c.l.b16 %v239
      %v512 = vunpack.c.l.b16 %v240
      %v513 = vunpack.c.l.b16 %v241
      %v514 = vunpack.c.l.b16 %v242
      %v515 = vunpack.c.l.b16 %v243
      %v516 = vunpack.c.l.b16 %v244
      %v517 = vunpack.c.l.b16 %v245
      %v518 = vunpack.c.l.b16 %v246
      %v519 = vunpack.c.l.b16 %v247
      %v520 = vunpack.c.l.b16 %v248
      %v521 = vunpack.c.l.b16 %v249
      %v522 = vunpack.c.l.b16 %v250
      %v523 = vunpack.c.l.b16 %v251
      %v524 = vunpack.c.l.b16 %v252
      %v525 = vunpack.c.l.b16 %v253
      %v526 = vunpack.c.l.b16 %v254
      %v527 = vunpack.c.l.b16 %v255
      %v528 = vunpack.c.l.b16 %v256
      %v529 = vunpack.c.l.b16 %v257
      %v530 = vunpack.c.l.b16 %v258
      %v531 = vunpack.c.l.b16 %v259
      %v532 = vunpack.c.l.b16 %v260
      %v533 = vunpack.c.l.b16 %v261
      %v534 = vunpack.c.l.b16 %v262
      %v535 = vunpack.c.l.b16 %v263
      %v536 = vunpack.c.l.b16 %v264
      %v537 = vunpack.c.l.b16 %v265
      %v538 = vunpack.c.l.b16 %v266
      %v539 = vunpack.c.l.b16 %v267
      %v540 = vunpack.c.l.b16 %v268
      %v541 = vunpack.c.l.b16 %v269
      %v542 = vunpack.c.l.b16 %v270
      %v543 = vunpack.c.l.b16 %v271
      %v544 = vunpack.c.l.b16 %v272
      %v545 = vunpack.c.l.b16 %v273
      %v546 = vunpack.c.l.b16 %v274
      %v547 = vunpack.c.l.b16 %v275
      %v548 = vunpack.c.l.b16 %v276
      %v549 = vunpack.c.l.b16 %v277
      %v550 = vunpack.c.l.b16 %v278
      %v551 = vunpack.c.l.b16 %v279
      %v552 = vunpack.c.l.b16 %v280
      %v553 = vunpack.c.l.b16 %v281
      %v554 = vunpack.c.l.b16 %v282
      %v555 = vunpack.c.l.b16 %v283
      %v556 = vunpack.c.l.b16 %v284
      %v557 = vunpack.c.l.b16 %v285
      %v558 = vunpack.c.l.b16 %v286
      %v559 = vunpack.c.l.b16 %v287
      %v560 = vunpack.c.l.b16 %v288
      %v561 = vunpack.c.l.b16 %v289
      %v562 = vunpack.c.l.b16 %v290
      %v563 = vunpack.c.l.b16 %v291
      %v564 = vunpack.c.l.b16 %v292
      %v565 = vunpack.c.l.b16 %v293
      %v566 = vunpack.c.l.b16 %v294
      %v567 = vunpack.c.l.b16 %v295
      %v568 = vunpack.c.l.b16 %v296
      %v569 = vunpack.c.l.b16 %v297
      %v570 = vunpack.c.l.b16 %v298
      %v571 = vunpack.c.l.b16 %v299
      %v572 = vunpack.c.l.b16 %v300
      %v573 = vunpack.c.l.b16 %v301
      %v574 = vunpack.c.l.b16 %v302
      %v575 = vunpack.c.l.b16 %v303
      %v576 = vunpack.c.l.b16 %v304
      %v577 = vunpack.c.l.b16 %v305
      %v578 = vunpack.c.l.b16 %v306
      %v579 = vunpack.c.l.b16 %v307
      %v580 = vunpack.c.l.b16 %v308
      %v581 = vunpack.c.l.b16 %v309
      %v582 = vunpack.c.l.b16 %v310
      %v583 = vunpack.c.l.b16 %v311
      %v584 = vunpack.c.l.b16 %v312
      %v585 = vunpack.c.l.b16 %v313
      %v586 = vpack.c.b16 %v459, %v458
      %v587 = vpack.c.b16 %v461, %v460
      %v588 = vpack.c.b16 %v463, %v462
      %v589 = vpack.c.b16 %v465, %v464
      %v590 = vpack.c.b16 %v467, %v466
      %v591 = vpack.c.b16 %v469, %v468
      %v592 = vpack.c.b16 %v471, %v470
      %v593 = vpack.c.b16 %v473, %v472
      %v594 = vpack.c.b16 %v475, %v474
      %v595 = vpack.c.b16 %v477, %v476
      %v596 = vpack.c.b16 %v479, %v478
      %v597 = vpack.c.b16 %v481, %v480
      %v598 = vpack.c.b16 %v483, %v482
      %v599 = vpack.c.b16 %v485, %v484
      %v600 = vpack.c.b16 %v487, %v486
      %v601 = vpack.c.b16 %v489, %v488
      %v602 = vpack.c.b16 %v491, %v490
      %v603 = vpack.c.b16 %v493, %v492
      %v604 = vpack.c.b16 %v495, %v494
      %v605 = vpack.c.b16 %v497, %v496
      %v606 = vpack.c.b16 %v499, %v498
      %v607 = vpack.c.b16 %v501, %v500
      %v608 = vpack.c.b16 %v503, %v502
      %v609 = vpack.c.b16 %v505, %v504
      %v610 = vpack.c.b16 %v507, %v506
      %v611 = vpack.c.b16 %v509, %v508
      %v612 = vpack.c.b16 %v511, %v510
      %v613 = vpack.c.b16 %v513, %v512
      %v614 = vpack.c.b16 %v515, %v514
      %v615 = vpack.c.b16 %v517, %v516
      %v616 = vpack.c.b16 %v519, %v518
      %v617 = vpack.c.b16 %v521, %v520
      %v618 = vpack.c.b16 %v523, %v522
      %v619 = vpack.c.b16 %v525, %v524
      %v620 = vpack.c.b16 %v527, %v526
      %v621 = vpack.c.b16 %v529, %v528
      %v622 = vpack.c.b16 %v531, %v530
      %v623 = vpack.c.b16 %v533, %v532
      %v624 = vpack.c.b16 %v535, %v534
      %v625 = vpack.c.b16 %v537, %v536
      %v626 = vpack.c.b16 %v539, %v538
      %v627 = vpack.c.b16 %v541, %v540
      %v628 = vpack.c.b16 %v543, %v542
      %v629 = vpack.c.b16 %v545, %v544
      %v630 = vpack.c.b16 %v547, %v546
      %v631 = vpack.c.b16 %v549, %v548
      %v632 = vpack.c.b16 %v551, %v550
      %v633 = vpack.c.b16 %v553, %v552
      %v634 = vpack.c.b16 %v555, %v554
      %v635 = vpack.c.b16 %v557, %v556
      %v636 = vpack.c.b16 %v559, %v558
      %v637 = vpack.c.b16 %v561, %v560
      %v638 = vpack.c.b16 %v563, %v562
      %v639 = vpack.c.b16 %v565, %v564
      %v640 = vpack.c.b16 %v567, %v566
      %v641 = vpack.c.b16 %v569, %v568
      %v642 = vpack.c.b16 %v571, %v570
      %v643 = vpack.c.b16 %v573, %v572
      %v644 = vpack.c.b16 %v575, %v574
      %v645 = vpack.c.b16 %v577, %v576
      %v646 = vpack.c.b16 %v579, %v578
      %v647 = vpack.c.b16 %v581, %v580
      %v648 = vpack.c.b16 %v583, %v582
      %v649 = vpack.c.b16 %v585, %v584
      %v730 = vunpack.c.l.b16 %v314
      %v731 = vunpack.c.l.b16 %v315
      %v732 = vunpack.c.l.b16 %v316
      %v733 = vunpack.c.l.b16 %v317
      %v734 = vunpack.c.l.b16 %v318
      %v735 = vunpack.c.l.b16 %v319
      %v736 = vunpack.c.l.b16 %v320
      %v737 = vunpack.c.l.b16 %v321
      %v738 = vunpack.c.l.b16 %v322
      %v739 = vunpack.c.l.b16 %v323
      %v740 = vunpack.c.l.b16 %v324
      %v741 = vunpack.c.l.b16 %v325
      %v742 = vunpack.c.l.b16 %v326
      %v743 = vunpack.c.l.b16 %v327
      %v744 = vunpack.c.l.b16 %v328
      %v745 = vunpack.c.l.b16 %v329
      %v746 = vpack.c.b16 %v731, %v730
      %v747 = vpack.c.b16 %v733, %v732
      %v748 = vpack.c.b16 %v735, %v734
      %v749 = vpack.c.b16 %v737, %v736
      %v750 = vpack.c.b16 %v739, %v738
      %v751 = vpack.c.b16 %v741, %v740
      %v752 = vpack.c.b16 %v743, %v742
      %v753 = vpack.c.b16 %v745, %v744
      %762 = vmatprep.subr.bf16.mxu0 0
      %763 = vmatpush1.bf16.msra.mxu0 %v753
      %764 = vmatprep.subr.bf16.mxu0 0
      %765 = vmatpush1.bf16.msra.mxu0 %v752
      %766 = vmatprep.subr.bf16.mxu0 0
      %767 = vmatpush1.bf16.msra.mxu0 %v751
      %768 = vmatprep.subr.bf16.mxu0 0
      %769 = vmatpush1.bf16.msra.mxu0 %v750
      %770 = vmatprep.subr.bf16.mxu0 0
      %771 = vmatpush1.bf16.msra.mxu0 %v749
      %772 = vmatprep.subr.bf16.mxu0 0
      %773 = vmatpush1.bf16.msra.mxu0 %v748
      %774 = vmatprep.subr.bf16.mxu0 0
      %775 = vmatpush1.bf16.msra.mxu0 %v747
      %776 = vmatprep.subr.bf16.mxu0 0
      %777 = vmatpush1.bf16.msra.mxu0 %v746
      %778 = vmatprep.subr.bf16.mxu0 0
      %779 = vmatpush2.bf16.msra.mxu0 0
      %780 = vmatprep.subr.bf16.mxu0 0
      %781 = vmatpush2.bf16.msra.mxu0 0
      %782 = vmatprep.subr.bf16.mxu0 0
      %783 = vmatpush2.bf16.msra.mxu0 0
      %784 = vmatprep.subr.bf16.mxu0 0
      %785 = vmatpush2.bf16.msra.mxu0 0
      %786 = vmatprep.subr.bf16.mxu0 0
      %787 = vmatpush2.bf16.msra.mxu0 0
      %788 = vmatprep.subr.bf16.mxu0 0
      %789 = vmatpush2.bf16.msra.mxu0 0
      %790 = vmatprep.subr.bf16.mxu0 0
      %791 = vmatpush2.bf16.msra.mxu0 0
      %792 = vmatprep.subr.bf16.mxu0 0
      %793 = vmatpush2.bf16.msra.mxu0 0
      %794 = vmatprep.mubr.bf16.mxu0 0
      %795 = vmatmul.mubr.bf16.gmra.mxu0 %v586
      %v796 = vpop.f32.mrf.mxu0
      %v797 = vadd.f32 0.0, %v796
      %v798 = vpop.f32.mrf.mxu0
      %v799 = vpop.f32.mrf.mxu0
      %v800 = vadd.f32 0.0, %v799
      %v801 = vpop.f32.mrf.mxu0
      %802 = vmatprep.mubr.bf16.mxu0 0
      %803 = vmatmul.mubr.bf16.gmra.mxu0 %v587
      %v804 = vpop.f32.mrf.mxu0
      %v805 = vadd.f32 0.0, %v804
      %v806 = vpop.f32.mrf.mxu0
      %v807 = vpop.f32.mrf.mxu0
      %v808 = vadd.f32 0.0, %v807
      %v809 = vpop.f32.mrf.mxu0
      %810 = vmatprep.mubr.bf16.mxu0 0
      %811 = vmatmul.mubr.bf16.gmra.mxu0 %v588
      %v812 = vpop.f32.mrf.mxu0
      %v813 = vadd.f32 0.0, %v812
      %v814 = vpop.f32.mrf.mxu0
      %v815 = vpop.f32.mrf.mxu0
      %v816 = vadd.f32 0.0, %v815
      %v817 = vpop.f32.mrf.mxu0
      %818 = vmatprep.mubr.bf16.mxu0 0
      %819 = vmatmul.mubr.bf16.gmra.mxu0 %v589
      %v820 = vpop.f32.mrf.mxu0
      %v821 = vadd.f32 0.0, %v820
      %v822 = vpop.f32.mrf.mxu0
      %v823 = vpop.f32.mrf.mxu0
      %v824 = vadd.f32 0.0, %v823
      %v825 = vpop.f32.mrf.mxu0
      %826 = vmatprep.mubr.bf16.mxu0 0
      %827 = vmatmul.mubr.bf16.gmra.mxu0 %v590
      %v828 = vpop.f32.mrf.mxu0
      %v829 = vadd.f32 0.0, %v828
      %v830 = vpop.f32.mrf.mxu0
      %v831 = vpop.f32.mrf.mxu0
      %v832 = vadd.f32 0.0, %v831
      %v833 = vpop.f32.mrf.mxu0
      %834 = vmatprep.mubr.bf16.mxu0 0
      %835 = vmatmul.mubr.bf16.gmra.mxu0 %v591
      %v836 = vpop.f32.mrf.mxu0
      %v837 = vadd.f32 0.0, %v836
      %v838 = vpop.f32.mrf.mxu0
      %v839 = vpop.f32.mrf.mxu0
      %v840 = vadd.f32 0.0, %v839
      %v841 = vpop.f32.mrf.mxu0
      %842 = vmatprep.mubr.bf16.mxu0 0
      %843 = vmatmul.mubr.bf16.gmra.mxu0 %v592
      %v844 = vpop.f32.mrf.mxu0
      %v845 = vadd.f32 0.0, %v844
      %v846 = vpop.f32.mrf.mxu0
      %v847 = vpop.f32.mrf.mxu0
      %v848 = vadd.f32 0.0, %v847
      %v849 = vpop.f32.mrf.mxu0
      %850 = vmatprep.mubr.bf16.mxu0 0
      %851 = vmatmul.mubr.bf16.gmra.mxu0 %v593
      %v852 = vpop.f32.mrf.mxu0
      %v853 = vadd.f32 0.0, %v852
      %v854 = vpop.f32.mrf.mxu0
      %v855 = vpop.f32.mrf.mxu0
      %v856 = vadd.f32 0.0, %v855
      %v857 = vpop.f32.mrf.mxu0
      %858 = vmatprep.mubr.bf16.mxu0 0
      %859 = vmatmul.mubr.bf16.gmra.mxu0 %v594
      %v860 = vpop.f32.mrf.mxu0
      %v861 = vadd.f32 0.0, %v860
      %v862 = vpop.f32.mrf.mxu0
      %v863 = vpop.f32.mrf.mxu0
      %v864 = vadd.f32 0.0, %v863
      %v865 = vpop.f32.mrf.mxu0
      %866 = vmatprep.mubr.bf16.mxu0 0
      %867 = vmatmul.mubr.bf16.gmra.mxu0 %v595
      %v868 = vpop.f32.mrf.mxu0
      %v869 = vadd.f32 0.0, %v868
      %v870 = vpop.f32.mrf.mxu0
      %v871 = vpop.f32.mrf.mxu0
      %v872 = vadd.f32 0.0, %v871
      %v873 = vpop.f32.mrf.mxu0
      %874 = vmatprep.mubr.bf16.mxu0 0
      %875 = vmatmul.mubr.bf16.gmra.mxu0 %v596
      %v876 = vpop.f32.mrf.mxu0
      %v877 = vadd.f32 0.0, %v876
      %v878 = vpop.f32.mrf.mxu0
      %v879 = vpop.f32.mrf.mxu0
      %v880 = vadd.f32 0.0, %v879
      %v881 = vpop.f32.mrf.mxu0
      %882 = vmatprep.mubr.bf16.mxu0 0
      %883 = vmatmul.mubr.bf16.gmra.mxu0 %v597
      %v884 = vpop.f32.mrf.mxu0
      %v885 = vadd.f32 0.0, %v884
      %v886 = vpop.f32.mrf.mxu0
      %v887 = vpop.f32.mrf.mxu0
      %v888 = vadd.f32 0.0, %v887
      %v889 = vpop.f32.mrf.mxu0
      %890 = vmatprep.mubr.bf16.mxu0 0
      %891 = vmatmul.mubr.bf16.gmra.mxu0 %v598
      %v892 = vpop.f32.mrf.mxu0
      %v893 = vadd.f32 0.0, %v892
      %v894 = vpop.f32.mrf.mxu0
      %v895 = vpop.f32.mrf.mxu0
      %v896 = vadd.f32 0.0, %v895
      %v897 = vpop.f32.mrf.mxu0
      %898 = vmatprep.mubr.bf16.mxu0 0
      %899 = vmatmul.mubr.bf16.gmra.mxu0 %v599
      %v900 = vpop.f32.mrf.mxu0
      %v901 = vadd.f32 0.0, %v900
      %v902 = vpop.f32.mrf.mxu0
      %v903 = vpop.f32.mrf.mxu0
      %v904 = vadd.f32 0.0, %v903
      %v905 = vpop.f32.mrf.mxu0
      %906 = vmatprep.mubr.bf16.mxu0 0
      %907 = vmatmul.mubr.bf16.gmra.mxu0 %v600
      %v908 = vpop.f32.mrf.mxu0
      %v909 = vadd.f32 0.0, %v908
      %v910 = vpop.f32.mrf.mxu0
      %v911 = vpop.f32.mrf.mxu0
      %v912 = vadd.f32 0.0, %v911
      %v913 = vpop.f32.mrf.mxu0
      %914 = vmatprep.mubr.bf16.mxu0 0
      %915 = vmatmul.mubr.bf16.gmra.mxu0 %v601
      %v916 = vpop.f32.mrf.mxu0
      %v917 = vadd.f32 0.0, %v916
      %v918 = vpop.f32.mrf.mxu0
      %v919 = vpop.f32.mrf.mxu0
      %v920 = vadd.f32 0.0, %v919
      %v921 = vpop.f32.mrf.mxu0
      %922 = vmatprep.mubr.bf16.mxu0 0
      %923 = vmatmul.mubr.bf16.gmra.mxu0 %v602
      %v924 = vpop.f32.mrf.mxu0
      %v925 = vadd.f32 0.0, %v924
      %v926 = vpop.f32.mrf.mxu0
      %v927 = vpop.f32.mrf.mxu0
      %v928 = vadd.f32 0.0, %v927
      %v929 = vpop.f32.mrf.mxu0
      %930 = vmatprep.mubr.bf16.mxu0 0
      %931 = vmatmul.mubr.bf16.gmra.mxu0 %v603
      %v932 = vpop.f32.mrf.mxu0
      %v933 = vadd.f32 0.0, %v932
      %v934 = vpop.f32.mrf.mxu0
      %v935 = vpop.f32.mrf.mxu0
      %v936 = vadd.f32 0.0, %v935
      %v937 = vpop.f32.mrf.mxu0
      %938 = vmatprep.mubr.bf16.mxu0 0
      %939 = vmatmul.mubr.bf16.gmra.mxu0 %v604
      %v940 = vpop.f32.mrf.mxu0
      %v941 = vadd.f32 0.0, %v940
      %v942 = vpop.f32.mrf.mxu0
      %v943 = vpop.f32.mrf.mxu0
      %v944 = vadd.f32 0.0, %v943
      %v945 = vpop.f32.mrf.mxu0
      %946 = vmatprep.mubr.bf16.mxu0 0
      %947 = vmatmul.mubr.bf16.gmra.mxu0 %v605
      %v948 = vpop.f32.mrf.mxu0
      %v949 = vadd.f32 0.0, %v948
      %v950 = vpop.f32.mrf.mxu0
      %v951 = vpop.f32.mrf.mxu0
      %v952 = vadd.f32 0.0, %v951
      %v953 = vpop.f32.mrf.mxu0
      %954 = vmatprep.mubr.bf16.mxu0 0
      %955 = vmatmul.mubr.bf16.gmra.mxu0 %v606
      %v956 = vpop.f32.mrf.mxu0
      %v957 = vadd.f32 0.0, %v956
      %v958 = vpop.f32.mrf.mxu0
      %v959 = vpop.f32.mrf.mxu0
      %v960 = vadd.f32 0.0, %v959
      %v961 = vpop.f32.mrf.mxu0
      %962 = vmatprep.mubr.bf16.mxu0 0
      %963 = vmatmul.mubr.bf16.gmra.mxu0 %v607
      %v964 = vpop.f32.mrf.mxu0
      %v965 = vadd.f32 0.0, %v964
      %v966 = vpop.f32.mrf.mxu0
      %v967 = vpop.f32.mrf.mxu0
      %v968 = vadd.f32 0.0, %v967
      %v969 = vpop.f32.mrf.mxu0
      %970 = vmatprep.mubr.bf16.mxu0 0
      %971 = vmatmul.mubr.bf16.gmra.mxu0 %v608
      %v972 = vpop.f32.mrf.mxu0
      %v973 = vadd.f32 0.0, %v972
      %v974 = vpop.f32.mrf.mxu0
      %v975 = vpop.f32.mrf.mxu0
      %v976 = vadd.f32 0.0, %v975
      %v977 = vpop.f32.mrf.mxu0
      %978 = vmatprep.mubr.bf16.mxu0 0
      %979 = vmatmul.mubr.bf16.gmra.mxu0 %v609
      %v980 = vpop.f32.mrf.mxu0
      %v981 = vadd.f32 0.0, %v980
      %v982 = vpop.f32.mrf.mxu0
      %v983 = vpop.f32.mrf.mxu0
      %v984 = vadd.f32 0.0, %v983
      %v985 = vpop.f32.mrf.mxu0
      %986 = vmatprep.mubr.bf16.mxu0 0
      %987 = vmatmul.mubr.bf16.gmra.mxu0 %v610
      %v988 = vpop.f32.mrf.mxu0
      %v989 = vadd.f32 0.0, %v988
      %v990 = vpop.f32.mrf.mxu0
      %v991 = vpop.f32.mrf.mxu0
      %v992 = vadd.f32 0.0, %v991
      %v993 = vpop.f32.mrf.mxu0
      %994 = vmatprep.mubr.bf16.mxu0 0
      %995 = vmatmul.mubr.bf16.gmra.mxu0 %v611
      %v996 = vpop.f32.mrf.mxu0
      %v997 = vadd.f32 0.0, %v996
      %v998 = vpop.f32.mrf.mxu0
      %v999 = vpop.f32.mrf.mxu0
      %v1000 = vadd.f32 0.0, %v999
      %v1001 = vpop.f32.mrf.mxu0
      %1002 = vmatprep.mubr.bf16.mxu0 0
      %1003 = vmatmul.mubr.bf16.gmra.mxu0 %v612
      %v1004 = vpop.f32.mrf.mxu0
      %v1005 = vadd.f32 0.0, %v1004
      %v1006 = vpop.f32.mrf.mxu0
      %v1007 = vpop.f32.mrf.mxu0
      %v1008 = vadd.f32 0.0, %v1007
      %v1009 = vpop.f32.mrf.mxu0
      %1010 = vmatprep.mubr.bf16.mxu0 0
      %1011 = vmatmul.mubr.bf16.gmra.mxu0 %v613
      %v1012 = vpop.f32.mrf.mxu0
      %v1013 = vadd.f32 0.0, %v1012
      %v1014 = vpop.f32.mrf.mxu0
      %v1015 = vpop.f32.mrf.mxu0
      %v1016 = vadd.f32 0.0, %v1015
      %v1017 = vpop.f32.mrf.mxu0
      %1018 = vmatprep.mubr.bf16.mxu0 0
      %1019 = vmatmul.mubr.bf16.gmra.mxu0 %v614
      %v1020 = vpop.f32.mrf.mxu0
      %v1021 = vadd.f32 0.0, %v1020
      %v1022 = vpop.f32.mrf.mxu0
      %v1023 = vpop.f32.mrf.mxu0
      %v1024 = vadd.f32 0.0, %v1023
      %v1025 = vpop.f32.mrf.mxu0
      %1026 = vmatprep.mubr.bf16.mxu0 0
      %1027 = vmatmul.mubr.bf16.gmra.mxu0 %v615
      %v1028 = vpop.f32.mrf.mxu0
      %v1029 = vadd.f32 0.0, %v1028
      %v1030 = vpop.f32.mrf.mxu0
      %v1031 = vpop.f32.mrf.mxu0
      %v1032 = vadd.f32 0.0, %v1031
      %v1033 = vpop.f32.mrf.mxu0
      %1034 = vmatprep.mubr.bf16.mxu0 0
      %1035 = vmatmul.mubr.bf16.gmra.mxu0 %v616
      %v1036 = vpop.f32.mrf.mxu0
      %v1037 = vadd.f32 0.0, %v1036
      %v1038 = vpop.f32.mrf.mxu0
      %v1039 = vpop.f32.mrf.mxu0
      %v1040 = vadd.f32 0.0, %v1039
      %v1041 = vpop.f32.mrf.mxu0
      %1042 = vmatprep.mubr.bf16.mxu0 0
      %1043 = vmatmul.mubr.bf16.gmra.mxu0 %v617
      %v1044 = vpop.f32.mrf.mxu0
      %v1045 = vadd.f32 0.0, %v1044
      %v1046 = vpop.f32.mrf.mxu0
      %v1047 = vpop.f32.mrf.mxu0
      %v1048 = vadd.f32 0.0, %v1047
      %v1049 = vpop.f32.mrf.mxu0
      %1050 = vmatprep.mubr.bf16.mxu0 0
      %1051 = vmatmul.mubr.bf16.gmra.mxu0 %v618
      %v1052 = vpop.f32.mrf.mxu0
      %v1053 = vadd.f32 0.0, %v1052
      %v1054 = vpop.f32.mrf.mxu0
      %v1055 = vpop.f32.mrf.mxu0
      %v1056 = vadd.f32 0.0, %v1055
      %v1057 = vpop.f32.mrf.mxu0
      %1058 = vmatprep.mubr.bf16.mxu0 0
      %1059 = vmatmul.mubr.bf16.gmra.mxu0 %v619
      %v1060 = vpop.f32.mrf.mxu0
      %v1061 = vadd.f32 0.0, %v1060
      %v1062 = vpop.f32.mrf.mxu0
      %v1063 = vpop.f32.mrf.mxu0
      %v1064 = vadd.f32 0.0, %v1063
      %v1065 = vpop.f32.mrf.mxu0
      %1066 = vmatprep.mubr.bf16.mxu0 0
      %1067 = vmatmul.mubr.bf16.gmra.mxu0 %v620
      %v1068 = vpop.f32.mrf.mxu0
      %v1069 = vadd.f32 0.0, %v1068
      %v1070 = vpop.f32.mrf.mxu0
      %v1071 = vpop.f32.mrf.mxu0
      %v1072 = vadd.f32 0.0, %v1071
      %v1073 = vpop.f32.mrf.mxu0
      %1074 = vmatprep.mubr.bf16.mxu0 0
      %1075 = vmatmul.mubr.bf16.gmra.mxu0 %v621
      %v1076 = vpop.f32.mrf.mxu0
      %v1077 = vadd.f32 0.0, %v1076
      %v1078 = vpop.f32.mrf.mxu0
      %v1079 = vpop.f32.mrf.mxu0
      %v1080 = vadd.f32 0.0, %v1079
      %v1081 = vpop.f32.mrf.mxu0
      %1082 = vmatprep.mubr.bf16.mxu0 0
      %1083 = vmatmul.mubr.bf16.gmra.mxu0 %v622
      %v1084 = vpop.f32.mrf.mxu0
      %v1085 = vadd.f32 0.0, %v1084
      %v1086 = vpop.f32.mrf.mxu0
      %v1087 = vpop.f32.mrf.mxu0
      %v1088 = vadd.f32 0.0, %v1087
      %v1089 = vpop.f32.mrf.mxu0
      %1090 = vmatprep.mubr.bf16.mxu0 0
      %1091 = vmatmul.mubr.bf16.gmra.mxu0 %v623
      %v1092 = vpop.f32.mrf.mxu0
      %v1093 = vadd.f32 0.0, %v1092
      %v1094 = vpop.f32.mrf.mxu0
      %v1095 = vpop.f32.mrf.mxu0
      %v1096 = vadd.f32 0.0, %v1095
      %v1097 = vpop.f32.mrf.mxu0
      %1098 = vmatprep.mubr.bf16.mxu0 0
      %1099 = vmatmul.mubr.bf16.gmra.mxu0 %v624
      %v1100 = vpop.f32.mrf.mxu0
      %v1101 = vadd.f32 0.0, %v1100
      %v1102 = vpop.f32.mrf.mxu0
      %v1103 = vpop.f32.mrf.mxu0
      %v1104 = vadd.f32 0.0, %v1103
      %v1105 = vpop.f32.mrf.mxu0
      %1106 = vmatprep.mubr.bf16.mxu0 0
      %1107 = vmatmul.mubr.bf16.gmra.mxu0 %v625
      %v1108 = vpop.f32.mrf.mxu0
      %v1109 = vadd.f32 0.0, %v1108
      %v1110 = vpop.f32.mrf.mxu0
      %v1111 = vpop.f32.mrf.mxu0
      %v1112 = vadd.f32 0.0, %v1111
      %v1113 = vpop.f32.mrf.mxu0
      %1114 = vmatprep.mubr.bf16.mxu0 0
      %1115 = vmatmul.mubr.bf16.gmra.mxu0 %v626
      %v1116 = vpop.f32.mrf.mxu0
      %v1117 = vadd.f32 0.0, %v1116
      %v1118 = vpop.f32.mrf.mxu0
      %v1119 = vpop.f32.mrf.mxu0
      %v1120 = vadd.f32 0.0, %v1119
      %v1121 = vpop.f32.mrf.mxu0
      %1122 = vmatprep.mubr.bf16.mxu0 0
      %1123 = vmatmul.mubr.bf16.gmra.mxu0 %v627
      %v1124 = vpop.f32.mrf.mxu0
      %v1125 = vadd.f32 0.0, %v1124
      %v1126 = vpop.f32.mrf.mxu0
      %v1127 = vpop.f32.mrf.mxu0
      %v1128 = vadd.f32 0.0, %v1127
      %v1129 = vpop.f32.mrf.mxu0
      %1130 = vmatprep.mubr.bf16.mxu0 0
      %1131 = vmatmul.mubr.bf16.gmra.mxu0 %v628
      %v1132 = vpop.f32.mrf.mxu0
      %v1133 = vadd.f32 0.0, %v1132
      %v1134 = vpop.f32.mrf.mxu0
      %v1135 = vpop.f32.mrf.mxu0
      %v1136 = vadd.f32 0.0, %v1135
      %v1137 = vpop.f32.mrf.mxu0
      %1138 = vmatprep.mubr.bf16.mxu0 0
      %1139 = vmatmul.mubr.bf16.gmra.mxu0 %v629
      %v1140 = vpop.f32.mrf.mxu0
      %v1141 = vadd.f32 0.0, %v1140
      %v1142 = vpop.f32.mrf.mxu0
      %v1143 = vpop.f32.mrf.mxu0
      %v1144 = vadd.f32 0.0, %v1143
      %v1145 = vpop.f32.mrf.mxu0
      %1146 = vmatprep.mubr.bf16.mxu0 0
      %1147 = vmatmul.mubr.bf16.gmra.mxu0 %v630
      %v1148 = vpop.f32.mrf.mxu0
      %v1149 = vadd.f32 0.0, %v1148
      %v1150 = vpop.f32.mrf.mxu0
      %v1151 = vpop.f32.mrf.mxu0
      %v1152 = vadd.f32 0.0, %v1151
      %v1153 = vpop.f32.mrf.mxu0
      %1154 = vmatprep.mubr.bf16.mxu0 0
      %1155 = vmatmul.mubr.bf16.gmra.mxu0 %v631
      %v1156 = vpop.f32.mrf.mxu0
      %v1157 = vadd.f32 0.0, %v1156
      %v1158 = vpop.f32.mrf.mxu0
      %v1159 = vpop.f32.mrf.mxu0
      %v1160 = vadd.f32 0.0, %v1159
      %v1161 = vpop.f32.mrf.mxu0
      %1162 = vmatprep.mubr.bf16.mxu0 0
      %1163 = vmatmul.mubr.bf16.gmra.mxu0 %v632
      %v1164 = vpop.f32.mrf.mxu0
      %v1165 = vadd.f32 0.0, %v1164
      %v1166 = vpop.f32.mrf.mxu0
      %v1167 = vpop.f32.mrf.mxu0
      %v1168 = vadd.f32 0.0, %v1167
      %v1169 = vpop.f32.mrf.mxu0
      %1170 = vmatprep.mubr.bf16.mxu0 0
      %1171 = vmatmul.mubr.bf16.gmra.mxu0 %v633
      %v1172 = vpop.f32.mrf.mxu0
      %v1173 = vadd.f32 0.0, %v1172
      %v1174 = vpop.f32.mrf.mxu0
      %v1175 = vpop.f32.mrf.mxu0
      %v1176 = vadd.f32 0.0, %v1175
      %v1177 = vpop.f32.mrf.mxu0
      %1178 = vmatprep.mubr.bf16.mxu0 0
      %1179 = vmatmul.mubr.bf16.gmra.mxu0 %v634
      %v1180 = vpop.f32.mrf.mxu0
      %v1181 = vadd.f32 0.0, %v1180
      %v1182 = vpop.f32.mrf.mxu0
      %v1183 = vpop.f32.mrf.mxu0
      %v1184 = vadd.f32 0.0, %v1183
      %v1185 = vpop.f32.mrf.mxu0
      %1186 = vmatprep.mubr.bf16.mxu0 0
      %1187 = vmatmul.mubr.bf16.gmra.mxu0 %v635
      %v1188 = vpop.f32.mrf.mxu0
      %v1189 = vadd.f32 0.0, %v1188
      %v1190 = vpop.f32.mrf.mxu0
      %v1191 = vpop.f32.mrf.mxu0
      %v1192 = vadd.f32 0.0, %v1191
      %v1193 = vpop.f32.mrf.mxu0
      %1194 = vmatprep.mubr.bf16.mxu0 0
      %1195 = vmatmul.mubr.bf16.gmra.mxu0 %v636
      %v1196 = vpop.f32.mrf.mxu0
      %v1197 = vadd.f32 0.0, %v1196
      %v1198 = vpop.f32.mrf.mxu0
      %v1199 = vpop.f32.mrf.mxu0
      %v1200 = vadd.f32 0.0, %v1199
      %v1201 = vpop.f32.mrf.mxu0
      %1202 = vmatprep.mubr.bf16.mxu0 0
      %1203 = vmatmul.mubr.bf16.gmra.mxu0 %v637
      %v1204 = vpop.f32.mrf.mxu0
      %v1205 = vadd.f32 0.0, %v1204
      %v1206 = vpop.f32.mrf.mxu0
      %v1207 = vpop.f32.mrf.mxu0
      %v1208 = vadd.f32 0.0, %v1207
      %v1209 = vpop.f32.mrf.mxu0
      %1210 = vmatprep.mubr.bf16.mxu0 0
      %1211 = vmatmul.mubr.bf16.gmra.mxu0 %v638
      %v1212 = vpop.f32.mrf.mxu0
      %v1213 = vadd.f32 0.0, %v1212
      %v1214 = vpop.f32.mrf.mxu0
      %v1215 = vpop.f32.mrf.mxu0
      %v1216 = vadd.f32 0.0, %v1215
      %v1217 = vpop.f32.mrf.mxu0
      %1218 = vmatprep.mubr.bf16.mxu0 0
      %1219 = vmatmul.mubr.bf16.gmra.mxu0 %v639
      %v1220 = vpop.f32.mrf.mxu0
      %v1221 = vadd.f32 0.0, %v1220
      %v1222 = vpop.f32.mrf.mxu0
      %v1223 = vpop.f32.mrf.mxu0
      %v1224 = vadd.f32 0.0, %v1223
      %v1225 = vpop.f32.mrf.mxu0
      %1226 = vmatprep.mubr.bf16.mxu0 0
      %1227 = vmatmul.mubr.bf16.gmra.mxu0 %v640
      %v1228 = vpop.f32.mrf.mxu0
      %v1229 = vadd.f32 0.0, %v1228
      %v1230 = vpop.f32.mrf.mxu0
      %v1231 = vpop.f32.mrf.mxu0
      %v1232 = vadd.f32 0.0, %v1231
      %v1233 = vpop.f32.mrf.mxu0
      %1234 = vmatprep.mubr.bf16.mxu0 0
      %1235 = vmatmul.mubr.bf16.gmra.mxu0 %v641
      %v1236 = vpop.f32.mrf.mxu0
      %v1237 = vadd.f32 0.0, %v1236
      %v1238 = vpop.f32.mrf.mxu0
      %v1239 = vpop.f32.mrf.mxu0
      %v1240 = vadd.f32 0.0, %v1239
      %v1241 = vpop.f32.mrf.mxu0
      %1242 = vmatprep.mubr.bf16.mxu0 0
      %1243 = vmatmul.mubr.bf16.gmra.mxu0 %v642
      %v1244 = vpop.f32.mrf.mxu0
      %v1245 = vadd.f32 0.0, %v1244
      %v1246 = vpop.f32.mrf.mxu0
      %v1247 = vpop.f32.mrf.mxu0
      %v1248 = vadd.f32 0.0, %v1247
      %v1249 = vpop.f32.mrf.mxu0
      %1250 = vmatprep.mubr.bf16.mxu0 0
      %1251 = vmatmul.mubr.bf16.gmra.mxu0 %v643
      %v1252 = vpop.f32.mrf.mxu0
      %v1253 = vadd.f32 0.0, %v1252
      %v1254 = vpop.f32.mrf.mxu0
      %v1255 = vpop.f32.mrf.mxu0
      %v1256 = vadd.f32 0.0, %v1255
      %v1257 = vpop.f32.mrf.mxu0
      %1258 = vmatprep.mubr.bf16.mxu0 0
      %1259 = vmatmul.mubr.bf16.gmra.mxu0 %v644
      %v1260 = vpop.f32.mrf.mxu0
      %v1261 = vadd.f32 0.0, %v1260
      %v1262 = vpop.f32.mrf.mxu0
      %v1263 = vpop.f32.mrf.mxu0
      %v1264 = vadd.f32 0.0, %v1263
      %v1265 = vpop.f32.mrf.mxu0
      %1266 = vmatprep.mubr.bf16.mxu0 0
      %1267 = vmatmul.mubr.bf16.gmra.mxu0 %v645
      %v1268 = vpop.f32.mrf.mxu0
      %v1269 = vadd.f32 0.0, %v1268
      %v1270 = vpop.f32.mrf.mxu0
      %v1271 = vpop.f32.mrf.mxu0
      %v1272 = vadd.f32 0.0, %v1271
      %v1273 = vpop.f32.mrf.mxu0
      %1274 = vmatprep.mubr.bf16.mxu0 0
      %1275 = vmatmul.mubr.bf16.gmra.mxu0 %v646
      %v1276 = vpop.f32.mrf.mxu0
      %v1277 = vadd.f32 0.0, %v1276
      %v1278 = vpop.f32.mrf.mxu0
      %v1279 = vpop.f32.mrf.mxu0
      %v1280 = vadd.f32 0.0, %v1279
      %v1281 = vpop.f32.mrf.mxu0
      %1282 = vmatprep.mubr.bf16.mxu0 0
      %1283 = vmatmul.mubr.bf16.gmra.mxu0 %v647
      %v1284 = vpop.f32.mrf.mxu0
      %v1285 = vadd.f32 0.0, %v1284
      %v1286 = vpop.f32.mrf.mxu0
      %v1287 = vpop.f32.mrf.mxu0
      %v1288 = vadd.f32 0.0, %v1287
      %v1289 = vpop.f32.mrf.mxu0
      %1290 = vmatprep.mubr.bf16.mxu0 0
      %1291 = vmatmul.mubr.bf16.gmra.mxu0 %v648
      %v1292 = vpop.f32.mrf.mxu0
      %v1293 = vadd.f32 0.0, %v1292
      %v1294 = vpop.f32.mrf.mxu0
      %v1295 = vpop.f32.mrf.mxu0
      %v1296 = vadd.f32 0.0, %v1295
      %v1297 = vpop.f32.mrf.mxu0
      %1298 = vmatprep.mubr.bf16.mxu0 0
      %1299 = vmatmul.mubr.bf16.gmra.mxu0 %v649
      %v1300 = vpop.f32.mrf.mxu0
      %v1301 = vadd.f32 0.0, %v1300
      %v1302 = vpop.f32.mrf.mxu0
      %v1303 = vpop.f32.mrf.mxu0
      %v1304 = vadd.f32 0.0, %v1303
      %v1305 = vpop.f32.mrf.mxu0
      %1306 = vdwg.mxu0
      %vm1307 = vcmp.ge.f32.partialorder %v797, 0.0
      %vm1308 = vcmp.ge.f32.partialorder %v800, 0.0
      %vm1309 = vcmp.ge.f32.partialorder %v805, 0.0
      %vm1310 = vcmp.ge.f32.partialorder %v808, 0.0
      %vm1311 = vcmp.ge.f32.partialorder %v813, 0.0
      %vm1312 = vcmp.ge.f32.partialorder %v816, 0.0
      %vm1313 = vcmp.ge.f32.partialorder %v821, 0.0
      %vm1314 = vcmp.ge.f32.partialorder %v824, 0.0
      %vm1315 = vcmp.ge.f32.partialorder %v829, 0.0
      %vm1316 = vcmp.ge.f32.partialorder %v832, 0.0
      %vm1317 = vcmp.ge.f32.partialorder %v837, 0.0
      %vm1318 = vcmp.ge.f32.partialorder %v840, 0.0
      %vm1319 = vcmp.ge.f32.partialorder %v845, 0.0
      %vm1320 = vcmp.ge.f32.partialorder %v848, 0.0
      %vm1321 = vcmp.ge.f32.partialorder %v853, 0.0
      %vm1322 = vcmp.ge.f32.partialorder %v856, 0.0
      %vm1323 = vcmp.ge.f32.partialorder %v861, 0.0
      %vm1324 = vcmp.ge.f32.partialorder %v864, 0.0
      %vm1325 = vcmp.ge.f32.partialorder %v869, 0.0
      %vm1326 = vcmp.ge.f32.partialorder %v872, 0.0
      %vm1327 = vcmp.ge.f32.partialorder %v877, 0.0
      %vm1328 = vcmp.ge.f32.partialorder %v880, 0.0
      %vm1329 = vcmp.ge.f32.partialorder %v885, 0.0
      %vm1330 = vcmp.ge.f32.partialorder %v888, 0.0
      %vm1331 = vcmp.ge.f32.partialorder %v893, 0.0
      %vm1332 = vcmp.ge.f32.partialorder %v896, 0.0
      %vm1333 = vcmp.ge.f32.partialorder %v901, 0.0
      %vm1334 = vcmp.ge.f32.partialorder %v904, 0.0
      %vm1335 = vcmp.ge.f32.partialorder %v909, 0.0
      %vm1336 = vcmp.ge.f32.partialorder %v912, 0.0
      %vm1337 = vcmp.ge.f32.partialorder %v917, 0.0
      %vm1338 = vcmp.ge.f32.partialorder %v920, 0.0
      %vm1339 = vcmp.ge.f32.partialorder %v925, 0.0
      %vm1340 = vcmp.ge.f32.partialorder %v928, 0.0
      %vm1341 = vcmp.ge.f32.partialorder %v933, 0.0
      %vm1342 = vcmp.ge.f32.partialorder %v936, 0.0
      %vm1343 = vcmp.ge.f32.partialorder %v941, 0.0
      %vm1344 = vcmp.ge.f32.partialorder %v944, 0.0
      %vm1345 = vcmp.ge.f32.partialorder %v949, 0.0
      %vm1346 = vcmp.ge.f32.partialorder %v952, 0.0
      %vm1347 = vcmp.ge.f32.partialorder %v957, 0.0
      %vm1348 = vcmp.ge.f32.partialorder %v960, 0.0
      %vm1349 = vcmp.ge.f32.partialorder %v965, 0.0
      %vm1350 = vcmp.ge.f32.partialorder %v968, 0.0
      %vm1351 = vcmp.ge.f32.partialorder %v973, 0.0
      %vm1352 = vcmp.ge.f32.partialorder %v976, 0.0
      %vm1353 = vcmp.ge.f32.partialorder %v981, 0.0
      %vm1354 = vcmp.ge.f32.partialorder %v984, 0.0
      %vm1355 = vcmp.ge.f32.partialorder %v989, 0.0
      %vm1356 = vcmp.ge.f32.partialorder %v992, 0.0
      %vm1357 = vcmp.ge.f32.partialorder %v997, 0.0
      %vm1358 = vcmp.ge.f32.partialorder %v1000, 0.0
      %vm1359 = vcmp.ge.f32.partialorder %v1005, 0.0
      %vm1360 = vcmp.ge.f32.partialorder %v1008, 0.0
      %vm1361 = vcmp.ge.f32.partialorder %v1013, 0.0
      %vm1362 = vcmp.ge.f32.partialorder %v1016, 0.0
      %vm1363 = vcmp.ge.f32.partialorder %v1021, 0.0
      %vm1364 = vcmp.ge.f32.partialorder %v1024, 0.0
      %vm1365 = vcmp.ge.f32.partialorder %v1029, 0.0
      %vm1366 = vcmp.ge.f32.partialorder %v1032, 0.0
      %vm1367 = vcmp.ge.f32.partialorder %v1037, 0.0
      %vm1368 = vcmp.ge.f32.partialorder %v1040, 0.0
      %vm1369 = vcmp.ge.f32.partialorder %v1045, 0.0
      %vm1370 = vcmp.ge.f32.partialorder %v1048, 0.0
      %vm1371 = vcmp.ge.f32.partialorder %v1053, 0.0
      %vm1372 = vcmp.ge.f32.partialorder %v1056, 0.0
      %vm1373 = vcmp.ge.f32.partialorder %v1061, 0.0
      %vm1374 = vcmp.ge.f32.partialorder %v1064, 0.0
      %vm1375 = vcmp.ge.f32.partialorder %v1069, 0.0
      %vm1376 = vcmp.ge.f32.partialorder %v1072, 0.0
      %vm1377 = vcmp.ge.f32.partialorder %v1077, 0.0
      %vm1378 = vcmp.ge.f32.partialorder %v1080, 0.0
      %vm1379 = vcmp.ge.f32.partialorder %v1085, 0.0
      %vm1380 = vcmp.ge.f32.partialorder %v1088, 0.0
      %vm1381 = vcmp.ge.f32.partialorder %v1093, 0.0
      %vm1382 = vcmp.ge.f32.partialorder %v1096, 0.0
      %vm1383 = vcmp.ge.f32.partialorder %v1101, 0.0
      %vm1384 = vcmp.ge.f32.partialorder %v1104, 0.0
      %vm1385 = vcmp.ge.f32.partialorder %v1109, 0.0
      %vm1386 = vcmp.ge.f32.partialorder %v1112, 0.0
      %vm1387 = vcmp.ge.f32.partialorder %v1117, 0.0
      %vm1388 = vcmp.ge.f32.partialorder %v1120, 0.0
      %vm1389 = vcmp.ge.f32.partialorder %v1125, 0.0
      %vm1390 = vcmp.ge.f32.partialorder %v1128, 0.0
      %vm1391 = vcmp.ge.f32.partialorder %v1133, 0.0
      %vm1392 = vcmp.ge.f32.partialorder %v1136, 0.0
      %vm1393 = vcmp.ge.f32.partialorder %v1141, 0.0
      %vm1394 = vcmp.ge.f32.partialorder %v1144, 0.0
      %vm1395 = vcmp.ge.f32.partialorder %v1149, 0.0
      %vm1396 = vcmp.ge.f32.partialorder %v1152, 0.0
      %vm1397 = vcmp.ge.f32.partialorder %v1157, 0.0
      %vm1398 = vcmp.ge.f32.partialorder %v1160, 0.0
      %vm1399 = vcmp.ge.f32.partialorder %v1165, 0.0
      %vm1400 = vcmp.ge.f32.partialorder %v1168, 0.0
      %vm1401 = vcmp.ge.f32.partialorder %v1173, 0.0
      %vm1402 = vcmp.ge.f32.partialorder %v1176, 0.0
      %vm1403 = vcmp.ge.f32.partialorder %v1181, 0.0
      %vm1404 = vcmp.ge.f32.partialorder %v1184, 0.0
      %vm1405 = vcmp.ge.f32.partialorder %v1189, 0.0
      %vm1406 = vcmp.ge.f32.partialorder %v1192, 0.0
      %vm1407 = vcmp.ge.f32.partialorder %v1197, 0.0
      %vm1408 = vcmp.ge.f32.partialorder %v1200, 0.0
      %vm1409 = vcmp.ge.f32.partialorder %v1205, 0.0
      %vm1410 = vcmp.ge.f32.partialorder %v1208, 0.0
      %vm1411 = vcmp.ge.f32.partialorder %v1213, 0.0
      %vm1412 = vcmp.ge.f32.partialorder %v1216, 0.0
      %vm1413 = vcmp.ge.f32.partialorder %v1221, 0.0
      %vm1414 = vcmp.ge.f32.partialorder %v1224, 0.0
      %vm1415 = vcmp.ge.f32.partialorder %v1229, 0.0
      %vm1416 = vcmp.ge.f32.partialorder %v1232, 0.0
      %vm1417 = vcmp.ge.f32.partialorder %v1237, 0.0
      %vm1418 = vcmp.ge.f32.partialorder %v1240, 0.0
      %vm1419 = vcmp.ge.f32.partialorder %v1245, 0.0
      %vm1420 = vcmp.ge.f32.partialorder %v1248, 0.0
      %vm1421 = vcmp.ge.f32.partialorder %v1253, 0.0
      %vm1422 = vcmp.ge.f32.partialorder %v1256, 0.0
      %vm1423 = vcmp.ge.f32.partialorder %v1261, 0.0
      %vm1424 = vcmp.ge.f32.partialorder %v1264, 0.0
      %vm1425 = vcmp.ge.f32.partialorder %v1269, 0.0
      %vm1426 = vcmp.ge.f32.partialorder %v1272, 0.0
      %vm1427 = vcmp.ge.f32.partialorder %v1277, 0.0
      %vm1428 = vcmp.ge.f32.partialorder %v1280, 0.0
      %vm1429 = vcmp.ge.f32.partialorder %v1285, 0.0
      %vm1430 = vcmp.ge.f32.partialorder %v1288, 0.0
      %vm1431 = vcmp.ge.f32.partialorder %v1293, 0.0
      %vm1432 = vcmp.ge.f32.partialorder %v1296, 0.0
      %vm1433 = vcmp.ge.f32.partialorder %v1301, 0.0
      %vm1434 = vcmp.ge.f32.partialorder %v1304, 0.0
      %v1435 = vmul.f32 %v797, 0.2
      %v1436 = vmul.f32 %v800, 0.2
      %v1437 = vmul.f32 %v805, 0.2
      %v1438 = vmul.f32 %v808, 0.2
      %v1439 = vmul.f32 %v813, 0.2
      %v1440 = vmul.f32 %v816, 0.2
      %v1441 = vmul.f32 %v821, 0.2
      %v1442 = vmul.f32 %v824, 0.2
      %v1443 = vmul.f32 %v829, 0.2
      %v1444 = vmul.f32 %v832, 0.2
      %v1445 = vmul.f32 %v837, 0.2
      %v1446 = vmul.f32 %v840, 0.2
      %v1447 = vmul.f32 %v845, 0.2
      %v1448 = vmul.f32 %v848, 0.2
      %v1449 = vmul.f32 %v853, 0.2
      %v1450 = vmul.f32 %v856, 0.2
      %v1451 = vmul.f32 %v861, 0.2
      %v1452 = vmul.f32 %v864, 0.2
      %v1453 = vmul.f32 %v869, 0.2
      %v1454 = vmul.f32 %v872, 0.2
      %v1455 = vmul.f32 %v877, 0.2
      %v1456 = vmul.f32 %v880, 0.2
      %v1457 = vmul.f32 %v885, 0.2
      %v1458 = vmul.f32 %v888, 0.2
      %v1459 = vmul.f32 %v893, 0.2
      %v1460 = vmul.f32 %v896, 0.2
      %v1461 = vmul.f32 %v901, 0.2
      %v1462 = vmul.f32 %v904, 0.2
      %v1463 = vmul.f32 %v909, 0.2
      %v1464 = vmul.f32 %v912, 0.2
      %v1465 = vmul.f32 %v917, 0.2
      %v1466 = vmul.f32 %v920, 0.2
      %v1467 = vmul.f32 %v925, 0.2
      %v1468 = vmul.f32 %v928, 0.2
      %v1469 = vmul.f32 %v933, 0.2
      %v1470 = vmul.f32 %v936, 0.2
      %v1471 = vmul.f32 %v941, 0.2
      %v1472 = vmul.f32 %v944, 0.2
      %v1473 = vmul.f32 %v949, 0.2
      %v1474 = vmul.f32 %v952, 0.2
      %v1475 = vmul.f32 %v957, 0.2
      %v1476 = vmul.f32 %v960, 0.2
      %v1477 = vmul.f32 %v965, 0.2
      %v1478 = vmul.f32 %v968, 0.2
      %v1479 = vmul.f32 %v973, 0.2
      %v1480 = vmul.f32 %v976, 0.2
      %v1481 = vmul.f32 %v981, 0.2
      %v1482 = vmul.f32 %v984, 0.2
      %v1483 = vmul.f32 %v989, 0.2
      %v1484 = vmul.f32 %v992, 0.2
      %v1485 = vmul.f32 %v997, 0.2
      %v1486 = vmul.f32 %v1000, 0.2
      %v1487 = vmul.f32 %v1005, 0.2
      %v1488 = vmul.f32 %v1008, 0.2
      %v1489 = vmul.f32 %v1013, 0.2
      %v1490 = vmul.f32 %v1016, 0.2
      %v1491 = vmul.f32 %v1021, 0.2
      %v1492 = vmul.f32 %v1024, 0.2
      %v1493 = vmul.f32 %v1029, 0.2
      %v1494 = vmul.f32 %v1032, 0.2
      %v1495 = vmul.f32 %v1037, 0.2
      %v1496 = vmul.f32 %v1040, 0.2
      %v1497 = vmul.f32 %v1045, 0.2
      %v1498 = vmul.f32 %v1048, 0.2
      %v1499 = vmul.f32 %v1053, 0.2
      %v1500 = vmul.f32 %v1056, 0.2
      %v1501 = vmul.f32 %v1061, 0.2
      %v1502 = vmul.f32 %v1064, 0.2
      %v1503 = vmul.f32 %v1069, 0.2
      %v1504 = vmul.f32 %v1072, 0.2
      %v1505 = vmul.f32 %v1077, 0.2
      %v1506 = vmul.f32 %v1080, 0.2
      %v1507 = vmul.f32 %v1085, 0.2
      %v1508 = vmul.f32 %v1088, 0.2
      %v1509 = vmul.f32 %v1093, 0.2
      %v1510 = vmul.f32 %v1096, 0.2
      %v1511 = vmul.f32 %v1101, 0.2
      %v1512 = vmul.f32 %v1104, 0.2
      %v1513 = vmul.f32 %v1109, 0.2
      %v1514 = vmul.f32 %v1112, 0.2
      %v1515 = vmul.f32 %v1117, 0.2
      %v1516 = vmul.f32 %v1120, 0.2
      %v1517 = vmul.f32 %v1125, 0.2
      %v1518 = vmul.f32 %v1128, 0.2
      %v1519 = vmul.f32 %v1133, 0.2
      %v1520 = vmul.f32 %v1136, 0.2
      %v1521 = vmul.f32 %v1141, 0.2
      %v1522 = vmul.f32 %v1144, 0.2
      %v1523 = vmul.f32 %v1149, 0.2
      %v1524 = vmul.f32 %v1152, 0.2
      %v1525 = vmul.f32 %v1157, 0.2
      %v1526 = vmul.f32 %v1160, 0.2
      %v1527 = vmul.f32 %v1165, 0.2
      %v1528 = vmul.f32 %v1168, 0.2
      %v1529 = vmul.f32 %v1173, 0.2
      %v1530 = vmul.f32 %v1176, 0.2
      %v1531 = vmul.f32 %v1181, 0.2
      %v1532 = vmul.f32 %v1184, 0.2
      %v1533 = vmul.f32 %v1189, 0.2
      %v1534 = vmul.f32 %v1192, 0.2
      %v1535 = vmul.f32 %v1197, 0.2
      %v1536 = vmul.f32 %v1200, 0.2
      %v1537 = vmul.f32 %v1205, 0.2
      %v1538 = vmul.f32 %v1208, 0.2
      %v1539 = vmul.f32 %v1213, 0.2
      %v1540 = vmul.f32 %v1216, 0.2
      %v1541 = vmul.f32 %v1221, 0.2
      %v1542 = vmul.f32 %v1224, 0.2
      %v1543 = vmul.f32 %v1229, 0.2
      %v1544 = vmul.f32 %v1232, 0.2
      %v1545 = vmul.f32 %v1237, 0.2
      %v1546 = vmul.f32 %v1240, 0.2
      %v1547 = vmul.f32 %v1245, 0.2
      %v1548 = vmul.f32 %v1248, 0.2
      %v1549 = vmul.f32 %v1253, 0.2
      %v1550 = vmul.f32 %v1256, 0.2
      %v1551 = vmul.f32 %v1261, 0.2
      %v1552 = vmul.f32 %v1264, 0.2
      %v1553 = vmul.f32 %v1269, 0.2
      %v1554 = vmul.f32 %v1272, 0.2
      %v1555 = vmul.f32 %v1277, 0.2
      %v1556 = vmul.f32 %v1280, 0.2
      %v1557 = vmul.f32 %v1285, 0.2
      %v1558 = vmul.f32 %v1288, 0.2
      %v1559 = vmul.f32 %v1293, 0.2
      %v1560 = vmul.f32 %v1296, 0.2
      %v1561 = vmul.f32 %v1301, 0.2
      %v1562 = vmul.f32 %v1304, 0.2
      %v1563 = vsel %vm1307, %v797, %v1435
      %v1564 = vsel %vm1308, %v800, %v1436
      %v1565 = vsel %vm1309, %v805, %v1437
      %v1566 = vsel %vm1310, %v808, %v1438
      %v1567 = vsel %vm1311, %v813, %v1439
      %v1568 = vsel %vm1312, %v816, %v1440
      %v1569 = vsel %vm1313, %v821, %v1441
      %v1570 = vsel %vm1314, %v824, %v1442
      %v1571 = vsel %vm1315, %v829, %v1443
      %v1572 = vsel %vm1316, %v832, %v1444
      %v1573 = vsel %vm1317, %v837, %v1445
      %v1574 = vsel %vm1318, %v840, %v1446
      %v1575 = vsel %vm1319, %v845, %v1447
      %v1576 = vsel %vm1320, %v848, %v1448
      %v1577 = vsel %vm1321, %v853, %v1449
      %v1578 = vsel %vm1322, %v856, %v1450
      %v1579 = vsel %vm1323, %v861, %v1451
      %v1580 = vsel %vm1324, %v864, %v1452
      %v1581 = vsel %vm1325, %v869, %v1453
      %v1582 = vsel %vm1326, %v872, %v1454
      %v1583 = vsel %vm1327, %v877, %v1455
      %v1584 = vsel %vm1328, %v880, %v1456
      %v1585 = vsel %vm1329, %v885, %v1457
      %v1586 = vsel %vm1330, %v888, %v1458
      %v1587 = vsel %vm1331, %v893, %v1459
      %v1588 = vsel %vm1332, %v896, %v1460
      %v1589 = vsel %vm1333, %v901, %v1461
      %v1590 = vsel %vm1334, %v904, %v1462
      %v1591 = vsel %vm1335, %v909, %v1463
      %v1592 = vsel %vm1336, %v912, %v1464
      %v1593 = vsel %vm1337, %v917, %v1465
      %v1594 = vsel %vm1338, %v920, %v1466
      %v1595 = vsel %vm1339, %v925, %v1467
      %v1596 = vsel %vm1340, %v928, %v1468
      %v1597 = vsel %vm1341, %v933, %v1469
      %v1598 = vsel %vm1342, %v936, %v1470
      %v1599 = vsel %vm1343, %v941, %v1471
      %v1600 = vsel %vm1344, %v944, %v1472
      %v1601 = vsel %vm1345, %v949, %v1473
      %v1602 = vsel %vm1346, %v952, %v1474
      %v1603 = vsel %vm1347, %v957, %v1475
      %v1604 = vsel %vm1348, %v960, %v1476
      %v1605 = vsel %vm1349, %v965, %v1477
      %v1606 = vsel %vm1350, %v968, %v1478
      %v1607 = vsel %vm1351, %v973, %v1479
      %v1608 = vsel %vm1352, %v976, %v1480
      %v1609 = vsel %vm1353, %v981, %v1481
      %v1610 = vsel %vm1354, %v984, %v1482
      %v1611 = vsel %vm1355, %v989, %v1483
      %v1612 = vsel %vm1356, %v992, %v1484
      %v1613 = vsel %vm1357, %v997, %v1485
      %v1614 = vsel %vm1358, %v1000, %v1486
      %v1615 = vsel %vm1359, %v1005, %v1487
      %v1616 = vsel %vm1360, %v1008, %v1488
      %v1617 = vsel %vm1361, %v1013, %v1489
      %v1618 = vsel %vm1362, %v1016, %v1490
      %v1619 = vsel %vm1363, %v1021, %v1491
      %v1620 = vsel %vm1364, %v1024, %v1492
      %v1621 = vsel %vm1365, %v1029, %v1493
      %v1622 = vsel %vm1366, %v1032, %v1494
      %v1623 = vsel %vm1367, %v1037, %v1495
      %v1624 = vsel %vm1368, %v1040, %v1496
      %v1625 = vsel %vm1369, %v1045, %v1497
      %v1626 = vsel %vm1370, %v1048, %v1498
      %v1627 = vsel %vm1371, %v1053, %v1499
      %v1628 = vsel %vm1372, %v1056, %v1500
      %v1629 = vsel %vm1373, %v1061, %v1501
      %v1630 = vsel %vm1374, %v1064, %v1502
      %v1631 = vsel %vm1375, %v1069, %v1503
      %v1632 = vsel %vm1376, %v1072, %v1504
      %v1633 = vsel %vm1377, %v1077, %v1505
      %v1634 = vsel %vm1378, %v1080, %v1506
      %v1635 = vsel %vm1379, %v1085, %v1507
      %v1636 = vsel %vm1380, %v1088, %v1508
      %v1637 = vsel %vm1381, %v1093, %v1509
      %v1638 = vsel %vm1382, %v1096, %v1510
      %v1639 = vsel %vm1383, %v1101, %v1511
      %v1640 = vsel %vm1384, %v1104, %v1512
      %v1641 = vsel %vm1385, %v1109, %v1513
      %v1642 = vsel %vm1386, %v1112, %v1514
      %v1643 = vsel %vm1387, %v1117, %v1515
      %v1644 = vsel %vm1388, %v1120, %v1516
      %v1645 = vsel %vm1389, %v1125, %v1517
      %v1646 = vsel %vm1390, %v1128, %v1518
      %v1647 = vsel %vm1391, %v1133, %v1519
      %v1648 = vsel %vm1392, %v1136, %v1520
      %v1649 = vsel %vm1393, %v1141, %v1521
      %v1650 = vsel %vm1394, %v1144, %v1522
      %v1651 = vsel %vm1395, %v1149, %v1523
      %v1652 = vsel %vm1396, %v1152, %v1524
      %v1653 = vsel %vm1397, %v1157, %v1525
      %v1654 = vsel %vm1398, %v1160, %v1526
      %v1655 = vsel %vm1399, %v1165, %v1527
      %v1656 = vsel %vm1400, %v1168, %v1528
      %v1657 = vsel %vm1401, %v1173, %v1529
      %v1658 = vsel %vm1402, %v1176, %v1530
      %v1659 = vsel %vm1403, %v1181, %v1531
      %v1660 = vsel %vm1404, %v1184, %v1532
      %v1661 = vsel %vm1405, %v1189, %v1533
      %v1662 = vsel %vm1406, %v1192, %v1534
      %v1663 = vsel %vm1407, %v1197, %v1535
      %v1664 = vsel %vm1408, %v1200, %v1536
      %v1665 = vsel %vm1409, %v1205, %v1537
      %v1666 = vsel %vm1410, %v1208, %v1538
      %v1667 = vsel %vm1411, %v1213, %v1539
      %v1668 = vsel %vm1412, %v1216, %v1540
      %v1669 = vsel %vm1413, %v1221, %v1541
      %v1670 = vsel %vm1414, %v1224, %v1542
      %v1671 = vsel %vm1415, %v1229, %v1543
      %v1672 = vsel %vm1416, %v1232, %v1544
      %v1673 = vsel %vm1417, %v1237, %v1545
      %v1674 = vsel %vm1418, %v1240, %v1546
      %v1675 = vsel %vm1419, %v1245, %v1547
      %v1676 = vsel %vm1420, %v1248, %v1548
      %v1677 = vsel %vm1421, %v1253, %v1549
      %v1678 = vsel %vm1422, %v1256, %v1550
      %v1679 = vsel %vm1423, %v1261, %v1551
      %v1680 = vsel %vm1424, %v1264, %v1552
      %v1681 = vsel %vm1425, %v1269, %v1553
      %v1682 = vsel %vm1426, %v1272, %v1554
      %v1683 = vsel %vm1427, %v1277, %v1555
      %v1684 = vsel %vm1428, %v1280, %v1556
      %v1685 = vsel %vm1429, %v1285, %v1557
      %v1686 = vsel %vm1430, %v1288, %v1558
      %v1687 = vsel %vm1431, %v1293, %v1559
      %v1688 = vsel %vm1432, %v1296, %v1560
      %v1689 = vsel %vm1433, %v1301, %v1561
      %v1690 = vsel %vm1434, %v1304, %v1562
      %v1691 = vpack.c.bf16 %v1564, %v1563
      %v1692 = vpack.c.bf16 %v1566, %v1565
      %v1693 = vpack.c.bf16 %v1568, %v1567
      %v1694 = vpack.c.bf16 %v1570, %v1569
      %v1695 = vpack.c.bf16 %v1572, %v1571
      %v1696 = vpack.c.bf16 %v1574, %v1573
      %v1697 = vpack.c.bf16 %v1576, %v1575
      %v1698 = vpack.c.bf16 %v1578, %v1577
      %v1699 = vpack.c.bf16 %v1580, %v1579
      %v1700 = vpack.c.bf16 %v1582, %v1581
      %v1701 = vpack.c.bf16 %v1584, %v1583
      %v1702 = vpack.c.bf16 %v1586, %v1585
      %v1703 = vpack.c.bf16 %v1588, %v1587
      %v1704 = vpack.c.bf16 %v1590, %v1589
      %v1705 = vpack.c.bf16 %v1592, %v1591
      %v1706 = vpack.c.bf16 %v1594, %v1593
      %v1707 = vpack.c.bf16 %v1596, %v1595
      %v1708 = vpack.c.bf16 %v1598, %v1597
      %v1709 = vpack.c.bf16 %v1600, %v1599
      %v1710 = vpack.c.bf16 %v1602, %v1601
      %v1711 = vpack.c.bf16 %v1604, %v1603
      %v1712 = vpack.c.bf16 %v1606, %v1605
      %v1713 = vpack.c.bf16 %v1608, %v1607
      %v1714 = vpack.c.bf16 %v1610, %v1609
      %v1715 = vpack.c.bf16 %v1612, %v1611
      %v1716 = vpack.c.bf16 %v1614, %v1613
      %v1717 = vpack.c.bf16 %v1616, %v1615
      %v1718 = vpack.c.bf16 %v1618, %v1617
      %v1719 = vpack.c.bf16 %v1620, %v1619
      %v1720 = vpack.c.bf16 %v1622, %v1621
      %v1721 = vpack.c.bf16 %v1624, %v1623
      %v1722 = vpack.c.bf16 %v1626, %v1625
      %v1723 = vpack.c.bf16 %v1628, %v1627
      %v1724 = vpack.c.bf16 %v1630, %v1629
      %v1725 = vpack.c.bf16 %v1632, %v1631
      %v1726 = vpack.c.bf16 %v1634, %v1633
      %v1727 = vpack.c.bf16 %v1636, %v1635
      %v1728 = vpack.c.bf16 %v1638, %v1637
      %v1729 = vpack.c.bf16 %v1640, %v1639
      %v1730 = vpack.c.bf16 %v1642, %v1641
      %v1731 = vpack.c.bf16 %v1644, %v1643
      %v1732 = vpack.c.bf16 %v1646, %v1645
      %v1733 = vpack.c.bf16 %v1648, %v1647
      %v1734 = vpack.c.bf16 %v1650, %v1649
      %v1735 = vpack.c.bf16 %v1652, %v1651
      %v1736 = vpack.c.bf16 %v1654, %v1653
      %v1737 = vpack.c.bf16 %v1656, %v1655
      %v1738 = vpack.c.bf16 %v1658, %v1657
      %v1739 = vpack.c.bf16 %v1660, %v1659
      %v1740 = vpack.c.bf16 %v1662, %v1661
      %v1741 = vpack.c.bf16 %v1664, %v1663
      %v1742 = vpack.c.bf16 %v1666, %v1665
      %v1743 = vpack.c.bf16 %v1668, %v1667
      %v1744 = vpack.c.bf16 %v1670, %v1669
      %v1745 = vpack.c.bf16 %v1672, %v1671
      %v1746 = vpack.c.bf16 %v1674, %v1673
      %v1747 = vpack.c.bf16 %v1676, %v1675
      %v1748 = vpack.c.bf16 %v1678, %v1677
      %v1749 = vpack.c.bf16 %v1680, %v1679
      %v1750 = vpack.c.bf16 %v1682, %v1681
      %v1751 = vpack.c.bf16 %v1684, %v1683
      %v1752 = vpack.c.bf16 %v1686, %v1685
      %v1753 = vpack.c.bf16 %v1688, %v1687
      %v1754 = vpack.c.bf16 %v1690, %v1689
      %v1819 = vunpack.c.l.b16 %v1691
      %v1820 = vunpack.c.h.b16 %v1691
      %v1821 = vunpack.c.l.b16 %v1692
      %v1822 = vunpack.c.h.b16 %v1692
      %v1823 = vunpack.c.l.b16 %v1693
      %v1824 = vunpack.c.h.b16 %v1693
      %v1825 = vunpack.c.l.b16 %v1694
      %v1826 = vunpack.c.h.b16 %v1694
      %v1827 = vunpack.c.l.b16 %v1695
      %v1828 = vunpack.c.h.b16 %v1695
      %v1829 = vunpack.c.l.b16 %v1696
      %v1830 = vunpack.c.h.b16 %v1696
      %v1831 = vunpack.c.l.b16 %v1697
      %v1832 = vunpack.c.h.b16 %v1697
      %v1833 = vunpack.c.l.b16 %v1698
      %v1834 = vunpack.c.h.b16 %v1698
      %v1835 = vunpack.c.l.b16 %v1699
      %v1836 = vunpack.c.h.b16 %v1699
      %v1837 = vunpack.c.l.b16 %v1700
      %v1838 = vunpack.c.h.b16 %v1700
      %v1839 = vunpack.c.l.b16 %v1701
      %v1840 = vunpack.c.h.b16 %v1701
      %v1841 = vunpack.c.l.b16 %v1702
      %v1842 = vunpack.c.h.b16 %v1702
      %v1843 = vunpack.c.l.b16 %v1703
      %v1844 = vunpack.c.h.b16 %v1703
      %v1845 = vunpack.c.l.b16 %v1704
      %v1846 = vunpack.c.h.b16 %v1704
      %v1847 = vunpack.c.l.b16 %v1705
      %v1848 = vunpack.c.h.b16 %v1705
      %v1849 = vunpack.c.l.b16 %v1706
      %v1850 = vunpack.c.h.b16 %v1706
      %v1851 = vunpack.c.l.b16 %v1707
      %v1852 = vunpack.c.h.b16 %v1707
      %v1853 = vunpack.c.l.b16 %v1708
      %v1854 = vunpack.c.h.b16 %v1708
      %v1855 = vunpack.c.l.b16 %v1709
      %v1856 = vunpack.c.h.b16 %v1709
      %v1857 = vunpack.c.l.b16 %v1710
      %v1858 = vunpack.c.h.b16 %v1710
      %v1859 = vunpack.c.l.b16 %v1711
      %v1860 = vunpack.c.h.b16 %v1711
      %v1861 = vunpack.c.l.b16 %v1712
      %v1862 = vunpack.c.h.b16 %v1712
      %v1863 = vunpack.c.l.b16 %v1713
      %v1864 = vunpack.c.h.b16 %v1713
      %v1865 = vunpack.c.l.b16 %v1714
      %v1866 = vunpack.c.h.b16 %v1714
      %v1867 = vunpack.c.l.b16 %v1715
      %v1868 = vunpack.c.h.b16 %v1715
      %v1869 = vunpack.c.l.b16 %v1716
      %v1870 = vunpack.c.h.b16 %v1716
      %v1871 = vunpack.c.l.b16 %v1717
      %v1872 = vunpack.c.h.b16 %v1717
      %v1873 = vunpack.c.l.b16 %v1718
      %v1874 = vunpack.c.h.b16 %v1718
      %v1875 = vunpack.c.l.b16 %v1719
      %v1876 = vunpack.c.h.b16 %v1719
      %v1877 = vunpack.c.l.b16 %v1720
      %v1878 = vunpack.c.h.b16 %v1720
      %v1879 = vunpack.c.l.b16 %v1721
      %v1880 = vunpack.c.h.b16 %v1721
      %v1881 = vunpack.c.l.b16 %v1722
      %v1882 = vunpack.c.h.b16 %v1722
      %v1883 = vunpack.c.l.b16 %v1723
      %v1884 = vunpack.c.h.b16 %v1723
      %v1885 = vunpack.c.l.b16 %v1724
      %v1886 = vunpack.c.h.b16 %v1724
      %v1887 = vunpack.c.l.b16 %v1725
      %v1888 = vunpack.c.h.b16 %v1725
      %v1889 = vunpack.c.l.b16 %v1726
      %v1890 = vunpack.c.h.b16 %v1726
      %v1891 = vunpack.c.l.b16 %v1727
      %v1892 = vunpack.c.h.b16 %v1727
      %v1893 = vunpack.c.l.b16 %v1728
      %v1894 = vunpack.c.h.b16 %v1728
      %v1895 = vunpack.c.l.b16 %v1729
      %v1896 = vunpack.c.h.b16 %v1729
      %v1897 = vunpack.c.l.b16 %v1730
      %v1898 = vunpack.c.h.b16 %v1730
      %v1899 = vunpack.c.l.b16 %v1731
      %v1900 = vunpack.c.h.b16 %v1731
      %v1901 = vunpack.c.l.b16 %v1732
      %v1902 = vunpack.c.h.b16 %v1732
      %v1903 = vunpack.c.l.b16 %v1733
      %v1904 = vunpack.c.h.b16 %v1733
      %v1905 = vunpack.c.l.b16 %v1734
      %v1906 = vunpack.c.h.b16 %v1734
      %v1907 = vunpack.c.l.b16 %v1735
      %v1908 = vunpack.c.h.b16 %v1735
      %v1909 = vunpack.c.l.b16 %v1736
      %v1910 = vunpack.c.h.b16 %v1736
      %v1911 = vunpack.c.l.b16 %v1737
      %v1912 = vunpack.c.h.b16 %v1737
      %v1913 = vunpack.c.l.b16 %v1738
      %v1914 = vunpack.c.h.b16 %v1738
      %v1915 = vunpack.c.l.b16 %v1739
      %v1916 = vunpack.c.h.b16 %v1739
      %v1917 = vunpack.c.l.b16 %v1740
      %v1918 = vunpack.c.h.b16 %v1740
      %v1919 = vunpack.c.l.b16 %v1741
      %v1920 = vunpack.c.h.b16 %v1741
      %v1921 = vunpack.c.l.b16 %v1742
      %v1922 = vunpack.c.h.b16 %v1742
      %v1923 = vunpack.c.l.b16 %v1743
      %v1924 = vunpack.c.h.b16 %v1743
      %v1925 = vunpack.c.l.b16 %v1744
      %v1926 = vunpack.c.h.b16 %v1744
      %v1927 = vunpack.c.l.b16 %v1745
      %v1928 = vunpack.c.h.b16 %v1745
      %v1929 = vunpack.c.l.b16 %v1746
      %v1930 = vunpack.c.h.b16 %v1746
      %v1931 = vunpack.c.l.b16 %v1747
      %v1932 = vunpack.c.h.b16 %v1747
      %v1933 = vunpack.c.l.b16 %v1748
      %v1934 = vunpack.c.h.b16 %v1748
      %v1935 = vunpack.c.l.b16 %v1749
      %v1936 = vunpack.c.h.b16 %v1749
      %v1937 = vunpack.c.l.b16 %v1750
      %v1938 = vunpack.c.h.b16 %v1750
      %v1939 = vunpack.c.l.b16 %v1751
      %v1940 = vunpack.c.h.b16 %v1751
      %v1941 = vunpack.c.l.b16 %v1752
      %v1942 = vunpack.c.h.b16 %v1752
      %v1943 = vunpack.c.l.b16 %v1753
      %v1944 = vunpack.c.h.b16 %v1753
      %v1945 = vunpack.c.l.b16 %v1754
      %v1946 = vunpack.c.h.b16 %v1754
      %v1947 = vpack.c.b16 %v1819, %v1819
      %v1948 = vpack.c.b16 %v1820, %v1820
      %v1949 = vpack.c.b16 %v1821, %v1821
      %v1950 = vpack.c.b16 %v1822, %v1822
      %v1951 = vpack.c.b16 %v1823, %v1823
      %v1952 = vpack.c.b16 %v1824, %v1824
      %v1953 = vpack.c.b16 %v1825, %v1825
      %v1954 = vpack.c.b16 %v1826, %v1826
      %v1955 = vpack.c.b16 %v1827, %v1827
      %v1956 = vpack.c.b16 %v1828, %v1828
      %v1957 = vpack.c.b16 %v1829, %v1829
      %v1958 = vpack.c.b16 %v1830, %v1830
      %v1959 = vpack.c.b16 %v1831, %v1831
      %v1960 = vpack.c.b16 %v1832, %v1832
      %v1961 = vpack.c.b16 %v1833, %v1833
      %v1962 = vpack.c.b16 %v1834, %v1834
      %v1963 = vpack.c.b16 %v1835, %v1835
      %v1964 = vpack.c.b16 %v1836, %v1836
      %v1965 = vpack.c.b16 %v1837, %v1837
      %v1966 = vpack.c.b16 %v1838, %v1838
      %v1967 = vpack.c.b16 %v1839, %v1839
      %v1968 = vpack.c.b16 %v1840, %v1840
      %v1969 = vpack.c.b16 %v1841, %v1841
      %v1970 = vpack.c.b16 %v1842, %v1842
      %v1971 = vpack.c.b16 %v1843, %v1843
      %v1972 = vpack.c.b16 %v1844, %v1844
      %v1973 = vpack.c.b16 %v1845, %v1845
      %v1974 = vpack.c.b16 %v1846, %v1846
      %v1975 = vpack.c.b16 %v1847, %v1847
      %v1976 = vpack.c.b16 %v1848, %v1848
      %v1977 = vpack.c.b16 %v1849, %v1849
      %v1978 = vpack.c.b16 %v1850, %v1850
      %v1979 = vpack.c.b16 %v1851, %v1851
      %v1980 = vpack.c.b16 %v1852, %v1852
      %v1981 = vpack.c.b16 %v1853, %v1853
      %v1982 = vpack.c.b16 %v1854, %v1854
      %v1983 = vpack.c.b16 %v1855, %v1855
      %v1984 = vpack.c.b16 %v1856, %v1856
      %v1985 = vpack.c.b16 %v1857, %v1857
      %v1986 = vpack.c.b16 %v1858, %v1858
      %v1987 = vpack.c.b16 %v1859, %v1859
      %v1988 = vpack.c.b16 %v1860, %v1860
      %v1989 = vpack.c.b16 %v1861, %v1861
      %v1990 = vpack.c.b16 %v1862, %v1862
      %v1991 = vpack.c.b16 %v1863, %v1863
      %v1992 = vpack.c.b16 %v1864, %v1864
      %v1993 = vpack.c.b16 %v1865, %v1865
      %v1994 = vpack.c.b16 %v1866, %v1866
      %v1995 = vpack.c.b16 %v1867, %v1867
      %v1996 = vpack.c.b16 %v1868, %v1868
      %v1997 = vpack.c.b16 %v1869, %v1869
      %v1998 = vpack.c.b16 %v1870, %v1870
      %v1999 = vpack.c.b16 %v1871, %v1871
      %v2000 = vpack.c.b16 %v1872, %v1872
      %v2001 = vpack.c.b16 %v1873, %v1873
      %v2002 = vpack.c.b16 %v1874, %v1874
      %v2003 = vpack.c.b16 %v1875, %v1875
      %v2004 = vpack.c.b16 %v1876, %v1876
      %v2005 = vpack.c.b16 %v1877, %v1877
      %v2006 = vpack.c.b16 %v1878, %v1878
      %v2007 = vpack.c.b16 %v1879, %v1879
      %v2008 = vpack.c.b16 %v1880, %v1880
      %v2009 = vpack.c.b16 %v1881, %v1881
      %v2010 = vpack.c.b16 %v1882, %v1882
      %v2011 = vpack.c.b16 %v1883, %v1883
      %v2012 = vpack.c.b16 %v1884, %v1884
      %v2013 = vpack.c.b16 %v1885, %v1885
      %v2014 = vpack.c.b16 %v1886, %v1886
      %v2015 = vpack.c.b16 %v1887, %v1887
      %v2016 = vpack.c.b16 %v1888, %v1888
      %v2017 = vpack.c.b16 %v1889, %v1889
      %v2018 = vpack.c.b16 %v1890, %v1890
      %v2019 = vpack.c.b16 %v1891, %v1891
      %v2020 = vpack.c.b16 %v1892, %v1892
      %v2021 = vpack.c.b16 %v1893, %v1893
      %v2022 = vpack.c.b16 %v1894, %v1894
      %v2023 = vpack.c.b16 %v1895, %v1895
      %v2024 = vpack.c.b16 %v1896, %v1896
      %v2025 = vpack.c.b16 %v1897, %v1897
      %v2026 = vpack.c.b16 %v1898, %v1898
      %v2027 = vpack.c.b16 %v1899, %v1899
      %v2028 = vpack.c.b16 %v1900, %v1900
      %v2029 = vpack.c.b16 %v1901, %v1901
      %v2030 = vpack.c.b16 %v1902, %v1902
      %v2031 = vpack.c.b16 %v1903, %v1903
      %v2032 = vpack.c.b16 %v1904, %v1904
      %v2033 = vpack.c.b16 %v1905, %v1905
      %v2034 = vpack.c.b16 %v1906, %v1906
      %v2035 = vpack.c.b16 %v1907, %v1907
      %v2036 = vpack.c.b16 %v1908, %v1908
      %v2037 = vpack.c.b16 %v1909, %v1909
      %v2038 = vpack.c.b16 %v1910, %v1910
      %v2039 = vpack.c.b16 %v1911, %v1911
      %v2040 = vpack.c.b16 %v1912, %v1912
      %v2041 = vpack.c.b16 %v1913, %v1913
      %v2042 = vpack.c.b16 %v1914, %v1914
      %v2043 = vpack.c.b16 %v1915, %v1915
      %v2044 = vpack.c.b16 %v1916, %v1916
      %v2045 = vpack.c.b16 %v1917, %v1917
      %v2046 = vpack.c.b16 %v1918, %v1918
      %v2047 = vpack.c.b16 %v1919, %v1919
      %v2048 = vpack.c.b16 %v1920, %v1920
      %v2049 = vpack.c.b16 %v1921, %v1921
      %v2050 = vpack.c.b16 %v1922, %v1922
      %v2051 = vpack.c.b16 %v1923, %v1923
      %v2052 = vpack.c.b16 %v1924, %v1924
      %v2053 = vpack.c.b16 %v1925, %v1925
      %v2054 = vpack.c.b16 %v1926, %v1926
      %v2055 = vpack.c.b16 %v1927, %v1927
      %v2056 = vpack.c.b16 %v1928, %v1928
      %v2057 = vpack.c.b16 %v1929, %v1929
      %v2058 = vpack.c.b16 %v1930, %v1930
      %v2059 = vpack.c.b16 %v1931, %v1931
      %v2060 = vpack.c.b16 %v1932, %v1932
      %v2061 = vpack.c.b16 %v1933, %v1933
      %v2062 = vpack.c.b16 %v1934, %v1934
      %v2063 = vpack.c.b16 %v1935, %v1935
      %v2064 = vpack.c.b16 %v1936, %v1936
      %v2065 = vpack.c.b16 %v1937, %v1937
      %v2066 = vpack.c.b16 %v1938, %v1938
      %v2067 = vpack.c.b16 %v1939, %v1939
      %v2068 = vpack.c.b16 %v1940, %v1940
      %v2069 = vpack.c.b16 %v1941, %v1941
      %v2070 = vpack.c.b16 %v1942, %v1942
      %v2071 = vpack.c.b16 %v1943, %v1943
      %v2072 = vpack.c.b16 %v1944, %v1944
      %v2073 = vpack.c.b16 %v1945, %v1945
      %v2074 = vpack.c.b16 %v1946, %v1946
      %2203 = vst [vmem:[%s183] sm:$0xf] %v1947
      %2204 = vst [vmem:[%s183 + $0x4] sm:$0xf] %v1948
      %2205 = vst [vmem:[%s183 + $0x8] sm:$0xf] %v1949
      %2206 = vst [vmem:[%s183 + $0xc] sm:$0xf] %v1950
      %2207 = vst [vmem:[%s183 + $0x10] sm:$0xf] %v1951
      %2208 = vst [vmem:[%s183 + $0x14] sm:$0xf] %v1952
      %2209 = vst [vmem:[%s183 + $0x18] sm:$0xf] %v1953
      %2210 = vst [vmem:[%s183 + $0x1c] sm:$0xf] %v1954
      %2211 = vst [vmem:[%s183 + $0x20] sm:$0xf] %v1955
      %2212 = vst [vmem:[%s183 + $0x24] sm:$0xf] %v1956
      %2213 = vst [vmem:[%s183 + $0x28] sm:$0xf] %v1957
      %2214 = vst [vmem:[%s183 + $0x2c] sm:$0xf] %v1958
      %2215 = vst [vmem:[%s183 + $0x30] sm:$0xf] %v1959
      %2216 = vst [vmem:[%s183 + $0x34] sm:$0xf] %v1960
      %2217 = vst [vmem:[%s183 + $0x38] sm:$0xf] %v1961
      %2218 = vst [vmem:[%s183 + $0x3c] sm:$0xf] %v1962
      %2219 = vst [vmem:[%s183 + $0x40] sm:$0xf] %v1963
      %2220 = vst [vmem:[%s183 + $0x44] sm:$0xf] %v1964
      %2221 = vst [vmem:[%s183 + $0x48] sm:$0xf] %v1965
      %2222 = vst [vmem:[%s183 + $0x4c] sm:$0xf] %v1966
      %2223 = vst [vmem:[%s183 + $0x50] sm:$0xf] %v1967
      %2224 = vst [vmem:[%s183 + $0x54] sm:$0xf] %v1968
      %2225 = vst [vmem:[%s183 + $0x58] sm:$0xf] %v1969
      %2226 = vst [vmem:[%s183 + $0x5c] sm:$0xf] %v1970
      %2227 = vst [vmem:[%s183 + $0x60] sm:$0xf] %v1971
      %2228 = vst [vmem:[%s183 + $0x64] sm:$0xf] %v1972
      %2229 = vst [vmem:[%s183 + $0x68] sm:$0xf] %v1973
      %2230 = vst [vmem:[%s183 + $0x6c] sm:$0xf] %v1974
      %2231 = vst [vmem:[%s183 + $0x70] sm:$0xf] %v1975
      %2232 = vst [vmem:[%s183 + $0x74] sm:$0xf] %v1976
      %2233 = vst [vmem:[%s183 + $0x78] sm:$0xf] %v1977
      %2234 = vst [vmem:[%s183 + $0x7c] sm:$0xf] %v1978
      %2235 = vst [vmem:[%s183 + $0x80] sm:$0xf] %v1979
      %2236 = vst [vmem:[%s183 + $0x84] sm:$0xf] %v1980
      %2237 = vst [vmem:[%s183 + $0x88] sm:$0xf] %v1981
      %2238 = vst [vmem:[%s183 + $0x8c] sm:$0xf] %v1982
      %2239 = vst [vmem:[%s183 + $0x90] sm:$0xf] %v1983
      %2240 = vst [vmem:[%s183 + $0x94] sm:$0xf] %v1984
      %2241 = vst [vmem:[%s183 + $0x98] sm:$0xf] %v1985
      %2242 = vst [vmem:[%s183 + $0x9c] sm:$0xf] %v1986
      %2243 = vst [vmem:[%s183 + $0xa0] sm:$0xf] %v1987
      %2244 = vst [vmem:[%s183 + $0xa4] sm:$0xf] %v1988
      %2245 = vst [vmem:[%s183 + $0xa8] sm:$0xf] %v1989
      %2246 = vst [vmem:[%s183 + $0xac] sm:$0xf] %v1990
      %2247 = vst [vmem:[%s183 + $0xb0] sm:$0xf] %v1991
      %2248 = vst [vmem:[%s183 + $0xb4] sm:$0xf] %v1992
      %2249 = vst [vmem:[%s183 + $0xb8] sm:$0xf] %v1993
      %2250 = vst [vmem:[%s183 + $0xbc] sm:$0xf] %v1994
      %2251 = vst [vmem:[%s183 + $0xc0] sm:$0xf] %v1995
      %2252 = vst [vmem:[%s183 + $0xc4] sm:$0xf] %v1996
      %2253 = vst [vmem:[%s183 + $0xc8] sm:$0xf] %v1997
      %2254 = vst [vmem:[%s183 + $0xcc] sm:$0xf] %v1998
      %2255 = vst [vmem:[%s183 + $0xd0] sm:$0xf] %v1999
      %2256 = vst [vmem:[%s183 + $0xd4] sm:$0xf] %v2000
      %2257 = vst [vmem:[%s183 + $0xd8] sm:$0xf] %v2001
      %2258 = vst [vmem:[%s183 + $0xdc] sm:$0xf] %v2002
      %2259 = vst [vmem:[%s183 + $0xe0] sm:$0xf] %v2003
      %2260 = vst [vmem:[%s183 + $0xe4] sm:$0xf] %v2004
      %2261 = vst [vmem:[%s183 + $0xe8] sm:$0xf] %v2005
      %2262 = vst [vmem:[%s183 + $0xec] sm:$0xf] %v2006
      %2263 = vst [vmem:[%s183 + $0xf0] sm:$0xf] %v2007
      %2264 = vst [vmem:[%s183 + $0xf4] sm:$0xf] %v2008
      %2265 = vst [vmem:[%s183 + $0xf8] sm:$0xf] %v2009
      %2266 = vst [vmem:[%s183 + $0xfc] sm:$0xf] %v2010
      %2267 = vst [vmem:[%s183 + $0x100] sm:$0xf] %v2011
      %2268 = vst [vmem:[%s183 + $0x104] sm:$0xf] %v2012
      %2269 = vst [vmem:[%s183 + $0x108] sm:$0xf] %v2013
      %2270 = vst [vmem:[%s183 + $0x10c] sm:$0xf] %v2014
      %2271 = vst [vmem:[%s183 + $0x110] sm:$0xf] %v2015
      %2272 = vst [vmem:[%s183 + $0x114] sm:$0xf] %v2016
      %2273 = vst [vmem:[%s183 + $0x118] sm:$0xf] %v2017
      %2274 = vst [vmem:[%s183 + $0x11c] sm:$0xf] %v2018
      %2275 = vst [vmem:[%s183 + $0x120] sm:$0xf] %v2019
      %2276 = vst [vmem:[%s183 + $0x124] sm:$0xf] %v2020
      %2277 = vst [vmem:[%s183 + $0x128] sm:$0xf] %v2021
      %2278 = vst [vmem:[%s183 + $0x12c] sm:$0xf] %v2022
      %2279 = vst [vmem:[%s183 + $0x130] sm:$0xf] %v2023
      %2280 = vst [vmem:[%s183 + $0x134] sm:$0xf] %v2024
      %2281 = vst [vmem:[%s183 + $0x138] sm:$0xf] %v2025
      %2282 = vst [vmem:[%s183 + $0x13c] sm:$0xf] %v2026
      %2283 = vst [vmem:[%s183 + $0x140] sm:$0xf] %v2027
      %2284 = vst [vmem:[%s183 + $0x144] sm:$0xf] %v2028
      %2285 = vst [vmem:[%s183 + $0x148] sm:$0xf] %v2029
      %2286 = vst [vmem:[%s183 + $0x14c] sm:$0xf] %v2030
      %2287 = vst [vmem:[%s183 + $0x150] sm:$0xf] %v2031
      %2288 = vst [vmem:[%s183 + $0x154] sm:$0xf] %v2032
      %2289 = vst [vmem:[%s183 + $0x158] sm:$0xf] %v2033
      %2290 = vst [vmem:[%s183 + $0x15c] sm:$0xf] %v2034
      %2291 = vst [vmem:[%s183 + $0x160] sm:$0xf] %v2035
      %2292 = vst [vmem:[%s183 + $0x164] sm:$0xf] %v2036
      %2293 = vst [vmem:[%s183 + $0x168] sm:$0xf] %v2037
      %2294 = vst [vmem:[%s183 + $0x16c] sm:$0xf] %v2038
      %2295 = vst [vmem:[%s183 + $0x170] sm:$0xf] %v2039
      %2296 = vst [vmem:[%s183 + $0x174] sm:$0xf] %v2040
      %2297 = vst [vmem:[%s183 + $0x178] sm:$0xf] %v2041
      %2298 = vst [vmem:[%s183 + $0x17c] sm:$0xf] %v2042
      %2299 = vst [vmem:[%s183 + $0x180] sm:$0xf] %v2043
      %2300 = vst [vmem:[%s183 + $0x184] sm:$0xf] %v2044
      %2301 = vst [vmem:[%s183 + $0x188] sm:$0xf] %v2045
      %2302 = vst [vmem:[%s183 + $0x18c] sm:$0xf] %v2046
      %2303 = vst [vmem:[%s183 + $0x190] sm:$0xf] %v2047
      %2304 = vst [vmem:[%s183 + $0x194] sm:$0xf] %v2048
      %2305 = vst [vmem:[%s183 + $0x198] sm:$0xf] %v2049
      %2306 = vst [vmem:[%s183 + $0x19c] sm:$0xf] %v2050
      %2307 = vst [vmem:[%s183 + $0x1a0] sm:$0xf] %v2051
      %2308 = vst [vmem:[%s183 + $0x1a4] sm:$0xf] %v2052
      %2309 = vst [vmem:[%s183 + $0x1a8] sm:$0xf] %v2053
      %2310 = vst [vmem:[%s183 + $0x1ac] sm:$0xf] %v2054
      %2311 = vst [vmem:[%s183 + $0x1b0] sm:$0xf] %v2055
      %2312 = vst [vmem:[%s183 + $0x1b4] sm:$0xf] %v2056
      %2313 = vst [vmem:[%s183 + $0x1b8] sm:$0xf] %v2057
      %2314 = vst [vmem:[%s183 + $0x1bc] sm:$0xf] %v2058
      %2315 = vst [vmem:[%s183 + $0x1c0] sm:$0xf] %v2059
      %2316 = vst [vmem:[%s183 + $0x1c4] sm:$0xf] %v2060
      %2317 = vst [vmem:[%s183 + $0x1c8] sm:$0xf] %v2061
      %2318 = vst [vmem:[%s183 + $0x1cc] sm:$0xf] %v2062
      %2319 = vst [vmem:[%s183 + $0x1d0] sm:$0xf] %v2063
      %2320 = vst [vmem:[%s183 + $0x1d4] sm:$0xf] %v2064
      %2321 = vst [vmem:[%s183 + $0x1d8] sm:$0xf] %v2065
      %2322 = vst [vmem:[%s183 + $0x1dc] sm:$0xf] %v2066
      %2323 = vst [vmem:[%s183 + $0x1e0] sm:$0xf] %v2067
      %2324 = vst [vmem:[%s183 + $0x1e4] sm:$0xf] %v2068
      %2325 = vst [vmem:[%s183 + $0x1e8] sm:$0xf] %v2069
      %2326 = vst [vmem:[%s183 + $0x1ec] sm:$0xf] %v2070
      %2327 = vst [vmem:[%s183 + $0x1f0] sm:$0xf] %v2071
      %2328 = vst [vmem:[%s183 + $0x1f4] sm:$0xf] %v2072
      %2329 = vst [vmem:[%s183 + $0x1f8] sm:$0xf] %v2073
      %2330 = vst [vmem:[%s183 + $0x1fc] sm:$0xf] %v2074
      %s2331 = smul.u32 128, %s19
      %p2332 = scmp.lt.s32.totalorder %s2331, 255
      %s2333 = scalar_select %p2332, %s2331, 255
      %p2334 = scmp.lt.s32.totalorder %s18, 0
      %s2335 = scalar_select %p2334, %s18, 0
      %s2336 = sadd.s32 %s2335, %s2333
      %s2337 = smul.addr %s2336, 4
      %s2338 = scalar_lea.vmem %s2, %s2337
      // Predicated region
      $region29: #{wgan_discriminator_forward.5} parent=27 // pred_check
        %p2339 = pneg %p101
      $region30: #{wgan_discriminator_forward.5} parent=27 // pred_check_branch
        %2341 = sbr.rel (%p2339) target = $region32
      $region31: #{wgan_discriminator_forward.5} parent=27 // pred_region
        %s2342 = smul.u32 128, %s19
      $region32: #{wgan_discriminator_forward.5} parent=27 // pred_fallthru
        _
    $region28: #{wgan_discriminator_forward.5} parent=5 // pred_fallthru
      _
    %p2343 = scmp.le.s32.totalorder 2, %s8
    // Predicated region
    $region33: #{wgan_discriminator_forward.5} parent=5 // pred_check
      %p2344 = pneg %p2343
    $region34: #{wgan_discriminator_forward.5} parent=5 // pred_check_branch
      %2346 = sbr.rel (%p2344) target = $region36
    $region35: #{wgan_discriminator_forward.5} parent=5 // pred_region
      %s2347 = ssub.s32 %s8, 2
      // Predicated region
      $region37: #{wgan_discriminator_forward.5} parent=35 // pred_check
        %p2348 = pneg %p107
      $region38: #{wgan_discriminator_forward.5} parent=35 // pred_check_branch
        %2350 = sbr.rel (%p2348) target = $region40
      $region39: #{wgan_discriminator_forward.5} parent=35 // pred_region
        %s2351 = smul.u32 128, %s22
        %p2352 = scmp.lt.s32.totalorder %s2351, 255
        %s2353 = scalar_select %p2352, %s2351, 255
        %p2354 = scmp.lt.s32.totalorder %s21, 0
        %s2355 = scalar_select %p2354, %s21, 0
        %s2356 = sadd.s32 %s2355, %s2353
        %s2357 = smul.addr %s2356, 4
        %s2358 = scalar_lea.vmem %s2, %s2357
      $region40: #{wgan_discriminator_forward.5} parent=35 // pred_fallthru
        _
    $region36: #{wgan_discriminator_forward.5} parent=5 // pred_fallthru
      _
  $region6: #{wgan_discriminator_forward.5} parent=0 // loop_footer
    %s12 = sadd.s32 1, %s8
  $region7: #{wgan_discriminator_forward.5} parent=0 // loop_footer_branch
    %7 = sbr.rel target = $region3
  $region8: #{wgan_discriminator_forward.5} parent=0 // loop_exit
    _

// kernel: wgan_discriminator_forward.6
$region0: #{wgan_discriminator_forward.6}
  #allocation0 [shape = 'u32[]', space=smem, size = 0x4, offset = 0x4, fixed_abs, tag = 'smem constant byte address 0x4 - core index']
  #allocation1 [shape = 'u32[144,128]{1,0:T(1,128)}', space=vmem, size = 0x12000, scoped, tag = 'internal scratch']
  %s0 = inlined_call_operand.vmem [shape: bf16[512,128], index: 0, kind: input, shape index: {}]
  %s1 = inlined_call_operand.vmem [shape: bf16[128,128], index: 1, kind: input, shape index: {}]
  %s2 = inlined_call_operand.vmem [shape: bf16[512,128], index: 2, kind: output, shape index: {}]
  %s3 = sld [smem:[#allocation0]]
  $region18: #{wgan_discriminator_forward.6} parent=0
    _
  %s5 = ssub.s32 1, %s3
  %s6 = scalar_select 0, %s5, %s3
  // Predicated region
  $region2: #{wgan_discriminator_forward.6} parent=0 // pred_check
    _
  $region3: #{wgan_discriminator_forward.6} parent=0 // pred_check_branch
    %8 = sbr.rel (0) target = $region5
  $region4: #{wgan_discriminator_forward.6} parent=0 // pred_region
    _
  $region5: #{wgan_discriminator_forward.6} parent=0 // pred_fallthru
    _
  // Predicated region
  $region6: #{wgan_discriminator_forward.6} parent=0 // pred_check
    _
  $region7: #{wgan_discriminator_forward.6} parent=0 // pred_check_branch
    %10 = sbr.rel (0) target = $region9
  $region8: #{wgan_discriminator_forward.6} parent=0 // pred_region
    _
  $region9: #{wgan_discriminator_forward.6} parent=0 // pred_fallthru
    _
  %v12 = vld [vmem:[%s0] sm:$0xf]
  %v13 = vld [vmem:[%s0 + $0x4] sm:$0xf]
  %v14 = vld [vmem:[%s0 + $0x8] sm:$0xf]
  %v15 = vld [vmem:[%s0 + $0xc] sm:$0xf]
  %v16 = vld [vmem:[%s0 + $0x10] sm:$0xf]
  %v17 = vld [vmem:[%s0 + $0x14] sm:$0xf]
  %v18 = vld [vmem:[%s0 + $0x18] sm:$0xf]
  %v19 = vld [vmem:[%s0 + $0x1c] sm:$0xf]
  %v20 = vld [vmem:[%s0 + $0x20] sm:$0xf]
  %v21 = vld [vmem:[%s0 + $0x24] sm:$0xf]
  %v22 = vld [vmem:[%s0 + $0x28] sm:$0xf]
  %v23 = vld [vmem:[%s0 + $0x2c] sm:$0xf]
  %v24 = vld [vmem:[%s0 + $0x30] sm:$0xf]
  %v25 = vld [vmem:[%s0 + $0x34] sm:$0xf]
  %v26 = vld [vmem:[%s0 + $0x38] sm:$0xf]
  %v27 = vld [vmem:[%s0 + $0x3c] sm:$0xf]
  %v28 = vld [vmem:[%s0 + $0x40] sm:$0xf]
  %v29 = vld [vmem:[%s0 + $0x44] sm:$0xf]
  %v30 = vld [vmem:[%s0 + $0x48] sm:$0xf]
  %v31 = vld [vmem:[%s0 + $0x4c] sm:$0xf]
  %v32 = vld [vmem:[%s0 + $0x50] sm:$0xf]
  %v33 = vld [vmem:[%s0 + $0x54] sm:$0xf]
  %v34 = vld [vmem:[%s0 + $0x58] sm:$0xf]
  %v35 = vld [vmem:[%s0 + $0x5c] sm:$0xf]
  %v36 = vld [vmem:[%s0 + $0x60] sm:$0xf]
  %v37 = vld [vmem:[%s0 + $0x64] sm:$0xf]
  %v38 = vld [vmem:[%s0 + $0x68] sm:$0xf]
  %v39 = vld [vmem:[%s0 + $0x6c] sm:$0xf]
  %v40 = vld [vmem:[%s0 + $0x70] sm:$0xf]
  %v41 = vld [vmem:[%s0 + $0x74] sm:$0xf]
  %v42 = vld [vmem:[%s0 + $0x78] sm:$0xf]
  %v43 = vld [vmem:[%s0 + $0x7c] sm:$0xf]
  %v44 = vld [vmem:[%s0 + $0x80] sm:$0xf]
  %v45 = vld [vmem:[%s0 + $0x84] sm:$0xf]
  %v46 = vld [vmem:[%s0 + $0x88] sm:$0xf]
  %v47 = vld [vmem:[%s0 + $0x8c] sm:$0xf]
  %v48 = vld [vmem:[%s0 + $0x90] sm:$0xf]
  %v49 = vld [vmem:[%s0 + $0x94] sm:$0xf]
  %v50 = vld [vmem:[%s0 + $0x98] sm:$0xf]
  %v51 = vld [vmem:[%s0 + $0x9c] sm:$0xf]
  %v52 = vld [vmem:[%s0 + $0xa0] sm:$0xf]
  %v53 = vld [vmem:[%s0 + $0xa4] sm:$0xf]
  %v54 = vld [vmem:[%s0 + $0xa8] sm:$0xf]
  %v55 = vld [vmem:[%s0 + $0xac] sm:$0xf]
  %v56 = vld [vmem:[%s0 + $0xb0] sm:$0xf]
  %v57 = vld [vmem:[%s0 + $0xb4] sm:$0xf]
  %v58 = vld [vmem:[%s0 + $0xb8] sm:$0xf]
  %v59 = vld [vmem:[%s0 + $0xbc] sm:$0xf]
  %v60 = vld [vmem:[%s0 + $0xc0] sm:$0xf]
  %v61 = vld [vmem:[%s0 + $0xc4] sm:$0xf]
  %v62 = vld [vmem:[%s0 + $0xc8] sm:$0xf]
  %v63 = vld [vmem:[%s0 + $0xcc] sm:$0xf]
  %v64 = vld [vmem:[%s0 + $0xd0] sm:$0xf]
  %v65 = vld [vmem:[%s0 + $0xd4] sm:$0xf]
  %v66 = vld [vmem:[%s0 + $0xd8] sm:$0xf]
  %v67 = vld [vmem:[%s0 + $0xdc] sm:$0xf]
  %v68 = vld [vmem:[%s0 + $0xe0] sm:$0xf]
  %v69 = vld [vmem:[%s0 + $0xe4] sm:$0xf]
  %v70 = vld [vmem:[%s0 + $0xe8] sm:$0xf]
  %v71 = vld [vmem:[%s0 + $0xec] sm:$0xf]
  %v72 = vld [vmem:[%s0 + $0xf0] sm:$0xf]
  %v73 = vld [vmem:[%s0 + $0xf4] sm:$0xf]
  %v74 = vld [vmem:[%s0 + $0xf8] sm:$0xf]
  %v75 = vld [vmem:[%s0 + $0xfc] sm:$0xf]
  %v76 = vld [vmem:[%s1] sm:$0xf]
  %v77 = vld [vmem:[%s1 + $0x4] sm:$0xf]
  %v78 = vld [vmem:[%s1 + $0x8] sm:$0xf]
  %v79 = vld [vmem:[%s1 + $0xc] sm:$0xf]
  %v80 = vld [vmem:[%s1 + $0x10] sm:$0xf]
  %v81 = vld [vmem:[%s1 + $0x14] sm:$0xf]
  %v82 = vld [vmem:[%s1 + $0x18] sm:$0xf]
  %v83 = vld [vmem:[%s1 + $0x1c] sm:$0xf]
  %v84 = vld [vmem:[%s1 + $0x20] sm:$0xf]
  %v85 = vld [vmem:[%s1 + $0x24] sm:$0xf]
  %v86 = vld [vmem:[%s1 + $0x28] sm:$0xf]
  %v87 = vld [vmem:[%s1 + $0x2c] sm:$0xf]
  %v88 = vld [vmem:[%s1 + $0x30] sm:$0xf]
  %v89 = vld [vmem:[%s1 + $0x34] sm:$0xf]
  %v90 = vld [vmem:[%s1 + $0x38] sm:$0xf]
  %v91 = vld [vmem:[%s1 + $0x3c] sm:$0xf]
  %v156 = vunpack.c.l.b16 %v12
  %v157 = vunpack.c.l.b16 %v13
  %v158 = vunpack.c.l.b16 %v14
  %v159 = vunpack.c.l.b16 %v15
  %v160 = vunpack.c.l.b16 %v16
  %v161 = vunpack.c.l.b16 %v17
  %v162 = vunpack.c.l.b16 %v18
  %v163 = vunpack.c.l.b16 %v19
  %v164 = vunpack.c.l.b16 %v20
  %v165 = vunpack.c.l.b16 %v21
  %v166 = vunpack.c.l.b16 %v22
  %v167 = vunpack.c.l.b16 %v23
  %v168 = vunpack.c.l.b16 %v24
  %v169 = vunpack.c.l.b16 %v25
  %v170 = vunpack.c.l.b16 %v26
  %v171 = vunpack.c.l.b16 %v27
  %v172 = vunpack.c.l.b16 %v28
  %v173 = vunpack.c.l.b16 %v29
  %v174 = vunpack.c.l.b16 %v30
  %v175 = vunpack.c.l.b16 %v31
  %v176 = vunpack.c.l.b16 %v32
  %v177 = vunpack.c.l.b16 %v33
  %v178 = vunpack.c.l.b16 %v34
  %v179 = vunpack.c.l.b16 %v35
  %v180 = vunpack.c.l.b16 %v36
  %v181 = vunpack.c.l.b16 %v37
  %v182 = vunpack.c.l.b16 %v38
  %v183 = vunpack.c.l.b16 %v39
  %v184 = vunpack.c.l.b16 %v40
  %v185 = vunpack.c.l.b16 %v41
  %v186 = vunpack.c.l.b16 %v42
  %v187 = vunpack.c.l.b16 %v43
  %v188 = vunpack.c.l.b16 %v44
  %v189 = vunpack.c.l.b16 %v45
  %v190 = vunpack.c.l.b16 %v46
  %v191 = vunpack.c.l.b16 %v47
  %v192 = vunpack.c.l.b16 %v48
  %v193 = vunpack.c.l.b16 %v49
  %v194 = vunpack.c.l.b16 %v50
  %v195 = vunpack.c.l.b16 %v51
  %v196 = vunpack.c.l.b16 %v52
  %v197 = vunpack.c.l.b16 %v53
  %v198 = vunpack.c.l.b16 %v54
  %v199 = vunpack.c.l.b16 %v55
  %v200 = vunpack.c.l.b16 %v56
  %v201 = vunpack.c.l.b16 %v57
  %v202 = vunpack.c.l.b16 %v58
  %v203 = vunpack.c.l.b16 %v59
  %v204 = vunpack.c.l.b16 %v60
  %v205 = vunpack.c.l.b16 %v61
  %v206 = vunpack.c.l.b16 %v62
  %v207 = vunpack.c.l.b16 %v63
  %v208 = vunpack.c.l.b16 %v64
  %v209 = vunpack.c.l.b16 %v65
  %v210 = vunpack.c.l.b16 %v66
  %v211 = vunpack.c.l.b16 %v67
  %v212 = vunpack.c.l.b16 %v68
  %v213 = vunpack.c.l.b16 %v69
  %v214 = vunpack.c.l.b16 %v70
  %v215 = vunpack.c.l.b16 %v71
  %v216 = vunpack.c.l.b16 %v72
  %v217 = vunpack.c.l.b16 %v73
  %v218 = vunpack.c.l.b16 %v74
  %v219 = vunpack.c.l.b16 %v75
  %v220 = vpack.c.b16 %v157, %v156
  %v221 = vpack.c.b16 %v159, %v158
  %v222 = vpack.c.b16 %v161, %v160
  %v223 = vpack.c.b16 %v163, %v162
  %v224 = vpack.c.b16 %v165, %v164
  %v225 = vpack.c.b16 %v167, %v166
  %v226 = vpack.c.b16 %v169, %v168
  %v227 = vpack.c.b16 %v171, %v170
  %v228 = vpack.c.b16 %v173, %v172
  %v229 = vpack.c.b16 %v175, %v174
  %v230 = vpack.c.b16 %v177, %v176
  %v231 = vpack.c.b16 %v179, %v178
  %v232 = vpack.c.b16 %v181, %v180
  %v233 = vpack.c.b16 %v183, %v182
  %v234 = vpack.c.b16 %v185, %v184
  %v235 = vpack.c.b16 %v187, %v186
  %v236 = vpack.c.b16 %v189, %v188
  %v237 = vpack.c.b16 %v191, %v190
  %v238 = vpack.c.b16 %v193, %v192
  %v239 = vpack.c.b16 %v195, %v194
  %v240 = vpack.c.b16 %v197, %v196
  %v241 = vpack.c.b16 %v199, %v198
  %v242 = vpack.c.b16 %v201, %v200
  %v243 = vpack.c.b16 %v203, %v202
  %v244 = vpack.c.b16 %v205, %v204
  %v245 = vpack.c.b16 %v207, %v206
  %v246 = vpack.c.b16 %v209, %v208
  %v247 = vpack.c.b16 %v211, %v210
  %v248 = vpack.c.b16 %v213, %v212
  %v249 = vpack.c.b16 %v215, %v214
  %v250 = vpack.c.b16 %v217, %v216
  %v251 = vpack.c.b16 %v219, %v218
  %v300 = vunpack.c.l.b16 %v76
  %v301 = vunpack.c.l.b16 %v77
  %v302 = vunpack.c.l.b16 %v78
  %v303 = vunpack.c.l.b16 %v79
  %v304 = vunpack.c.l.b16 %v80
  %v305 = vunpack.c.l.b16 %v81
  %v306 = vunpack.c.l.b16 %v82
  %v307 = vunpack.c.l.b16 %v83
  %v308 = vunpack.c.l.b16 %v84
  %v309 = vunpack.c.l.b16 %v85
  %v310 = vunpack.c.l.b16 %v86
  %v311 = vunpack.c.l.b16 %v87
  %v312 = vunpack.c.l.b16 %v88
  %v313 = vunpack.c.l.b16 %v89
  %v314 = vunpack.c.l.b16 %v90
  %v315 = vunpack.c.l.b16 %v91
  %v316 = vpack.c.b16 %v301, %v300
  %v317 = vpack.c.b16 %v303, %v302
  %v318 = vpack.c.b16 %v305, %v304
  %v319 = vpack.c.b16 %v307, %v306
  %v320 = vpack.c.b16 %v309, %v308
  %v321 = vpack.c.b16 %v311, %v310
  %v322 = vpack.c.b16 %v313, %v312
  %v323 = vpack.c.b16 %v315, %v314
  %332 = vmatprep.subr.bf16.mxu0 0
  %333 = vmatpush1.bf16.msra.mxu0 %v323
  %334 = vmatprep.subr.bf16.mxu0 0
  %335 = vmatpush1.bf16.msra.mxu0 %v322
  %336 = vmatprep.subr.bf16.mxu0 0
  %337 = vmatpush1.bf16.msra.mxu0 %v321
  %338 = vmatprep.subr.bf16.mxu0 0
  %339 = vmatpush1.bf16.msra.mxu0 %v320
  %340 = vmatprep.subr.bf16.mxu0 0
  %341 = vmatpush1.bf16.msra.mxu0 %v319
  %342 = vmatprep.subr.bf16.mxu0 0
  %343 = vmatpush1.bf16.msra.mxu0 %v318
  %344 = vmatprep.subr.bf16.mxu0 0
  %345 = vmatpush1.bf16.msra.mxu0 %v317
  %346 = vmatprep.subr.bf16.mxu0 0
  %347 = vmatpush1.bf16.msra.mxu0 %v316
  %348 = vmatprep.subr.bf16.mxu0 0
  %349 = vmatpush2.bf16.msra.mxu0 0
  %350 = vmatprep.subr.bf16.mxu0 0
  %351 = vmatpush2.bf16.msra.mxu0 0
  %352 = vmatprep.subr.bf16.mxu0 0
  %353 = vmatpush2.bf16.msra.mxu0 0
  %354 = vmatprep.subr.bf16.mxu0 0
  %355 = vmatpush2.bf16.msra.mxu0 0
  %356 = vmatprep.subr.bf16.mxu0 0
  %357 = vmatpush2.bf16.msra.mxu0 0
  %358 = vmatprep.subr.bf16.mxu0 0
  %359 = vmatpush2.bf16.msra.mxu0 0
  %360 = vmatprep.subr.bf16.mxu0 0
  %361 = vmatpush2.bf16.msra.mxu0 0
  %362 = vmatprep.subr.bf16.mxu0 0
  %363 = vmatpush2.bf16.msra.mxu0 0
  %364 = vmatprep.mubr.bf16.mxu0 0
  %365 = vmatmul.mubr.bf16.gmra.mxu0 %v220
  %v366 = vpop.f32.mrf.mxu0
  %v367 = vadd.f32 0.0, %v366
  %v368 = vpop.f32.mrf.mxu0
  %v369 = vpop.f32.mrf.mxu0
  %v370 = vadd.f32 0.0, %v369
  %v371 = vpop.f32.mrf.mxu0
  %372 = vmatprep.mubr.bf16.mxu0 0
  %373 = vmatmul.mubr.bf16.gmra.mxu0 %v221
  %v374 = vpop.f32.mrf.mxu0
  %v375 = vadd.f32 0.0, %v374
  %v376 = vpop.f32.mrf.mxu0
  %v377 = vpop.f32.mrf.mxu0
  %v378 = vadd.f32 0.0, %v377
  %v379 = vpop.f32.mrf.mxu0
  %380 = vmatprep.mubr.bf16.mxu0 0
  %381 = vmatmul.mubr.bf16.gmra.mxu0 %v222
  %v382 = vpop.f32.mrf.mxu0
  %v383 = vadd.f32 0.0, %v382
  %v384 = vpop.f32.mrf.mxu0
  %v385 = vpop.f32.mrf.mxu0
  %v386 = vadd.f32 0.0, %v385
  %v387 = vpop.f32.mrf.mxu0
  %388 = vmatprep.mubr.bf16.mxu0 0
  %389 = vmatmul.mubr.bf16.gmra.mxu0 %v223
  %v390 = vpop.f32.mrf.mxu0
  %v391 = vadd.f32 0.0, %v390
  %v392 = vpop.f32.mrf.mxu0
  %v393 = vpop.f32.mrf.mxu0
  %v394 = vadd.f32 0.0, %v393
  %v395 = vpop.f32.mrf.mxu0
  %396 = vmatprep.mubr.bf16.mxu0 0
  %397 = vmatmul.mubr.bf16.gmra.mxu0 %v224
  %v398 = vpop.f32.mrf.mxu0
  %v399 = vadd.f32 0.0, %v398
  %v400 = vpop.f32.mrf.mxu0
  %v401 = vpop.f32.mrf.mxu0
  %v402 = vadd.f32 0.0, %v401
  %v403 = vpop.f32.mrf.mxu0
  %404 = vmatprep.mubr.bf16.mxu0 0
  %405 = vmatmul.mubr.bf16.gmra.mxu0 %v225
  %v406 = vpop.f32.mrf.mxu0
  %v407 = vadd.f32 0.0, %v406
  %v408 = vpop.f32.mrf.mxu0
  %v409 = vpop.f32.mrf.mxu0
  %v410 = vadd.f32 0.0, %v409
  %v411 = vpop.f32.mrf.mxu0
  %412 = vmatprep.mubr.bf16.mxu0 0
  %413 = vmatmul.mubr.bf16.gmra.mxu0 %v226
  %v414 = vpop.f32.mrf.mxu0
  %v415 = vadd.f32 0.0, %v414
  %v416 = vpop.f32.mrf.mxu0
  %v417 = vpop.f32.mrf.mxu0
  %v418 = vadd.f32 0.0, %v417
  %v419 = vpop.f32.mrf.mxu0
  %420 = vmatprep.mubr.bf16.mxu0 0
  %421 = vmatmul.mubr.bf16.gmra.mxu0 %v227
  %v422 = vpop.f32.mrf.mxu0
  %v423 = vadd.f32 0.0, %v422
  %v424 = vpop.f32.mrf.mxu0
  %v425 = vpop.f32.mrf.mxu0
  %v426 = vadd.f32 0.0, %v425
  %v427 = vpop.f32.mrf.mxu0
  %428 = vmatprep.mubr.bf16.mxu0 0
  %429 = vmatmul.mubr.bf16.gmra.mxu0 %v228
  %v430 = vpop.f32.mrf.mxu0
  %v431 = vadd.f32 0.0, %v430
  %v432 = vpop.f32.mrf.mxu0
  %v433 = vpop.f32.mrf.mxu0
  %v434 = vadd.f32 0.0, %v433
  %v435 = vpop.f32.mrf.mxu0
  %436 = vmatprep.mubr.bf16.mxu0 0
  %437 = vmatmul.mubr.bf16.gmra.mxu0 %v229
  %v438 = vpop.f32.mrf.mxu0
  %v439 = vadd.f32 0.0, %v438
  %v440 = vpop.f32.mrf.mxu0
  %v441 = vpop.f32.mrf.mxu0
  %v442 = vadd.f32 0.0, %v441
  %v443 = vpop.f32.mrf.mxu0
  %444 = vmatprep.mubr.bf16.mxu0 0
  %445 = vmatmul.mubr.bf16.gmra.mxu0 %v230
  %v446 = vpop.f32.mrf.mxu0
  %v447 = vadd.f32 0.0, %v446
  %v448 = vpop.f32.mrf.mxu0
  %v449 = vpop.f32.mrf.mxu0
  %v450 = vadd.f32 0.0, %v449
  %v451 = vpop.f32.mrf.mxu0
  %452 = vmatprep.mubr.bf16.mxu0 0
  %453 = vmatmul.mubr.bf16.gmra.mxu0 %v231
  %v454 = vpop.f32.mrf.mxu0
  %v455 = vadd.f32 0.0, %v454
  %v456 = vpop.f32.mrf.mxu0
  %v457 = vpop.f32.mrf.mxu0
  %v458 = vadd.f32 0.0, %v457
  %v459 = vpop.f32.mrf.mxu0
  %460 = vmatprep.mubr.bf16.mxu0 0
  %461 = vmatmul.mubr.bf16.gmra.mxu0 %v232
  %v462 = vpop.f32.mrf.mxu0
  %v463 = vadd.f32 0.0, %v462
  %v464 = vpop.f32.mrf.mxu0
  %v465 = vpop.f32.mrf.mxu0
  %v466 = vadd.f32 0.0, %v465
  %v467 = vpop.f32.mrf.mxu0
  %468 = vmatprep.mubr.bf16.mxu0 0
  %469 = vmatmul.mubr.bf16.gmra.mxu0 %v233
  %v470 = vpop.f32.mrf.mxu0
  %v471 = vadd.f32 0.0, %v470
  %v472 = vpop.f32.mrf.mxu0
  %v473 = vpop.f32.mrf.mxu0
  %v474 = vadd.f32 0.0, %v473
  %v475 = vpop.f32.mrf.mxu0
  %476 = vmatprep.mubr.bf16.mxu0 0
  %477 = vmatmul.mubr.bf16.gmra.mxu0 %v234
  %v478 = vpop.f32.mrf.mxu0
  %v479 = vadd.f32 0.0, %v478
  %v480 = vpop.f32.mrf.mxu0
  %v481 = vpop.f32.mrf.mxu0
  %v482 = vadd.f32 0.0, %v481
  %v483 = vpop.f32.mrf.mxu0
  %484 = vmatprep.mubr.bf16.mxu0 0
  %485 = vmatmul.mubr.bf16.gmra.mxu0 %v235
  %v486 = vpop.f32.mrf.mxu0
  %v487 = vadd.f32 0.0, %v486
  %v488 = vpop.f32.mrf.mxu0
  %v489 = vpop.f32.mrf.mxu0
  %v490 = vadd.f32 0.0, %v489
  %v491 = vpop.f32.mrf.mxu0
  %492 = vmatprep.mubr.bf16.mxu0 0
  %493 = vmatmul.mubr.bf16.gmra.mxu0 %v236
  %v494 = vpop.f32.mrf.mxu0
  %v495 = vadd.f32 0.0, %v494
  %v496 = vpop.f32.mrf.mxu0
  %v497 = vpop.f32.mrf.mxu0
  %v498 = vadd.f32 0.0, %v497
  %v499 = vpop.f32.mrf.mxu0
  %500 = vmatprep.mubr.bf16.mxu0 0
  %501 = vmatmul.mubr.bf16.gmra.mxu0 %v237
  %v502 = vpop.f32.mrf.mxu0
  %v503 = vadd.f32 0.0, %v502
  %v504 = vpop.f32.mrf.mxu0
  %v505 = vpop.f32.mrf.mxu0
  %v506 = vadd.f32 0.0, %v505
  %v507 = vpop.f32.mrf.mxu0
  %508 = vmatprep.mubr.bf16.mxu0 0
  %509 = vmatmul.mubr.bf16.gmra.mxu0 %v238
  %v510 = vpop.f32.mrf.mxu0
  %v511 = vadd.f32 0.0, %v510
  %v512 = vpop.f32.mrf.mxu0
  %v513 = vpop.f32.mrf.mxu0
  %v514 = vadd.f32 0.0, %v513
  %v515 = vpop.f32.mrf.mxu0
  %516 = vmatprep.mubr.bf16.mxu0 0
  %517 = vmatmul.mubr.bf16.gmra.mxu0 %v239
  %v518 = vpop.f32.mrf.mxu0
  %v519 = vadd.f32 0.0, %v518
  %v520 = vpop.f32.mrf.mxu0
  %v521 = vpop.f32.mrf.mxu0
  %v522 = vadd.f32 0.0, %v521
  %v523 = vpop.f32.mrf.mxu0
  %524 = vmatprep.mubr.bf16.mxu0 0
  %525 = vmatmul.mubr.bf16.gmra.mxu0 %v240
  %v526 = vpop.f32.mrf.mxu0
  %v527 = vadd.f32 0.0, %v526
  %v528 = vpop.f32.mrf.mxu0
  %v529 = vpop.f32.mrf.mxu0
  %v530 = vadd.f32 0.0, %v529
  %v531 = vpop.f32.mrf.mxu0
  %532 = vmatprep.mubr.bf16.mxu0 0
  %533 = vmatmul.mubr.bf16.gmra.mxu0 %v241
  %v534 = vpop.f32.mrf.mxu0
  %v535 = vadd.f32 0.0, %v534
  %v536 = vpop.f32.mrf.mxu0
  %v537 = vpop.f32.mrf.mxu0
  %v538 = vadd.f32 0.0, %v537
  %v539 = vpop.f32.mrf.mxu0
  %540 = vmatprep.mubr.bf16.mxu0 0
  %541 = vmatmul.mubr.bf16.gmra.mxu0 %v242
  %v542 = vpop.f32.mrf.mxu0
  %v543 = vadd.f32 0.0, %v542
  %v544 = vpop.f32.mrf.mxu0
  %v545 = vpop.f32.mrf.mxu0
  %v546 = vadd.f32 0.0, %v545
  %v547 = vpop.f32.mrf.mxu0
  %548 = vmatprep.mubr.bf16.mxu0 0
  %549 = vmatmul.mubr.bf16.gmra.mxu0 %v243
  %v550 = vpop.f32.mrf.mxu0
  %v551 = vadd.f32 0.0, %v550
  %v552 = vpop.f32.mrf.mxu0
  %v553 = vpop.f32.mrf.mxu0
  %v554 = vadd.f32 0.0, %v553
  %v555 = vpop.f32.mrf.mxu0
  %556 = vmatprep.mubr.bf16.mxu0 0
  %557 = vmatmul.mubr.bf16.gmra.mxu0 %v244
  %v558 = vpop.f32.mrf.mxu0
  %v559 = vadd.f32 0.0, %v558
  %v560 = vpop.f32.mrf.mxu0
  %v561 = vpop.f32.mrf.mxu0
  %v562 = vadd.f32 0.0, %v561
  %v563 = vpop.f32.mrf.mxu0
  %564 = vmatprep.mubr.bf16.mxu0 0
  %565 = vmatmul.mubr.bf16.gmra.mxu0 %v245
  %v566 = vpop.f32.mrf.mxu0
  %v567 = vadd.f32 0.0, %v566
  %v568 = vpop.f32.mrf.mxu0
  %v569 = vpop.f32.mrf.mxu0
  %v570 = vadd.f32 0.0, %v569
  %v571 = vpop.f32.mrf.mxu0
  %572 = vmatprep.mubr.bf16.mxu0 0
  %573 = vmatmul.mubr.bf16.gmra.mxu0 %v246
  %v574 = vpop.f32.mrf.mxu0
  %v575 = vadd.f32 0.0, %v574
  %v576 = vpop.f32.mrf.mxu0
  %v577 = vpop.f32.mrf.mxu0
  %v578 = vadd.f32 0.0, %v577
  %v579 = vpop.f32.mrf.mxu0
  %580 = vmatprep.mubr.bf16.mxu0 0
  %581 = vmatmul.mubr.bf16.gmra.mxu0 %v247
  %v582 = vpop.f32.mrf.mxu0
  %v583 = vadd.f32 0.0, %v582
  %v584 = vpop.f32.mrf.mxu0
  %v585 = vpop.f32.mrf.mxu0
  %v586 = vadd.f32 0.0, %v585
  %v587 = vpop.f32.mrf.mxu0
  %588 = vmatprep.mubr.bf16.mxu0 0
  %589 = vmatmul.mubr.bf16.gmra.mxu0 %v248
  %v590 = vpop.f32.mrf.mxu0
  %v591 = vadd.f32 0.0, %v590
  %v592 = vpop.f32.mrf.mxu0
  %v593 = vpop.f32.mrf.mxu0
  %v594 = vadd.f32 0.0, %v593
  %v595 = vpop.f32.mrf.mxu0
  %596 = vmatprep.mubr.bf16.mxu0 0
  %597 = vmatmul.mubr.bf16.gmra.mxu0 %v249
  %v598 = vpop.f32.mrf.mxu0
  %v599 = vadd.f32 0.0, %v598
  %v600 = vpop.f32.mrf.mxu0
  %v601 = vpop.f32.mrf.mxu0
  %v602 = vadd.f32 0.0, %v601
  %v603 = vpop.f32.mrf.mxu0
  %604 = vmatprep.mubr.bf16.mxu0 0
  %605 = vmatmul.mubr.bf16.gmra.mxu0 %v250
  %v606 = vpop.f32.mrf.mxu0
  %v607 = vadd.f32 0.0, %v606
  %v608 = vpop.f32.mrf.mxu0
  %v609 = vpop.f32.mrf.mxu0
  %v610 = vadd.f32 0.0, %v609
  %v611 = vpop.f32.mrf.mxu0
  %612 = vmatprep.mubr.bf16.mxu0 0
  %613 = vmatmul.mubr.bf16.gmra.mxu0 %v251
  %v614 = vpop.f32.mrf.mxu0
  %v615 = vadd.f32 0.0, %v614
  %v616 = vpop.f32.mrf.mxu0
  %v617 = vpop.f32.mrf.mxu0
  %v618 = vadd.f32 0.0, %v617
  %v619 = vpop.f32.mrf.mxu0
  %620 = vdwg.mxu0
  %vm621 = vcmp.ge.f32.partialorder %v367, 0.0
  %vm622 = vcmp.ge.f32.partialorder %v370, 0.0
  %vm623 = vcmp.ge.f32.partialorder %v375, 0.0
  %vm624 = vcmp.ge.f32.partialorder %v378, 0.0
  %vm625 = vcmp.ge.f32.partialorder %v383, 0.0
  %vm626 = vcmp.ge.f32.partialorder %v386, 0.0
  %vm627 = vcmp.ge.f32.partialorder %v391, 0.0
  %vm628 = vcmp.ge.f32.partialorder %v394, 0.0
  %vm629 = vcmp.ge.f32.partialorder %v399, 0.0
  %vm630 = vcmp.ge.f32.partialorder %v402, 0.0
  %vm631 = vcmp.ge.f32.partialorder %v407, 0.0
  %vm632 = vcmp.ge.f32.partialorder %v410, 0.0
  %vm633 = vcmp.ge.f32.partialorder %v415, 0.0
  %vm634 = vcmp.ge.f32.partialorder %v418, 0.0
  %vm635 = vcmp.ge.f32.partialorder %v423, 0.0
  %vm636 = vcmp.ge.f32.partialorder %v426, 0.0
  %vm637 = vcmp.ge.f32.partialorder %v431, 0.0
  %vm638 = vcmp.ge.f32.partialorder %v434, 0.0
  %vm639 = vcmp.ge.f32.partialorder %v439, 0.0
  %vm640 = vcmp.ge.f32.partialorder %v442, 0.0
  %vm641 = vcmp.ge.f32.partialorder %v447, 0.0
  %vm642 = vcmp.ge.f32.partialorder %v450, 0.0
  %vm643 = vcmp.ge.f32.partialorder %v455, 0.0
  %vm644 = vcmp.ge.f32.partialorder %v458, 0.0
  %vm645 = vcmp.ge.f32.partialorder %v463, 0.0
  %vm646 = vcmp.ge.f32.partialorder %v466, 0.0
  %vm647 = vcmp.ge.f32.partialorder %v471, 0.0
  %vm648 = vcmp.ge.f32.partialorder %v474, 0.0
  %vm649 = vcmp.ge.f32.partialorder %v479, 0.0
  %vm650 = vcmp.ge.f32.partialorder %v482, 0.0
  %vm651 = vcmp.ge.f32.partialorder %v487, 0.0
  %vm652 = vcmp.ge.f32.partialorder %v490, 0.0
  %vm653 = vcmp.ge.f32.partialorder %v495, 0.0
  %vm654 = vcmp.ge.f32.partialorder %v498, 0.0
  %vm655 = vcmp.ge.f32.partialorder %v503, 0.0
  %vm656 = vcmp.ge.f32.partialorder %v506, 0.0
  %vm657 = vcmp.ge.f32.partialorder %v511, 0.0
  %vm658 = vcmp.ge.f32.partialorder %v514, 0.0
  %vm659 = vcmp.ge.f32.partialorder %v519, 0.0
  %vm660 = vcmp.ge.f32.partialorder %v522, 0.0
  %vm661 = vcmp.ge.f32.partialorder %v527, 0.0
  %vm662 = vcmp.ge.f32.partialorder %v530, 0.0
  %vm663 = vcmp.ge.f32.partialorder %v535, 0.0
  %vm664 = vcmp.ge.f32.partialorder %v538, 0.0
  %vm665 = vcmp.ge.f32.partialorder %v543, 0.0
  %vm666 = vcmp.ge.f32.partialorder %v546, 0.0
  %vm667 = vcmp.ge.f32.partialorder %v551, 0.0
  %vm668 = vcmp.ge.f32.partialorder %v554, 0.0
  %vm669 = vcmp.ge.f32.partialorder %v559, 0.0
  %vm670 = vcmp.ge.f32.partialorder %v562, 0.0
  %vm671 = vcmp.ge.f32.partialorder %v567, 0.0
  %vm672 = vcmp.ge.f32.partialorder %v570, 0.0
  %vm673 = vcmp.ge.f32.partialorder %v575, 0.0
  %vm674 = vcmp.ge.f32.partialorder %v578, 0.0
  %vm675 = vcmp.ge.f32.partialorder %v583, 0.0
  %vm676 = vcmp.ge.f32.partialorder %v586, 0.0
  %vm677 = vcmp.ge.f32.partialorder %v591, 0.0
  %vm678 = vcmp.ge.f32.partialorder %v594, 0.0
  %vm679 = vcmp.ge.f32.partialorder %v599, 0.0
  %vm680 = vcmp.ge.f32.partialorder %v602, 0.0
  %vm681 = vcmp.ge.f32.partialorder %v607, 0.0
  %vm682 = vcmp.ge.f32.partialorder %v610, 0.0
  %vm683 = vcmp.ge.f32.partialorder %v615, 0.0
  %vm684 = vcmp.ge.f32.partialorder %v618, 0.0
  %v685 = vmul.f32 %v367, 0.2
  %v686 = vmul.f32 %v370, 0.2
  %v687 = vmul.f32 %v375, 0.2
  %v688 = vmul.f32 %v378, 0.2
  %v689 = vmul.f32 %v383, 0.2
  %v690 = vmul.f32 %v386, 0.2
  %v691 = vmul.f32 %v391, 0.2
  %v692 = vmul.f32 %v394, 0.2
  %v693 = vmul.f32 %v399, 0.2
  %v694 = vmul.f32 %v402, 0.2
  %v695 = vmul.f32 %v407, 0.2
  %v696 = vmul.f32 %v410, 0.2
  %v697 = vmul.f32 %v415, 0.2
  %v698 = vmul.f32 %v418, 0.2
  %v699 = vmul.f32 %v423, 0.2
  %v700 = vmul.f32 %v426, 0.2
  %v701 = vmul.f32 %v431, 0.2
  %v702 = vmul.f32 %v434, 0.2
  %v703 = vmul.f32 %v439, 0.2
  %v704 = vmul.f32 %v442, 0.2
  %v705 = vmul.f32 %v447, 0.2
  %v706 = vmul.f32 %v450, 0.2
  %v707 = vmul.f32 %v455, 0.2
  %v708 = vmul.f32 %v458, 0.2
  %v709 = vmul.f32 %v463, 0.2
  %v710 = vmul.f32 %v466, 0.2
  %v711 = vmul.f32 %v471, 0.2
  %v712 = vmul.f32 %v474, 0.2
  %v713 = vmul.f32 %v479, 0.2
  %v714 = vmul.f32 %v482, 0.2
  %v715 = vmul.f32 %v487, 0.2
  %v716 = vmul.f32 %v490, 0.2
  %v717 = vmul.f32 %v495, 0.2
  %v718 = vmul.f32 %v498, 0.2
  %v719 = vmul.f32 %v503, 0.2
  %v720 = vmul.f32 %v506, 0.2
  %v721 = vmul.f32 %v511, 0.2
  %v722 = vmul.f32 %v514, 0.2
  %v723 = vmul.f32 %v519, 0.2
  %v724 = vmul.f32 %v522, 0.2
  %v725 = vmul.f32 %v527, 0.2
  %v726 = vmul.f32 %v530, 0.2
  %v727 = vmul.f32 %v535, 0.2
  %v728 = vmul.f32 %v538, 0.2
  %v729 = vmul.f32 %v543, 0.2
  %v730 = vmul.f32 %v546, 0.2
  %v731 = vmul.f32 %v551, 0.2
  %v732 = vmul.f32 %v554, 0.2
  %v733 = vmul.f32 %v559, 0.2
  %v734 = vmul.f32 %v562, 0.2
  %v735 = vmul.f32 %v567, 0.2
  %v736 = vmul.f32 %v570, 0.2
  %v737 = vmul.f32 %v575, 0.2
  %v738 = vmul.f32 %v578, 0.2
  %v739 = vmul.f32 %v583, 0.2
  %v740 = vmul.f32 %v586, 0.2
  %v741 = vmul.f32 %v591, 0.2
  %v742 = vmul.f32 %v594, 0.2
  %v743 = vmul.f32 %v599, 0.2
  %v744 = vmul.f32 %v602, 0.2
  %v745 = vmul.f32 %v607, 0.2
  %v746 = vmul.f32 %v610, 0.2
  %v747 = vmul.f32 %v615, 0.2
  %v748 = vmul.f32 %v618, 0.2
  %v749 = vsel %vm621, %v367, %v685
  %v750 = vsel %vm622, %v370, %v686
  %v751 = vsel %vm623, %v375, %v687
  %v752 = vsel %vm624, %v378, %v688
  %v753 = vsel %vm625, %v383, %v689
  %v754 = vsel %vm626, %v386, %v690
  %v755 = vsel %vm627, %v391, %v691
  %v756 = vsel %vm628, %v394, %v692
  %v757 = vsel %vm629, %v399, %v693
  %v758 = vsel %vm630, %v402, %v694
  %v759 = vsel %vm631, %v407, %v695
  %v760 = vsel %vm632, %v410, %v696
  %v761 = vsel %vm633, %v415, %v697
  %v762 = vsel %vm634, %v418, %v698
  %v763 = vsel %vm635, %v423, %v699
  %v764 = vsel %vm636, %v426, %v700
  %v765 = vsel %vm637, %v431, %v701
  %v766 = vsel %vm638, %v434, %v702
  %v767 = vsel %vm639, %v439, %v703
  %v768 = vsel %vm640, %v442, %v704
  %v769 = vsel %vm641, %v447, %v705
  %v770 = vsel %vm642, %v450, %v706
  %v771 = vsel %vm643, %v455, %v707
  %v772 = vsel %vm644, %v458, %v708
  %v773 = vsel %vm645, %v463, %v709
  %v774 = vsel %vm646, %v466, %v710
  %v775 = vsel %vm647, %v471, %v711
  %v776 = vsel %vm648, %v474, %v712
  %v777 = vsel %vm649, %v479, %v713
  %v778 = vsel %vm650, %v482, %v714
  %v779 = vsel %vm651, %v487, %v715
  %v780 = vsel %vm652, %v490, %v716
  %v781 = vsel %vm653, %v495, %v717
  %v782 = vsel %vm654, %v498, %v718
  %v783 = vsel %vm655, %v503, %v719
  %v784 = vsel %vm656, %v506, %v720
  %v785 = vsel %vm657, %v511, %v721
  %v786 = vsel %vm658, %v514, %v722
  %v787 = vsel %vm659, %v519, %v723
  %v788 = vsel %vm660, %v522, %v724
  %v789 = vsel %vm661, %v527, %v725
  %v790 = vsel %vm662, %v530, %v726
  %v791 = vsel %vm663, %v535, %v727
  %v792 = vsel %vm664, %v538, %v728
  %v793 = vsel %vm665, %v543, %v729
  %v794 = vsel %vm666, %v546, %v730
  %v795 = vsel %vm667, %v551, %v731
  %v796 = vsel %vm668, %v554, %v732
  %v797 = vsel %vm669, %v559, %v733
  %v798 = vsel %vm670, %v562, %v734
  %v799 = vsel %vm671, %v567, %v735
  %v800 = vsel %vm672, %v570, %v736
  %v801 = vsel %vm673, %v575, %v737
  %v802 = vsel %vm674, %v578, %v738
  %v803 = vsel %vm675, %v583, %v739
  %v804 = vsel %vm676, %v586, %v740
  %v805 = vsel %vm677, %v591, %v741
  %v806 = vsel %vm678, %v594, %v742
  %v807 = vsel %vm679, %v599, %v743
  %v808 = vsel %vm680, %v602, %v744
  %v809 = vsel %vm681, %v607, %v745
  %v810 = vsel %vm682, %v610, %v746
  %v811 = vsel %vm683, %v615, %v747
  %v812 = vsel %vm684, %v618, %v748
  %v813 = vpack.c.bf16 %v750, %v749
  %v814 = vpack.c.bf16 %v752, %v751
  %v815 = vpack.c.bf16 %v754, %v753
  %v816 = vpack.c.bf16 %v756, %v755
  %v817 = vpack.c.bf16 %v758, %v757
  %v818 = vpack.c.bf16 %v760, %v759
  %v819 = vpack.c.bf16 %v762, %v761
  %v820 = vpack.c.bf16 %v764, %v763
  %v821 = vpack.c.bf16 %v766, %v765
  %v822 = vpack.c.bf16 %v768, %v767
  %v823 = vpack.c.bf16 %v770, %v769
  %v824 = vpack.c.bf16 %v772, %v771
  %v825 = vpack.c.bf16 %v774, %v773
  %v826 = vpack.c.bf16 %v776, %v775
  %v827 = vpack.c.bf16 %v778, %v777
  %v828 = vpack.c.bf16 %v780, %v779
  %v829 = vpack.c.bf16 %v782, %v781
  %v830 = vpack.c.bf16 %v784, %v783
  %v831 = vpack.c.bf16 %v786, %v785
  %v832 = vpack.c.bf16 %v788, %v787
  %v833 = vpack.c.bf16 %v790, %v789
  %v834 = vpack.c.bf16 %v792, %v791
  %v835 = vpack.c.bf16 %v794, %v793
  %v836 = vpack.c.bf16 %v796, %v795
  %v837 = vpack.c.bf16 %v798, %v797
  %v838 = vpack.c.bf16 %v800, %v799
  %v839 = vpack.c.bf16 %v802, %v801
  %v840 = vpack.c.bf16 %v804, %v803
  %v841 = vpack.c.bf16 %v806, %v805
  %v842 = vpack.c.bf16 %v808, %v807
  %v843 = vpack.c.bf16 %v810, %v809
  %v844 = vpack.c.bf16 %v812, %v811
  %v877 = vunpack.c.l.b16 %v813
  %v878 = vunpack.c.h.b16 %v813
  %v879 = vunpack.c.l.b16 %v814
  %v880 = vunpack.c.h.b16 %v814
  %v881 = vunpack.c.l.b16 %v815
  %v882 = vunpack.c.h.b16 %v815
  %v883 = vunpack.c.l.b16 %v816
  %v884 = vunpack.c.h.b16 %v816
  %v885 = vunpack.c.l.b16 %v817
  %v886 = vunpack.c.h.b16 %v817
  %v887 = vunpack.c.l.b16 %v818
  %v888 = vunpack.c.h.b16 %v818
  %v889 = vunpack.c.l.b16 %v819
  %v890 = vunpack.c.h.b16 %v819
  %v891 = vunpack.c.l.b16 %v820
  %v892 = vunpack.c.h.b16 %v820
  %v893 = vunpack.c.l.b16 %v821
  %v894 = vunpack.c.h.b16 %v821
  %v895 = vunpack.c.l.b16 %v822
  %v896 = vunpack.c.h.b16 %v822
  %v897 = vunpack.c.l.b16 %v823
  %v898 = vunpack.c.h.b16 %v823
  %v899 = vunpack.c.l.b16 %v824
  %v900 = vunpack.c.h.b16 %v824
  %v901 = vunpack.c.l.b16 %v825
  %v902 = vunpack.c.h.b16 %v825
  %v903 = vunpack.c.l.b16 %v826
  %v904 = vunpack.c.h.b16 %v826
  %v905 = vunpack.c.l.b16 %v827
  %v906 = vunpack.c.h.b16 %v827
  %v907 = vunpack.c.l.b16 %v828
  %v908 = vunpack.c.h.b16 %v828
  %v909 = vunpack.c.l.b16 %v829
  %v910 = vunpack.c.h.b16 %v829
  %v911 = vunpack.c.l.b16 %v830
  %v912 = vunpack.c.h.b16 %v830
  %v913 = vunpack.c.l.b16 %v831
  %v914 = vunpack.c.h.b16 %v831
  %v915 = vunpack.c.l.b16 %v832
  %v916 = vunpack.c.h.b16 %v832
  %v917 = vunpack.c.l.b16 %v833
  %v918 = vunpack.c.h.b16 %v833
  %v919 = vunpack.c.l.b16 %v834
  %v920 = vunpack.c.h.b16 %v834
  %v921 = vunpack.c.l.b16 %v835
  %v922 = vunpack.c.h.b16 %v835
  %v923 = vunpack.c.l.b16 %v836
  %v924 = vunpack.c.h.b16 %v836
  %v925 = vunpack.c.l.b16 %v837
  %v926 = vunpack.c.h.b16 %v837
  %v927 = vunpack.c.l.b16 %v838
  %v928 = vunpack.c.h.b16 %v838
  %v929 = vunpack.c.l.b16 %v839
  %v930 = vunpack.c.h.b16 %v839
  %v931 = vunpack.c.l.b16 %v840
  %v932 = vunpack.c.h.b16 %v840
  %v933 = vunpack.c.l.b16 %v841
  %v934 = vunpack.c.h.b16 %v841
  %v935 = vunpack.c.l.b16 %v842
  %v936 = vunpack.c.h.b16 %v842
  %v937 = vunpack.c.l.b16 %v843
  %v938 = vunpack.c.h.b16 %v843
  %v939 = vunpack.c.l.b16 %v844
  %v940 = vunpack.c.h.b16 %v844
  %v941 = vpack.c.b16 %v877, %v877
  %v942 = vpack.c.b16 %v878, %v878
  %v943 = vpack.c.b16 %v879, %v879
  %v944 = vpack.c.b16 %v880, %v880
  %v945 = vpack.c.b16 %v881, %v881
  %v946 = vpack.c.b16 %v882, %v882
  %v947 = vpack.c.b16 %v883, %v883
  %v948 = vpack.c.b16 %v884, %v884
  %v949 = vpack.c.b16 %v885, %v885
  %v950 = vpack.c.b16 %v886, %v886
  %v951 = vpack.c.b16 %v887, %v887
  %v952 = vpack.c.b16 %v888, %v888
  %v953 = vpack.c.b16 %v889, %v889
  %v954 = vpack.c.b16 %v890, %v890
  %v955 = vpack.c.b16 %v891, %v891
  %v956 = vpack.c.b16 %v892, %v892
  %v957 = vpack.c.b16 %v893, %v893
  %v958 = vpack.c.b16 %v894, %v894
  %v959 = vpack.c.b16 %v895, %v895
  %v960 = vpack.c.b16 %v896, %v896
  %v961 = vpack.c.b16 %v897, %v897
  %v962 = vpack.c.b16 %v898, %v898
  %v963 = vpack.c.b16 %v899, %v899
  %v964 = vpack.c.b16 %v900, %v900
  %v965 = vpack.c.b16 %v901, %v901
  %v966 = vpack.c.b16 %v902, %v902
  %v967 = vpack.c.b16 %v903, %v903
  %v968 = vpack.c.b16 %v904, %v904
  %v969 = vpack.c.b16 %v905, %v905
  %v970 = vpack.c.b16 %v906, %v906
  %v971 = vpack.c.b16 %v907, %v907
  %v972 = vpack.c.b16 %v908, %v908
  %v973 = vpack.c.b16 %v909, %v909
  %v974 = vpack.c.b16 %v910, %v910
  %v975 = vpack.c.b16 %v911, %v911
  %v976 = vpack.c.b16 %v912, %v912
  %v977 = vpack.c.b16 %v913, %v913
  %v978 = vpack.c.b16 %v914, %v914
  %v979 = vpack.c.b16 %v915, %v915
  %v980 = vpack.c.b16 %v916, %v916
  %v981 = vpack.c.b16 %v917, %v917
  %v982 = vpack.c.b16 %v918, %v918
  %v983 = vpack.c.b16 %v919, %v919
  %v984 = vpack.c.b16 %v920, %v920
  %v985 = vpack.c.b16 %v921, %v921
  %v986 = vpack.c.b16 %v922, %v922
  %v987 = vpack.c.b16 %v923, %v923
  %v988 = vpack.c.b16 %v924, %v924
  %v989 = vpack.c.b16 %v925, %v925
  %v990 = vpack.c.b16 %v926, %v926
  %v991 = vpack.c.b16 %v927, %v927
  %v992 = vpack.c.b16 %v928, %v928
  %v993 = vpack.c.b16 %v929, %v929
  %v994 = vpack.c.b16 %v930, %v930
  %v995 = vpack.c.b16 %v931, %v931
  %v996 = vpack.c.b16 %v932, %v932
  %v997 = vpack.c.b16 %v933, %v933
  %v998 = vpack.c.b16 %v934, %v934
  %v999 = vpack.c.b16 %v935, %v935
  %v1000 = vpack.c.b16 %v936, %v936
  %v1001 = vpack.c.b16 %v937, %v937
  %v1002 = vpack.c.b16 %v938, %v938
  %v1003 = vpack.c.b16 %v939, %v939
  %v1004 = vpack.c.b16 %v940, %v940
  %1069 = vst [vmem:[%s2] sm:$0xf] %v941
  %1070 = vst [vmem:[%s2 + $0x4] sm:$0xf] %v942
  %1071 = vst [vmem:[%s2 + $0x8] sm:$0xf] %v943
  %1072 = vst [vmem:[%s2 + $0xc] sm:$0xf] %v944
  %1073 = vst [vmem:[%s2 + $0x10] sm:$0xf] %v945
  %1074 = vst [vmem:[%s2 + $0x14] sm:$0xf] %v946
  %1075 = vst [vmem:[%s2 + $0x18] sm:$0xf] %v947
  %1076 = vst [vmem:[%s2 + $0x1c] sm:$0xf] %v948
  %1077 = vst [vmem:[%s2 + $0x20] sm:$0xf] %v949
  %1078 = vst [vmem:[%s2 + $0x24] sm:$0xf] %v950
  %1079 = vst [vmem:[%s2 + $0x28] sm:$0xf] %v951
  %1080 = vst [vmem:[%s2 + $0x2c] sm:$0xf] %v952
  %1081 = vst [vmem:[%s2 + $0x30] sm:$0xf] %v953
  %1082 = vst [vmem:[%s2 + $0x34] sm:$0xf] %v954
  %1083 = vst [vmem:[%s2 + $0x38] sm:$0xf] %v955
  %1084 = vst [vmem:[%s2 + $0x3c] sm:$0xf] %v956
  %1085 = vst [vmem:[%s2 + $0x40] sm:$0xf] %v957
  %1086 = vst [vmem:[%s2 + $0x44] sm:$0xf] %v958
  %1087 = vst [vmem:[%s2 + $0x48] sm:$0xf] %v959
  %1088 = vst [vmem:[%s2 + $0x4c] sm:$0xf] %v960
  %1089 = vst [vmem:[%s2 + $0x50] sm:$0xf] %v961
  %1090 = vst [vmem:[%s2 + $0x54] sm:$0xf] %v962
  %1091 = vst [vmem:[%s2 + $0x58] sm:$0xf] %v963
  %1092 = vst [vmem:[%s2 + $0x5c] sm:$0xf] %v964
  %1093 = vst [vmem:[%s2 + $0x60] sm:$0xf] %v965
  %1094 = vst [vmem:[%s2 + $0x64] sm:$0xf] %v966
  %1095 = vst [vmem:[%s2 + $0x68] sm:$0xf] %v967
  %1096 = vst [vmem:[%s2 + $0x6c] sm:$0xf] %v968
  %1097 = vst [vmem:[%s2 + $0x70] sm:$0xf] %v969
  %1098 = vst [vmem:[%s2 + $0x74] sm:$0xf] %v970
  %1099 = vst [vmem:[%s2 + $0x78] sm:$0xf] %v971
  %1100 = vst [vmem:[%s2 + $0x7c] sm:$0xf] %v972
  %1101 = vst [vmem:[%s2 + $0x80] sm:$0xf] %v973
  %1102 = vst [vmem:[%s2 + $0x84] sm:$0xf] %v974
  %1103 = vst [vmem:[%s2 + $0x88] sm:$0xf] %v975
  %1104 = vst [vmem:[%s2 + $0x8c] sm:$0xf] %v976
  %1105 = vst [vmem:[%s2 + $0x90] sm:$0xf] %v977
  %1106 = vst [vmem:[%s2 + $0x94] sm:$0xf] %v978
  %1107 = vst [vmem:[%s2 + $0x98] sm:$0xf] %v979
  %1108 = vst [vmem:[%s2 + $0x9c] sm:$0xf] %v980
  %1109 = vst [vmem:[%s2 + $0xa0] sm:$0xf] %v981
  %1110 = vst [vmem:[%s2 + $0xa4] sm:$0xf] %v982
  %1111 = vst [vmem:[%s2 + $0xa8] sm:$0xf] %v983
  %1112 = vst [vmem:[%s2 + $0xac] sm:$0xf] %v984
  %1113 = vst [vmem:[%s2 + $0xb0] sm:$0xf] %v985
  %1114 = vst [vmem:[%s2 + $0xb4] sm:$0xf] %v986
  %1115 = vst [vmem:[%s2 + $0xb8] sm:$0xf] %v987
  %1116 = vst [vmem:[%s2 + $0xbc] sm:$0xf] %v988
  %1117 = vst [vmem:[%s2 + $0xc0] sm:$0xf] %v989
  %1118 = vst [vmem:[%s2 + $0xc4] sm:$0xf] %v990
  %1119 = vst [vmem:[%s2 + $0xc8] sm:$0xf] %v991
  %1120 = vst [vmem:[%s2 + $0xcc] sm:$0xf] %v992
  %1121 = vst [vmem:[%s2 + $0xd0] sm:$0xf] %v993
  %1122 = vst [vmem:[%s2 + $0xd4] sm:$0xf] %v994
  %1123 = vst [vmem:[%s2 + $0xd8] sm:$0xf] %v995
  %1124 = vst [vmem:[%s2 + $0xdc] sm:$0xf] %v996
  %1125 = vst [vmem:[%s2 + $0xe0] sm:$0xf] %v997
  %1126 = vst [vmem:[%s2 + $0xe4] sm:$0xf] %v998
  %1127 = vst [vmem:[%s2 + $0xe8] sm:$0xf] %v999
  %1128 = vst [vmem:[%s2 + $0xec] sm:$0xf] %v1000
  %1129 = vst [vmem:[%s2 + $0xf0] sm:$0xf] %v1001
  %1130 = vst [vmem:[%s2 + $0xf4] sm:$0xf] %v1002
  %1131 = vst [vmem:[%s2 + $0xf8] sm:$0xf] %v1003
  %1132 = vst [vmem:[%s2 + $0xfc] sm:$0xf] %v1004
  // Predicated region
  $region10: #{wgan_discriminator_forward.6} parent=0 // pred_check
    _
  $region11: #{wgan_discriminator_forward.6} parent=0 // pred_check_branch
    %1134 = sbr.rel (0) target = $region13
  $region12: #{wgan_discriminator_forward.6} parent=0 // pred_region
    _
  $region13: #{wgan_discriminator_forward.6} parent=0 // pred_fallthru
    _
  // Predicated region
  $region14: #{wgan_discriminator_forward.6} parent=0 // pred_check
    _
  $region15: #{wgan_discriminator_forward.6} parent=0 // pred_check_branch
    %1136 = sbr.rel (0) target = $region17
  $region16: #{wgan_discriminator_forward.6} parent=0 // pred_region
    _
  $region17: #{wgan_discriminator_forward.6} parent=0 // pred_fallthru
    _

// kernel: wgan_discriminator_forward.7
$region0: #{wgan_discriminator_forward.7}
  #allocation0 [shape = 'u32[]', space=smem, size = 0x4, offset = 0x4, fixed_abs, tag = 'smem constant byte address 0x4 - core index']
  #allocation1 [shape = 'u32[144,128]{1,0:T(1,128)}', space=vmem, size = 0x12000, scoped, tag = 'internal scratch']
  %s0 = inlined_call_operand.vmem [shape: bf16[128,256], index: 0, kind: input, shape index: {}]
  %s1 = inlined_call_operand.vmem [shape: bf16[256,128], index: 1, kind: input, shape index: {}]
  %s2 = inlined_call_operand.vmem [shape: bf16[128,128], index: 2, kind: output, shape index: {}]
  %s3 = sld [smem:[#allocation0]]
  $region18: #{wgan_discriminator_forward.7} parent=0
    _
  %s5 = ssub.s32 1, %s3
  %s6 = scalar_select 0, %s5, %s3
  // Predicated region
  $region2: #{wgan_discriminator_forward.7} parent=0 // pred_check
    _
  $region3: #{wgan_discriminator_forward.7} parent=0 // pred_check_branch
    %8 = sbr.rel (0) target = $region5
  $region4: #{wgan_discriminator_forward.7} parent=0 // pred_region
    _
  $region5: #{wgan_discriminator_forward.7} parent=0 // pred_fallthru
    _
  // Predicated region
  $region6: #{wgan_discriminator_forward.7} parent=0 // pred_check
    _
  $region7: #{wgan_discriminator_forward.7} parent=0 // pred_check_branch
    %10 = sbr.rel (0) target = $region9
  $region8: #{wgan_discriminator_forward.7} parent=0 // pred_region
    _
  $region9: #{wgan_discriminator_forward.7} parent=0 // pred_fallthru
    _
  %v12 = vld [vmem:[%s0] sm:$0xff]
  %v13 = vld [vmem:[%s0 + $0x8] sm:$0xff]
  %v14 = vld [vmem:[%s0 + $0x10] sm:$0xff]
  %v15 = vld [vmem:[%s0 + $0x18] sm:$0xff]
  %v16 = vld [vmem:[%s0 + $0x20] sm:$0xff]
  %v17 = vld [vmem:[%s0 + $0x28] sm:$0xff]
  %v18 = vld [vmem:[%s0 + $0x30] sm:$0xff]
  %v19 = vld [vmem:[%s0 + $0x38] sm:$0xff]
  %v20 = vld [vmem:[%s0 + $0x40] sm:$0xff]
  %v21 = vld [vmem:[%s0 + $0x48] sm:$0xff]
  %v22 = vld [vmem:[%s0 + $0x50] sm:$0xff]
  %v23 = vld [vmem:[%s0 + $0x58] sm:$0xff]
  %v24 = vld [vmem:[%s0 + $0x60] sm:$0xff]
  %v25 = vld [vmem:[%s0 + $0x68] sm:$0xff]
  %v26 = vld [vmem:[%s0 + $0x70] sm:$0xff]
  %v27 = vld [vmem:[%s0 + $0x78] sm:$0xff]
  %v28 = vld [vmem:[%s1] sm:$0xf]
  %v29 = vld [vmem:[%s1 + $0x4] sm:$0xf]
  %v30 = vld [vmem:[%s1 + $0x8] sm:$0xf]
  %v31 = vld [vmem:[%s1 + $0xc] sm:$0xf]
  %v32 = vld [vmem:[%s1 + $0x10] sm:$0xf]
  %v33 = vld [vmem:[%s1 + $0x14] sm:$0xf]
  %v34 = vld [vmem:[%s1 + $0x18] sm:$0xf]
  %v35 = vld [vmem:[%s1 + $0x1c] sm:$0xf]
  %v36 = vld [vmem:[%s1 + $0x20] sm:$0xf]
  %v37 = vld [vmem:[%s1 + $0x24] sm:$0xf]
  %v38 = vld [vmem:[%s1 + $0x28] sm:$0xf]
  %v39 = vld [vmem:[%s1 + $0x2c] sm:$0xf]
  %v40 = vld [vmem:[%s1 + $0x30] sm:$0xf]
  %v41 = vld [vmem:[%s1 + $0x34] sm:$0xf]
  %v42 = vld [vmem:[%s1 + $0x38] sm:$0xf]
  %v43 = vld [vmem:[%s1 + $0x3c] sm:$0xf]
  %v44 = vld [vmem:[%s1 + $0x40] sm:$0xf]
  %v45 = vld [vmem:[%s1 + $0x44] sm:$0xf]
  %v46 = vld [vmem:[%s1 + $0x48] sm:$0xf]
  %v47 = vld [vmem:[%s1 + $0x4c] sm:$0xf]
  %v48 = vld [vmem:[%s1 + $0x50] sm:$0xf]
  %v49 = vld [vmem:[%s1 + $0x54] sm:$0xf]
  %v50 = vld [vmem:[%s1 + $0x58] sm:$0xf]
  %v51 = vld [vmem:[%s1 + $0x5c] sm:$0xf]
  %v52 = vld [vmem:[%s1 + $0x60] sm:$0xf]
  %v53 = vld [vmem:[%s1 + $0x64] sm:$0xf]
  %v54 = vld [vmem:[%s1 + $0x68] sm:$0xf]
  %v55 = vld [vmem:[%s1 + $0x6c] sm:$0xf]
  %v56 = vld [vmem:[%s1 + $0x70] sm:$0xf]
  %v57 = vld [vmem:[%s1 + $0x74] sm:$0xf]
  %v58 = vld [vmem:[%s1 + $0x78] sm:$0xf]
  %v59 = vld [vmem:[%s1 + $0x7c] sm:$0xf]
  %v76 = vunpack.c.l.b16 %v12
  %v77 = vunpack.c.h.b16 %v12
  %v78 = vunpack.c.l.b16 %v13
  %v79 = vunpack.c.h.b16 %v13
  %v80 = vunpack.c.l.b16 %v14
  %v81 = vunpack.c.h.b16 %v14
  %v82 = vunpack.c.l.b16 %v15
  %v83 = vunpack.c.h.b16 %v15
  %v84 = vunpack.c.l.b16 %v16
  %v85 = vunpack.c.h.b16 %v16
  %v86 = vunpack.c.l.b16 %v17
  %v87 = vunpack.c.h.b16 %v17
  %v88 = vunpack.c.l.b16 %v18
  %v89 = vunpack.c.h.b16 %v18
  %v90 = vunpack.c.l.b16 %v19
  %v91 = vunpack.c.h.b16 %v19
  %v92 = vunpack.c.l.b16 %v20
  %v93 = vunpack.c.h.b16 %v20
  %v94 = vunpack.c.l.b16 %v21
  %v95 = vunpack.c.h.b16 %v21
  %v96 = vunpack.c.l.b16 %v22
  %v97 = vunpack.c.h.b16 %v22
  %v98 = vunpack.c.l.b16 %v23
  %v99 = vunpack.c.h.b16 %v23
  %v100 = vunpack.c.l.b16 %v24
  %v101 = vunpack.c.h.b16 %v24
  %v102 = vunpack.c.l.b16 %v25
  %v103 = vunpack.c.h.b16 %v25
  %v104 = vunpack.c.l.b16 %v26
  %v105 = vunpack.c.h.b16 %v26
  %v106 = vunpack.c.l.b16 %v27
  %v107 = vunpack.c.h.b16 %v27
  %v108 = vpack.c.b16 %v78, %v76
  %v109 = vpack.c.b16 %v79, %v77
  %v110 = vpack.c.b16 %v82, %v80
  %v111 = vpack.c.b16 %v83, %v81
  %v112 = vpack.c.b16 %v86, %v84
  %v113 = vpack.c.b16 %v87, %v85
  %v114 = vpack.c.b16 %v90, %v88
  %v115 = vpack.c.b16 %v91, %v89
  %v116 = vpack.c.b16 %v94, %v92
  %v117 = vpack.c.b16 %v95, %v93
  %v118 = vpack.c.b16 %v98, %v96
  %v119 = vpack.c.b16 %v99, %v97
  %v120 = vpack.c.b16 %v102, %v100
  %v121 = vpack.c.b16 %v103, %v101
  %v122 = vpack.c.b16 %v106, %v104
  %v123 = vpack.c.b16 %v107, %v105
  %v172 = vunpack.c.l.b16 %v28
  %v173 = vunpack.c.l.b16 %v29
  %v174 = vunpack.c.l.b16 %v30
  %v175 = vunpack.c.l.b16 %v31
  %v176 = vunpack.c.l.b16 %v32
  %v177 = vunpack.c.l.b16 %v33
  %v178 = vunpack.c.l.b16 %v34
  %v179 = vunpack.c.l.b16 %v35
  %v180 = vunpack.c.l.b16 %v36
  %v181 = vunpack.c.l.b16 %v37
  %v182 = vunpack.c.l.b16 %v38
  %v183 = vunpack.c.l.b16 %v39
  %v184 = vunpack.c.l.b16 %v40
  %v185 = vunpack.c.l.b16 %v41
  %v186 = vunpack.c.l.b16 %v42
  %v187 = vunpack.c.l.b16 %v43
  %v188 = vunpack.c.l.b16 %v44
  %v189 = vunpack.c.l.b16 %v45
  %v190 = vunpack.c.l.b16 %v46
  %v191 = vunpack.c.l.b16 %v47
  %v192 = vunpack.c.l.b16 %v48
  %v193 = vunpack.c.l.b16 %v49
  %v194 = vunpack.c.l.b16 %v50
  %v195 = vunpack.c.l.b16 %v51
  %v196 = vunpack.c.l.b16 %v52
  %v197 = vunpack.c.l.b16 %v53
  %v198 = vunpack.c.l.b16 %v54
  %v199 = vunpack.c.l.b16 %v55
  %v200 = vunpack.c.l.b16 %v56
  %v201 = vunpack.c.l.b16 %v57
  %v202 = vunpack.c.l.b16 %v58
  %v203 = vunpack.c.l.b16 %v59
  %v204 = vpack.c.b16 %v173, %v172
  %v205 = vpack.c.b16 %v175, %v174
  %v206 = vpack.c.b16 %v177, %v176
  %v207 = vpack.c.b16 %v179, %v178
  %v208 = vpack.c.b16 %v181, %v180
  %v209 = vpack.c.b16 %v183, %v182
  %v210 = vpack.c.b16 %v185, %v184
  %v211 = vpack.c.b16 %v187, %v186
  %v212 = vpack.c.b16 %v189, %v188
  %v213 = vpack.c.b16 %v191, %v190
  %v214 = vpack.c.b16 %v193, %v192
  %v215 = vpack.c.b16 %v195, %v194
  %v216 = vpack.c.b16 %v197, %v196
  %v217 = vpack.c.b16 %v199, %v198
  %v218 = vpack.c.b16 %v201, %v200
  %v219 = vpack.c.b16 %v203, %v202
  %236 = vmatprep.subr.bf16.mxu0 0
  %237 = vmatpush1.bf16.msra.mxu0 %v211
  %238 = vmatprep.subr.bf16.mxu0 0
  %239 = vmatpush1.bf16.msra.mxu0 %v210
  %240 = vmatprep.subr.bf16.mxu0 0
  %241 = vmatpush1.bf16.msra.mxu0 %v209
  %242 = vmatprep.subr.bf16.mxu0 0
  %243 = vmatpush1.bf16.msra.mxu0 %v208
  %244 = vmatprep.subr.bf16.mxu0 0
  %245 = vmatpush1.bf16.msra.mxu0 %v207
  %246 = vmatprep.subr.bf16.mxu0 0
  %247 = vmatpush1.bf16.msra.mxu0 %v206
  %248 = vmatprep.subr.bf16.mxu0 0
  %249 = vmatpush1.bf16.msra.mxu0 %v205
  %250 = vmatprep.subr.bf16.mxu0 0
  %251 = vmatpush1.bf16.msra.mxu0 %v204
  %252 = vmatprep.subr.bf16.mxu0 0
  %253 = vmatpush2.bf16.msra.mxu0 %v219
  %254 = vmatprep.subr.bf16.mxu0 0
  %255 = vmatpush2.bf16.msra.mxu0 %v218
  %256 = vmatprep.subr.bf16.mxu0 0
  %257 = vmatpush2.bf16.msra.mxu0 %v217
  %258 = vmatprep.subr.bf16.mxu0 0
  %259 = vmatpush2.bf16.msra.mxu0 %v216
  %260 = vmatprep.subr.bf16.mxu0 0
  %261 = vmatpush2.bf16.msra.mxu0 %v215
  %262 = vmatprep.subr.bf16.mxu0 0
  %263 = vmatpush2.bf16.msra.mxu0 %v214
  %264 = vmatprep.subr.bf16.mxu0 0
  %265 = vmatpush2.bf16.msra.mxu0 %v213
  %266 = vmatprep.subr.bf16.mxu0 0
  %267 = vmatpush2.bf16.msra.mxu0 %v212
  %268 = vmatprep.mubr.bf16.mxu0 %v109
  %269 = vmatmul.mubr.bf16.gmra.mxu0 %v108
  %v270 = vpop.f32.mrf.mxu0
  %v271 = vadd.f32 0.0, %v270
  %v272 = vpop.f32.mrf.mxu0
  %v273 = vpop.f32.mrf.mxu0
  %v274 = vadd.f32 0.0, %v273
  %v275 = vpop.f32.mrf.mxu0
  %276 = vmatprep.mubr.bf16.mxu0 %v111
  %277 = vmatmul.mubr.bf16.gmra.mxu0 %v110
  %v278 = vpop.f32.mrf.mxu0
  %v279 = vadd.f32 0.0, %v278
  %v280 = vpop.f32.mrf.mxu0
  %v281 = vpop.f32.mrf.mxu0
  %v282 = vadd.f32 0.0, %v281
  %v283 = vpop.f32.mrf.mxu0
  %284 = vmatprep.mubr.bf16.mxu0 %v113
  %285 = vmatmul.mubr.bf16.gmra.mxu0 %v112
  %v286 = vpop.f32.mrf.mxu0
  %v287 = vadd.f32 0.0, %v286
  %v288 = vpop.f32.mrf.mxu0
  %v289 = vpop.f32.mrf.mxu0
  %v290 = vadd.f32 0.0, %v289
  %v291 = vpop.f32.mrf.mxu0
  %292 = vmatprep.mubr.bf16.mxu0 %v115
  %293 = vmatmul.mubr.bf16.gmra.mxu0 %v114
  %v294 = vpop.f32.mrf.mxu0
  %v295 = vadd.f32 0.0, %v294
  %v296 = vpop.f32.mrf.mxu0
  %v297 = vpop.f32.mrf.mxu0
  %v298 = vadd.f32 0.0, %v297
  %v299 = vpop.f32.mrf.mxu0
  %300 = vmatprep.mubr.bf16.mxu0 %v117
  %301 = vmatmul.mubr.bf16.gmra.mxu0 %v116
  %v302 = vpop.f32.mrf.mxu0
  %v303 = vadd.f32 0.0, %v302
  %v304 = vpop.f32.mrf.mxu0
  %v305 = vpop.f32.mrf.mxu0
  %v306 = vadd.f32 0.0, %v305
  %v307 = vpop.f32.mrf.mxu0
  %308 = vmatprep.mubr.bf16.mxu0 %v119
  %309 = vmatmul.mubr.bf16.gmra.mxu0 %v118
  %v310 = vpop.f32.mrf.mxu0
  %v311 = vadd.f32 0.0, %v310
  %v312 = vpop.f32.mrf.mxu0
  %v313 = vpop.f32.mrf.mxu0
  %v314 = vadd.f32 0.0, %v313
  %v315 = vpop.f32.mrf.mxu0
  %316 = vmatprep.mubr.bf16.mxu0 %v121
  %317 = vmatmul.mubr.bf16.gmra.mxu0 %v120
  %v318 = vpop.f32.mrf.mxu0
  %v319 = vadd.f32 0.0, %v318
  %v320 = vpop.f32.mrf.mxu0
  %v321 = vpop.f32.mrf.mxu0
  %v322 = vadd.f32 0.0, %v321
  %v323 = vpop.f32.mrf.mxu0
  %324 = vmatprep.mubr.bf16.mxu0 %v123
  %325 = vmatmul.mubr.bf16.gmra.mxu0 %v122
  %v326 = vpop.f32.mrf.mxu0
  %v327 = vadd.f32 0.0, %v326
  %v328 = vpop.f32.mrf.mxu0
  %v329 = vpop.f32.mrf.mxu0
  %v330 = vadd.f32 0.0, %v329
  %v331 = vpop.f32.mrf.mxu0
  %332 = vdwg.mxu0
  %vm333 = vcmp.ge.f32.partialorder %v271, 0.0
  %vm334 = vcmp.ge.f32.partialorder %v274, 0.0
  %vm335 = vcmp.ge.f32.partialorder %v279, 0.0
  %vm336 = vcmp.ge.f32.partialorder %v282, 0.0
  %vm337 = vcmp.ge.f32.partialorder %v287, 0.0
  %vm338 = vcmp.ge.f32.partialorder %v290, 0.0
  %vm339 = vcmp.ge.f32.partialorder %v295, 0.0
  %vm340 = vcmp.ge.f32.partialorder %v298, 0.0
  %vm341 = vcmp.ge.f32.partialorder %v303, 0.0
  %vm342 = vcmp.ge.f32.partialorder %v306, 0.0
  %vm343 = vcmp.ge.f32.partialorder %v311, 0.0
  %vm344 = vcmp.ge.f32.partialorder %v314, 0.0
  %vm345 = vcmp.ge.f32.partialorder %v319, 0.0
  %vm346 = vcmp.ge.f32.partialorder %v322, 0.0
  %vm347 = vcmp.ge.f32.partialorder %v327, 0.0
  %vm348 = vcmp.ge.f32.partialorder %v330, 0.0
  %v349 = vmul.f32 %v271, 0.2
  %v350 = vmul.f32 %v274, 0.2
  %v351 = vmul.f32 %v279, 0.2
  %v352 = vmul.f32 %v282, 0.2
  %v353 = vmul.f32 %v287, 0.2
  %v354 = vmul.f32 %v290, 0.2
  %v355 = vmul.f32 %v295, 0.2
  %v356 = vmul.f32 %v298, 0.2
  %v357 = vmul.f32 %v303, 0.2
  %v358 = vmul.f32 %v306, 0.2
  %v359 = vmul.f32 %v311, 0.2
  %v360 = vmul.f32 %v314, 0.2
  %v361 = vmul.f32 %v319, 0.2
  %v362 = vmul.f32 %v322, 0.2
  %v363 = vmul.f32 %v327, 0.2
  %v364 = vmul.f32 %v330, 0.2
  %v365 = vsel %vm333, %v271, %v349
  %v366 = vsel %vm334, %v274, %v350
  %v367 = vsel %vm335, %v279, %v351
  %v368 = vsel %vm336, %v282, %v352
  %v369 = vsel %vm337, %v287, %v353
  %v370 = vsel %vm338, %v290, %v354
  %v371 = vsel %vm339, %v295, %v355
  %v372 = vsel %vm340, %v298, %v356
  %v373 = vsel %vm341, %v303, %v357
  %v374 = vsel %vm342, %v306, %v358
  %v375 = vsel %vm343, %v311, %v359
  %v376 = vsel %vm344, %v314, %v360
  %v377 = vsel %vm345, %v319, %v361
  %v378 = vsel %vm346, %v322, %v362
  %v379 = vsel %vm347, %v327, %v363
  %v380 = vsel %vm348, %v330, %v364
  %v381 = vpack.c.bf16 %v366, %v365
  %v382 = vpack.c.bf16 %v368, %v367
  %v383 = vpack.c.bf16 %v370, %v369
  %v384 = vpack.c.bf16 %v372, %v371
  %v385 = vpack.c.bf16 %v374, %v373
  %v386 = vpack.c.bf16 %v376, %v375
  %v387 = vpack.c.bf16 %v378, %v377
  %v388 = vpack.c.bf16 %v380, %v379
  %v397 = vunpack.c.l.b16 %v381
  %v398 = vunpack.c.h.b16 %v381
  %v399 = vunpack.c.l.b16 %v382
  %v400 = vunpack.c.h.b16 %v382
  %v401 = vunpack.c.l.b16 %v383
  %v402 = vunpack.c.h.b16 %v383
  %v403 = vunpack.c.l.b16 %v384
  %v404 = vunpack.c.h.b16 %v384
  %v405 = vunpack.c.l.b16 %v385
  %v406 = vunpack.c.h.b16 %v385
  %v407 = vunpack.c.l.b16 %v386
  %v408 = vunpack.c.h.b16 %v386
  %v409 = vunpack.c.l.b16 %v387
  %v410 = vunpack.c.h.b16 %v387
  %v411 = vunpack.c.l.b16 %v388
  %v412 = vunpack.c.h.b16 %v388
  %v413 = vpack.c.b16 %v397, %v397
  %v414 = vpack.c.b16 %v398, %v398
  %v415 = vpack.c.b16 %v399, %v399
  %v416 = vpack.c.b16 %v400, %v400
  %v417 = vpack.c.b16 %v401, %v401
  %v418 = vpack.c.b16 %v402, %v402
  %v419 = vpack.c.b16 %v403, %v403
  %v420 = vpack.c.b16 %v404, %v404
  %v421 = vpack.c.b16 %v405, %v405
  %v422 = vpack.c.b16 %v406, %v406
  %v423 = vpack.c.b16 %v407, %v407
  %v424 = vpack.c.b16 %v408, %v408
  %v425 = vpack.c.b16 %v409, %v409
  %v426 = vpack.c.b16 %v410, %v410
  %v427 = vpack.c.b16 %v411, %v411
  %v428 = vpack.c.b16 %v412, %v412
  %445 = vst [vmem:[%s2] sm:$0xf] %v413
  %446 = vst [vmem:[%s2 + $0x4] sm:$0xf] %v414
  %447 = vst [vmem:[%s2 + $0x8] sm:$0xf] %v415
  %448 = vst [vmem:[%s2 + $0xc] sm:$0xf] %v416
  %449 = vst [vmem:[%s2 + $0x10] sm:$0xf] %v417
  %450 = vst [vmem:[%s2 + $0x14] sm:$0xf] %v418
  %451 = vst [vmem:[%s2 + $0x18] sm:$0xf] %v419
  %452 = vst [vmem:[%s2 + $0x1c] sm:$0xf] %v420
  %453 = vst [vmem:[%s2 + $0x20] sm:$0xf] %v421
  %454 = vst [vmem:[%s2 + $0x24] sm:$0xf] %v422
  %455 = vst [vmem:[%s2 + $0x28] sm:$0xf] %v423
  %456 = vst [vmem:[%s2 + $0x2c] sm:$0xf] %v424
  %457 = vst [vmem:[%s2 + $0x30] sm:$0xf] %v425
  %458 = vst [vmem:[%s2 + $0x34] sm:$0xf] %v426
  %459 = vst [vmem:[%s2 + $0x38] sm:$0xf] %v427
  %460 = vst [vmem:[%s2 + $0x3c] sm:$0xf] %v428
  // Predicated region
  $region10: #{wgan_discriminator_forward.7} parent=0 // pred_check
    _
  $region11: #{wgan_discriminator_forward.7} parent=0 // pred_check_branch
    %462 = sbr.rel (0) target = $region13
  $region12: #{wgan_discriminator_forward.7} parent=0 // pred_region
    _
  $region13: #{wgan_discriminator_forward.7} parent=0 // pred_fallthru
    _
  // Predicated region
  $region14: #{wgan_discriminator_forward.7} parent=0 // pred_check
    _
  $region15: #{wgan_discriminator_forward.7} parent=0 // pred_check_branch
    %464 = sbr.rel (0) target = $region17
  $region16: #{wgan_discriminator_forward.7} parent=0 // pred_region
    _
  $region17: #{wgan_discriminator_forward.7} parent=0 // pred_fallthru
    _

// kernel: wgan_discriminator_forward.8
$region0: #{wgan_discriminator_forward.8}
  #allocation0 [shape = 'u32[]', space=smem, size = 0x4, offset = 0x4, fixed_abs, tag = 'smem constant byte address 0x4 - core index']
  #allocation1 [shape = 'u32[144,128]{1,0:T(1,128)}', space=vmem, size = 0x12000, scoped, tag = 'internal scratch']
  %s0 = inlined_call_operand.vmem [shape: bf16[32,512], index: 0, kind: input, shape index: {}]
  %s1 = inlined_call_operand.vmem [shape: bf16[512,128], index: 1, kind: input, shape index: {}]
  %s2 = inlined_call_operand.vmem [shape: bf16[32,128], index: 2, kind: output, shape index: {}]
  %s3 = sld [smem:[#allocation0]]
  $region18: #{wgan_discriminator_forward.8} parent=0
    _
  %s5 = ssub.s32 1, %s3
  %s6 = scalar_select 0, %s5, %s3
  // Predicated region
  $region2: #{wgan_discriminator_forward.8} parent=0 // pred_check
    _
  $region3: #{wgan_discriminator_forward.8} parent=0 // pred_check_branch
    %8 = sbr.rel (0) target = $region5
  $region4: #{wgan_discriminator_forward.8} parent=0 // pred_region
    _
  $region5: #{wgan_discriminator_forward.8} parent=0 // pred_fallthru
    _
  // Predicated region
  $region6: #{wgan_discriminator_forward.8} parent=0 // pred_check
    _
  $region7: #{wgan_discriminator_forward.8} parent=0 // pred_check_branch
    %10 = sbr.rel (0) target = $region9
  $region8: #{wgan_discriminator_forward.8} parent=0 // pred_region
    _
  $region9: #{wgan_discriminator_forward.8} parent=0 // pred_fallthru
    _
  %v12 = vld [vmem:[%s0] sm:$0xff]
  %v13 = vld [vmem:[%s0 + $0x8] sm:$0xff]
  %v14 = vld [vmem:[%s0 + $0x10] sm:$0xff]
  %v15 = vld [vmem:[%s0 + $0x18] sm:$0xff]
  %v16 = vld [vmem:[%s0 + $0x20] sm:$0xff]
  %v17 = vld [vmem:[%s0 + $0x28] sm:$0xff]
  %v18 = vld [vmem:[%s0 + $0x30] sm:$0xff]
  %v19 = vld [vmem:[%s0 + $0x38] sm:$0xff]
  %v20 = vld [vmem:[%s1] sm:$0xf]
  %v21 = vld [vmem:[%s1 + $0x4] sm:$0xf]
  %v22 = vld [vmem:[%s1 + $0x8] sm:$0xf]
  %v23 = vld [vmem:[%s1 + $0xc] sm:$0xf]
  %v24 = vld [vmem:[%s1 + $0x10] sm:$0xf]
  %v25 = vld [vmem:[%s1 + $0x14] sm:$0xf]
  %v26 = vld [vmem:[%s1 + $0x18] sm:$0xf]
  %v27 = vld [vmem:[%s1 + $0x1c] sm:$0xf]
  %v28 = vld [vmem:[%s1 + $0x20] sm:$0xf]
  %v29 = vld [vmem:[%s1 + $0x24] sm:$0xf]
  %v30 = vld [vmem:[%s1 + $0x28] sm:$0xf]
  %v31 = vld [vmem:[%s1 + $0x2c] sm:$0xf]
  %v32 = vld [vmem:[%s1 + $0x30] sm:$0xf]
  %v33 = vld [vmem:[%s1 + $0x34] sm:$0xf]
  %v34 = vld [vmem:[%s1 + $0x38] sm:$0xf]
  %v35 = vld [vmem:[%s1 + $0x3c] sm:$0xf]
  %v36 = vld [vmem:[%s1 + $0x40] sm:$0xf]
  %v37 = vld [vmem:[%s1 + $0x44] sm:$0xf]
  %v38 = vld [vmem:[%s1 + $0x48] sm:$0xf]
  %v39 = vld [vmem:[%s1 + $0x4c] sm:$0xf]
  %v40 = vld [vmem:[%s1 + $0x50] sm:$0xf]
  %v41 = vld [vmem:[%s1 + $0x54] sm:$0xf]
  %v42 = vld [vmem:[%s1 + $0x58] sm:$0xf]
  %v43 = vld [vmem:[%s1 + $0x5c] sm:$0xf]
  %v44 = vld [vmem:[%s1 + $0x60] sm:$0xf]
  %v45 = vld [vmem:[%s1 + $0x64] sm:$0xf]
  %v46 = vld [vmem:[%s1 + $0x68] sm:$0xf]
  %v47 = vld [vmem:[%s1 + $0x6c] sm:$0xf]
  %v48 = vld [vmem:[%s1 + $0x70] sm:$0xf]
  %v49 = vld [vmem:[%s1 + $0x74] sm:$0xf]
  %v50 = vld [vmem:[%s1 + $0x78] sm:$0xf]
  %v51 = vld [vmem:[%s1 + $0x7c] sm:$0xf]
  %v52 = vld [vmem:[%s1 + $0x80] sm:$0xf]
  %v53 = vld [vmem:[%s1 + $0x84] sm:$0xf]
  %v54 = vld [vmem:[%s1 + $0x88] sm:$0xf]
  %v55 = vld [vmem:[%s1 + $0x8c] sm:$0xf]
  %v56 = vld [vmem:[%s1 + $0x90] sm:$0xf]
  %v57 = vld [vmem:[%s1 + $0x94] sm:$0xf]
  %v58 = vld [vmem:[%s1 + $0x98] sm:$0xf]
  %v59 = vld [vmem:[%s1 + $0x9c] sm:$0xf]
  %v60 = vld [vmem:[%s1 + $0xa0] sm:$0xf]
  %v61 = vld [vmem:[%s1 + $0xa4] sm:$0xf]
  %v62 = vld [vmem:[%s1 + $0xa8] sm:$0xf]
  %v63 = vld [vmem:[%s1 + $0xac] sm:$0xf]
  %v64 = vld [vmem:[%s1 + $0xb0] sm:$0xf]
  %v65 = vld [vmem:[%s1 + $0xb4] sm:$0xf]
  %v66 = vld [vmem:[%s1 + $0xb8] sm:$0xf]
  %v67 = vld [vmem:[%s1 + $0xbc] sm:$0xf]
  %v68 = vld [vmem:[%s1 + $0xc0] sm:$0xf]
  %v69 = vld [vmem:[%s1 + $0xc4] sm:$0xf]
  %v70 = vld [vmem:[%s1 + $0xc8] sm:$0xf]
  %v71 = vld [vmem:[%s1 + $0xcc] sm:$0xf]
  %v72 = vld [vmem:[%s1 + $0xd0] sm:$0xf]
  %v73 = vld [vmem:[%s1 + $0xd4] sm:$0xf]
  %v74 = vld [vmem:[%s1 + $0xd8] sm:$0xf]
  %v75 = vld [vmem:[%s1 + $0xdc] sm:$0xf]
  %v76 = vld [vmem:[%s1 + $0xe0] sm:$0xf]
  %v77 = vld [vmem:[%s1 + $0xe4] sm:$0xf]
  %v78 = vld [vmem:[%s1 + $0xe8] sm:$0xf]
  %v79 = vld [vmem:[%s1 + $0xec] sm:$0xf]
  %v80 = vld [vmem:[%s1 + $0xf0] sm:$0xf]
  %v81 = vld [vmem:[%s1 + $0xf4] sm:$0xf]
  %v82 = vld [vmem:[%s1 + $0xf8] sm:$0xf]
  %v83 = vld [vmem:[%s1 + $0xfc] sm:$0xf]
  %v92 = vunpack.c.l.b16 %v12
  %v93 = vunpack.c.h.b16 %v12
  %v94 = vunpack.c.l.b16 %v13
  %v95 = vunpack.c.h.b16 %v13
  %v96 = vunpack.c.l.b16 %v14
  %v97 = vunpack.c.h.b16 %v14
  %v98 = vunpack.c.l.b16 %v15
  %v99 = vunpack.c.h.b16 %v15
  %v100 = vunpack.c.l.b16 %v16
  %v101 = vunpack.c.h.b16 %v16
  %v102 = vunpack.c.l.b16 %v17
  %v103 = vunpack.c.h.b16 %v17
  %v104 = vunpack.c.l.b16 %v18
  %v105 = vunpack.c.h.b16 %v18
  %v106 = vunpack.c.l.b16 %v19
  %v107 = vunpack.c.h.b16 %v19
  %v108 = vpack.c.b16 %v96, %v92
  %v109 = vpack.c.b16 %v97, %v93
  %v110 = vpack.c.b16 %v98, %v94
  %v111 = vpack.c.b16 %v99, %v95
  %v112 = vpack.c.b16 %v104, %v100
  %v113 = vpack.c.b16 %v105, %v101
  %v114 = vpack.c.b16 %v106, %v102
  %v115 = vpack.c.b16 %v107, %v103
  %v188 = vunpack.c.l.b16 %v20
  %v189 = vunpack.c.l.b16 %v21
  %v190 = vunpack.c.l.b16 %v22
  %v191 = vunpack.c.l.b16 %v23
  %v192 = vunpack.c.l.b16 %v24
  %v193 = vunpack.c.l.b16 %v25
  %v194 = vunpack.c.l.b16 %v26
  %v195 = vunpack.c.l.b16 %v27
  %v196 = vunpack.c.l.b16 %v28
  %v197 = vunpack.c.l.b16 %v29
  %v198 = vunpack.c.l.b16 %v30
  %v199 = vunpack.c.l.b16 %v31
  %v200 = vunpack.c.l.b16 %v32
  %v201 = vunpack.c.l.b16 %v33
  %v202 = vunpack.c.l.b16 %v34
  %v203 = vunpack.c.l.b16 %v35
  %v204 = vunpack.c.l.b16 %v36
  %v205 = vunpack.c.l.b16 %v37
  %v206 = vunpack.c.l.b16 %v38
  %v207 = vunpack.c.l.b16 %v39
  %v208 = vunpack.c.l.b16 %v40
  %v209 = vunpack.c.l.b16 %v41
  %v210 = vunpack.c.l.b16 %v42
  %v211 = vunpack.c.l.b16 %v43
  %v212 = vunpack.c.l.b16 %v44
  %v213 = vunpack.c.l.b16 %v45
  %v214 = vunpack.c.l.b16 %v46
  %v215 = vunpack.c.l.b16 %v47
  %v216 = vunpack.c.l.b16 %v48
  %v217 = vunpack.c.l.b16 %v49
  %v218 = vunpack.c.l.b16 %v50
  %v219 = vunpack.c.l.b16 %v51
  %v220 = vunpack.c.l.b16 %v52
  %v221 = vunpack.c.l.b16 %v53
  %v222 = vunpack.c.l.b16 %v54
  %v223 = vunpack.c.l.b16 %v55
  %v224 = vunpack.c.l.b16 %v56
  %v225 = vunpack.c.l.b16 %v57
  %v226 = vunpack.c.l.b16 %v58
  %v227 = vunpack.c.l.b16 %v59
  %v228 = vunpack.c.l.b16 %v60
  %v229 = vunpack.c.l.b16 %v61
  %v230 = vunpack.c.l.b16 %v62
  %v231 = vunpack.c.l.b16 %v63
  %v232 = vunpack.c.l.b16 %v64
  %v233 = vunpack.c.l.b16 %v65
  %v234 = vunpack.c.l.b16 %v66
  %v235 = vunpack.c.l.b16 %v67
  %v236 = vunpack.c.l.b16 %v68
  %v237 = vunpack.c.l.b16 %v69
  %v238 = vunpack.c.l.b16 %v70
  %v239 = vunpack.c.l.b16 %v71
  %v240 = vunpack.c.l.b16 %v72
  %v241 = vunpack.c.l.b16 %v73
  %v242 = vunpack.c.l.b16 %v74
  %v243 = vunpack.c.l.b16 %v75
  %v244 = vunpack.c.l.b16 %v76
  %v245 = vunpack.c.l.b16 %v77
  %v246 = vunpack.c.l.b16 %v78
  %v247 = vunpack.c.l.b16 %v79
  %v248 = vunpack.c.l.b16 %v80
  %v249 = vunpack.c.l.b16 %v81
  %v250 = vunpack.c.l.b16 %v82
  %v251 = vunpack.c.l.b16 %v83
  %v252 = vpack.c.b16 %v189, %v188
  %v253 = vpack.c.b16 %v191, %v190
  %v254 = vpack.c.b16 %v193, %v192
  %v255 = vpack.c.b16 %v195, %v194
  %v256 = vpack.c.b16 %v197, %v196
  %v257 = vpack.c.b16 %v199, %v198
  %v258 = vpack.c.b16 %v201, %v200
  %v259 = vpack.c.b16 %v203, %v202
  %v260 = vpack.c.b16 %v205, %v204
  %v261 = vpack.c.b16 %v207, %v206
  %v262 = vpack.c.b16 %v209, %v208
  %v263 = vpack.c.b16 %v211, %v210
  %v264 = vpack.c.b16 %v213, %v212
  %v265 = vpack.c.b16 %v215, %v214
  %v266 = vpack.c.b16 %v217, %v216
  %v267 = vpack.c.b16 %v219, %v218
  %v268 = vpack.c.b16 %v221, %v220
  %v269 = vpack.c.b16 %v223, %v222
  %v270 = vpack.c.b16 %v225, %v224
  %v271 = vpack.c.b16 %v227, %v226
  %v272 = vpack.c.b16 %v229, %v228
  %v273 = vpack.c.b16 %v231, %v230
  %v274 = vpack.c.b16 %v233, %v232
  %v275 = vpack.c.b16 %v235, %v234
  %v276 = vpack.c.b16 %v237, %v236
  %v277 = vpack.c.b16 %v239, %v238
  %v278 = vpack.c.b16 %v241, %v240
  %v279 = vpack.c.b16 %v243, %v242
  %v280 = vpack.c.b16 %v245, %v244
  %v281 = vpack.c.b16 %v247, %v246
  %v282 = vpack.c.b16 %v249, %v248
  %v283 = vpack.c.b16 %v251, %v250
  %316 = vmatprep.subr.bf16.mxu0 0
  %317 = vmatpush1.bf16.msra.mxu0 %v259
  %318 = vmatprep.subr.bf16.mxu0 0
  %319 = vmatpush1.bf16.msra.mxu0 %v258
  %320 = vmatprep.subr.bf16.mxu0 0
  %321 = vmatpush1.bf16.msra.mxu0 %v257
  %322 = vmatprep.subr.bf16.mxu0 0
  %323 = vmatpush1.bf16.msra.mxu0 %v256
  %324 = vmatprep.subr.bf16.mxu0 0
  %325 = vmatpush1.bf16.msra.mxu0 %v255
  %326 = vmatprep.subr.bf16.mxu0 0
  %327 = vmatpush1.bf16.msra.mxu0 %v254
  %328 = vmatprep.subr.bf16.mxu0 0
  %329 = vmatpush1.bf16.msra.mxu0 %v253
  %330 = vmatprep.subr.bf16.mxu0 0
  %331 = vmatpush1.bf16.msra.mxu0 %v252
  %332 = vmatprep.subr.bf16.mxu0 0
  %333 = vmatpush2.bf16.msra.mxu0 %v267
  %334 = vmatprep.subr.bf16.mxu0 0
  %335 = vmatpush2.bf16.msra.mxu0 %v266
  %336 = vmatprep.subr.bf16.mxu0 0
  %337 = vmatpush2.bf16.msra.mxu0 %v265
  %338 = vmatprep.subr.bf16.mxu0 0
  %339 = vmatpush2.bf16.msra.mxu0 %v264
  %340 = vmatprep.subr.bf16.mxu0 0
  %341 = vmatpush2.bf16.msra.mxu0 %v263
  %342 = vmatprep.subr.bf16.mxu0 0
  %343 = vmatpush2.bf16.msra.mxu0 %v262
  %344 = vmatprep.subr.bf16.mxu0 0
  %345 = vmatpush2.bf16.msra.mxu0 %v261
  %346 = vmatprep.subr.bf16.mxu0 0
  %347 = vmatpush2.bf16.msra.mxu0 %v260
  %348 = vmatprep.mubr.bf16.mxu0 %v109
  %349 = vmatmul.mubr.bf16.gmra.mxu0 %v108
  %v350 = vpop.f32.mrf.mxu0
  %v351 = vadd.f32 0.0, %v350
  %v352 = vpop.f32.mrf.mxu0
  %v353 = vpop.f32.mrf.mxu0
  %v354 = vadd.f32 0.0, %v353
  %v355 = vpop.f32.mrf.mxu0
  %356 = vmatprep.mubr.bf16.mxu0 %v113
  %357 = vmatmul.mubr.bf16.gmra.mxu0 %v112
  %v358 = vpop.f32.mrf.mxu0
  %v359 = vadd.f32 0.0, %v358
  %v360 = vpop.f32.mrf.mxu0
  %v361 = vpop.f32.mrf.mxu0
  %v362 = vadd.f32 0.0, %v361
  %v363 = vpop.f32.mrf.mxu0
  %364 = vdwg.mxu0
  %365 = vmatprep.subr.bf16.mxu0 0
  %366 = vmatpush1.bf16.msra.mxu0 %v275
  %367 = vmatprep.subr.bf16.mxu0 0
  %368 = vmatpush1.bf16.msra.mxu0 %v274
  %369 = vmatprep.subr.bf16.mxu0 0
  %370 = vmatpush1.bf16.msra.mxu0 %v273
  %371 = vmatprep.subr.bf16.mxu0 0
  %372 = vmatpush1.bf16.msra.mxu0 %v272
  %373 = vmatprep.subr.bf16.mxu0 0
  %374 = vmatpush1.bf16.msra.mxu0 %v271
  %375 = vmatprep.subr.bf16.mxu0 0
  %376 = vmatpush1.bf16.msra.mxu0 %v270
  %377 = vmatprep.subr.bf16.mxu0 0
  %378 = vmatpush1.bf16.msra.mxu0 %v269
  %379 = vmatprep.subr.bf16.mxu0 0
  %380 = vmatpush1.bf16.msra.mxu0 %v268
  %381 = vmatprep.subr.bf16.mxu0 0
  %382 = vmatpush2.bf16.msra.mxu0 %v283
  %383 = vmatprep.subr.bf16.mxu0 0
  %384 = vmatpush2.bf16.msra.mxu0 %v282
  %385 = vmatprep.subr.bf16.mxu0 0
  %386 = vmatpush2.bf16.msra.mxu0 %v281
  %387 = vmatprep.subr.bf16.mxu0 0
  %388 = vmatpush2.bf16.msra.mxu0 %v280
  %389 = vmatprep.subr.bf16.mxu0 0
  %390 = vmatpush2.bf16.msra.mxu0 %v279
  %391 = vmatprep.subr.bf16.mxu0 0
  %392 = vmatpush2.bf16.msra.mxu0 %v278
  %393 = vmatprep.subr.bf16.mxu0 0
  %394 = vmatpush2.bf16.msra.mxu0 %v277
  %395 = vmatprep.subr.bf16.mxu0 0
  %396 = vmatpush2.bf16.msra.mxu0 %v276
  %397 = vmatprep.mubr.bf16.mxu0 %v111
  %398 = vmatmul.mubr.bf16.gmra.mxu0 %v110
  %v399 = vpop.f32.mrf.mxu0
  %v400 = vadd.f32 %v351, %v399
  %v401 = vpop.f32.mrf.mxu0
  %v402 = vpop.f32.mrf.mxu0
  %v403 = vadd.f32 %v354, %v402
  %v404 = vpop.f32.mrf.mxu0
  %405 = vmatprep.mubr.bf16.mxu0 %v115
  %406 = vmatmul.mubr.bf16.gmra.mxu0 %v114
  %v407 = vpop.f32.mrf.mxu0
  %v408 = vadd.f32 %v359, %v407
  %v409 = vpop.f32.mrf.mxu0
  %v410 = vpop.f32.mrf.mxu0
  %v411 = vadd.f32 %v362, %v410
  %v412 = vpop.f32.mrf.mxu0
  %413 = vdwg.mxu0
  %vm414 = vcmp.ge.f32.partialorder %v400, 0.0
  %vm415 = vcmp.ge.f32.partialorder %v403, 0.0
  %vm416 = vcmp.ge.f32.partialorder %v408, 0.0
  %vm417 = vcmp.ge.f32.partialorder %v411, 0.0
  %v418 = vmul.f32 %v400, 0.2
  %v419 = vmul.f32 %v403, 0.2
  %v420 = vmul.f32 %v408, 0.2
  %v421 = vmul.f32 %v411, 0.2
  %v422 = vsel %vm414, %v400, %v418
  %v423 = vsel %vm415, %v403, %v419
  %v424 = vsel %vm416, %v408, %v420
  %v425 = vsel %vm417, %v411, %v421
  %v426 = vpack.c.bf16 %v423, %v422
  %v427 = vpack.c.bf16 %v425, %v424
  %v430 = vunpack.c.l.b16 %v426
  %v431 = vunpack.c.h.b16 %v426
  %v432 = vunpack.c.l.b16 %v427
  %v433 = vunpack.c.h.b16 %v427
  %v434 = vpack.c.b16 %v430, %v430
  %v435 = vpack.c.b16 %v431, %v431
  %v436 = vpack.c.b16 %v432, %v432
  %v437 = vpack.c.b16 %v433, %v433
  %442 = vst [vmem:[%s2] sm:$0xf] %v434
  %443 = vst [vmem:[%s2 + $0x4] sm:$0xf] %v435
  %444 = vst [vmem:[%s2 + $0x8] sm:$0xf] %v436
  %445 = vst [vmem:[%s2 + $0xc] sm:$0xf] %v437
  // Predicated region
  $region10: #{wgan_discriminator_forward.8} parent=0 // pred_check
    _
  $region11: #{wgan_discriminator_forward.8} parent=0 // pred_check_branch
    %447 = sbr.rel (0) target = $region13
  $region12: #{wgan_discriminator_forward.8} parent=0 // pred_region
    _
  $region13: #{wgan_discriminator_forward.8} parent=0 // pred_fallthru
    _
  // Predicated region
  $region14: #{wgan_discriminator_forward.8} parent=0 // pred_check
    _
  $region15: #{wgan_discriminator_forward.8} parent=0 // pred_check_branch
    %449 = sbr.rel (0) target = $region17
  $region16: #{wgan_discriminator_forward.8} parent=0 // pred_region
    _
  $region17: #{wgan_discriminator_forward.8} parent=0 // pred_fallthru
    _

// kernel: wgan_discriminator_forward.9
$region0: #{wgan_discriminator_forward.9}
  #allocation0 [shape = 'u32[]', space=smem, size = 0x4, offset = 0x4, fixed_abs, tag = 'smem constant byte address 0x4 - core index']
  #allocation1 [shape = 'u32[144,128]{1,0:T(1,128)}', space=vmem, size = 0x12000, scoped, tag = 'internal scratch']
  %s0 = inlined_call_operand.vmem [shape: bf16[16,1024], index: 0, kind: input, shape index: {}]
  %s1 = inlined_call_operand.vmem [shape: bf16[1024,128], index: 1, kind: input, shape index: {}]
  %s2 = inlined_call_operand.vmem [shape: f32[16,128], index: 2, kind: output, shape index: {}]
  %s3 = sld [smem:[#allocation0]]
  $region18: #{wgan_discriminator_forward.9} parent=0
    _
  %s5 = ssub.s32 1, %s3
  %s6 = scalar_select 0, %s5, %s3
  // Predicated region
  $region2: #{wgan_discriminator_forward.9} parent=0 // pred_check
    _
  $region3: #{wgan_discriminator_forward.9} parent=0 // pred_check_branch
    %8 = sbr.rel (0) target = $region5
  $region4: #{wgan_discriminator_forward.9} parent=0 // pred_region
    _
  $region5: #{wgan_discriminator_forward.9} parent=0 // pred_fallthru
    _
  // Predicated region
  $region6: #{wgan_discriminator_forward.9} parent=0 // pred_check
    _
  $region7: #{wgan_discriminator_forward.9} parent=0 // pred_check_branch
    %10 = sbr.rel (0) target = $region9
  $region8: #{wgan_discriminator_forward.9} parent=0 // pred_region
    _
  $region9: #{wgan_discriminator_forward.9} parent=0 // pred_fallthru
    _
  %v12 = vld [vmem:[%s0] sm:$0xff]
  %v13 = vld [vmem:[%s0 + $0x8] sm:$0xff]
  %v14 = vld [vmem:[%s0 + $0x10] sm:$0xff]
  %v15 = vld [vmem:[%s0 + $0x18] sm:$0xff]
  %v16 = vld [vmem:[%s0 + $0x20] sm:$0xff]
  %v17 = vld [vmem:[%s0 + $0x28] sm:$0xff]
  %v18 = vld [vmem:[%s0 + $0x30] sm:$0xff]
  %v19 = vld [vmem:[%s0 + $0x38] sm:$0xff]
  %v20 = vld [vmem:[%s1] sm:$0xf]
  %v21 = vld [vmem:[%s1 + $0x4] sm:$0xf]
  %v22 = vld [vmem:[%s1 + $0x8] sm:$0xf]
  %v23 = vld [vmem:[%s1 + $0xc] sm:$0xf]
  %v24 = vld [vmem:[%s1 + $0x10] sm:$0xf]
  %v25 = vld [vmem:[%s1 + $0x14] sm:$0xf]
  %v26 = vld [vmem:[%s1 + $0x18] sm:$0xf]
  %v27 = vld [vmem:[%s1 + $0x1c] sm:$0xf]
  %v28 = vld [vmem:[%s1 + $0x20] sm:$0xf]
  %v29 = vld [vmem:[%s1 + $0x24] sm:$0xf]
  %v30 = vld [vmem:[%s1 + $0x28] sm:$0xf]
  %v31 = vld [vmem:[%s1 + $0x2c] sm:$0xf]
  %v32 = vld [vmem:[%s1 + $0x30] sm:$0xf]
  %v33 = vld [vmem:[%s1 + $0x34] sm:$0xf]
  %v34 = vld [vmem:[%s1 + $0x38] sm:$0xf]
  %v35 = vld [vmem:[%s1 + $0x3c] sm:$0xf]
  %v36 = vld [vmem:[%s1 + $0x40] sm:$0xf]
  %v37 = vld [vmem:[%s1 + $0x44] sm:$0xf]
  %v38 = vld [vmem:[%s1 + $0x48] sm:$0xf]
  %v39 = vld [vmem:[%s1 + $0x4c] sm:$0xf]
  %v40 = vld [vmem:[%s1 + $0x50] sm:$0xf]
  %v41 = vld [vmem:[%s1 + $0x54] sm:$0xf]
  %v42 = vld [vmem:[%s1 + $0x58] sm:$0xf]
  %v43 = vld [vmem:[%s1 + $0x5c] sm:$0xf]
  %v44 = vld [vmem:[%s1 + $0x60] sm:$0xf]
  %v45 = vld [vmem:[%s1 + $0x64] sm:$0xf]
  %v46 = vld [vmem:[%s1 + $0x68] sm:$0xf]
  %v47 = vld [vmem:[%s1 + $0x6c] sm:$0xf]
  %v48 = vld [vmem:[%s1 + $0x70] sm:$0xf]
  %v49 = vld [vmem:[%s1 + $0x74] sm:$0xf]
  %v50 = vld [vmem:[%s1 + $0x78] sm:$0xf]
  %v51 = vld [vmem:[%s1 + $0x7c] sm:$0xf]
  %v52 = vld [vmem:[%s1 + $0x80] sm:$0xf]
  %v53 = vld [vmem:[%s1 + $0x84] sm:$0xf]
  %v54 = vld [vmem:[%s1 + $0x88] sm:$0xf]
  %v55 = vld [vmem:[%s1 + $0x8c] sm:$0xf]
  %v56 = vld [vmem:[%s1 + $0x90] sm:$0xf]
  %v57 = vld [vmem:[%s1 + $0x94] sm:$0xf]
  %v58 = vld [vmem:[%s1 + $0x98] sm:$0xf]
  %v59 = vld [vmem:[%s1 + $0x9c] sm:$0xf]
  %v60 = vld [vmem:[%s1 + $0xa0] sm:$0xf]
  %v61 = vld [vmem:[%s1 + $0xa4] sm:$0xf]
  %v62 = vld [vmem:[%s1 + $0xa8] sm:$0xf]
  %v63 = vld [vmem:[%s1 + $0xac] sm:$0xf]
  %v64 = vld [vmem:[%s1 + $0xb0] sm:$0xf]
  %v65 = vld [vmem:[%s1 + $0xb4] sm:$0xf]
  %v66 = vld [vmem:[%s1 + $0xb8] sm:$0xf]
  %v67 = vld [vmem:[%s1 + $0xbc] sm:$0xf]
  %v68 = vld [vmem:[%s1 + $0xc0] sm:$0xf]
  %v69 = vld [vmem:[%s1 + $0xc4] sm:$0xf]
  %v70 = vld [vmem:[%s1 + $0xc8] sm:$0xf]
  %v71 = vld [vmem:[%s1 + $0xcc] sm:$0xf]
  %v72 = vld [vmem:[%s1 + $0xd0] sm:$0xf]
  %v73 = vld [vmem:[%s1 + $0xd4] sm:$0xf]
  %v74 = vld [vmem:[%s1 + $0xd8] sm:$0xf]
  %v75 = vld [vmem:[%s1 + $0xdc] sm:$0xf]
  %v76 = vld [vmem:[%s1 + $0xe0] sm:$0xf]
  %v77 = vld [vmem:[%s1 + $0xe4] sm:$0xf]
  %v78 = vld [vmem:[%s1 + $0xe8] sm:$0xf]
  %v79 = vld [vmem:[%s1 + $0xec] sm:$0xf]
  %v80 = vld [vmem:[%s1 + $0xf0] sm:$0xf]
  %v81 = vld [vmem:[%s1 + $0xf4] sm:$0xf]
  %v82 = vld [vmem:[%s1 + $0xf8] sm:$0xf]
  %v83 = vld [vmem:[%s1 + $0xfc] sm:$0xf]
  %v84 = vld [vmem:[%s1 + $0x100] sm:$0xf]
  %v85 = vld [vmem:[%s1 + $0x104] sm:$0xf]
  %v86 = vld [vmem:[%s1 + $0x108] sm:$0xf]
  %v87 = vld [vmem:[%s1 + $0x10c] sm:$0xf]
  %v88 = vld [vmem:[%s1 + $0x110] sm:$0xf]
  %v89 = vld [vmem:[%s1 + $0x114] sm:$0xf]
  %v90 = vld [vmem:[%s1 + $0x118] sm:$0xf]
  %v91 = vld [vmem:[%s1 + $0x11c] sm:$0xf]
  %v92 = vld [vmem:[%s1 + $0x120] sm:$0xf]
  %v93 = vld [vmem:[%s1 + $0x124] sm:$0xf]
  %v94 = vld [vmem:[%s1 + $0x128] sm:$0xf]
  %v95 = vld [vmem:[%s1 + $0x12c] sm:$0xf]
  %v96 = vld [vmem:[%s1 + $0x130] sm:$0xf]
  %v97 = vld [vmem:[%s1 + $0x134] sm:$0xf]
  %v98 = vld [vmem:[%s1 + $0x138] sm:$0xf]
  %v99 = vld [vmem:[%s1 + $0x13c] sm:$0xf]
  %v100 = vld [vmem:[%s1 + $0x140] sm:$0xf]
  %v101 = vld [vmem:[%s1 + $0x144] sm:$0xf]
  %v102 = vld [vmem:[%s1 + $0x148] sm:$0xf]
  %v103 = vld [vmem:[%s1 + $0x14c] sm:$0xf]
  %v104 = vld [vmem:[%s1 + $0x150] sm:$0xf]
  %v105 = vld [vmem:[%s1 + $0x154] sm:$0xf]
  %v106 = vld [vmem:[%s1 + $0x158] sm:$0xf]
  %v107 = vld [vmem:[%s1 + $0x15c] sm:$0xf]
  %v108 = vld [vmem:[%s1 + $0x160] sm:$0xf]
  %v109 = vld [vmem:[%s1 + $0x164] sm:$0xf]
  %v110 = vld [vmem:[%s1 + $0x168] sm:$0xf]
  %v111 = vld [vmem:[%s1 + $0x16c] sm:$0xf]
  %v112 = vld [vmem:[%s1 + $0x170] sm:$0xf]
  %v113 = vld [vmem:[%s1 + $0x174] sm:$0xf]
  %v114 = vld [vmem:[%s1 + $0x178] sm:$0xf]
  %v115 = vld [vmem:[%s1 + $0x17c] sm:$0xf]
  %v116 = vld [vmem:[%s1 + $0x180] sm:$0xf]
  %v117 = vld [vmem:[%s1 + $0x184] sm:$0xf]
  %v118 = vld [vmem:[%s1 + $0x188] sm:$0xf]
  %v119 = vld [vmem:[%s1 + $0x18c] sm:$0xf]
  %v120 = vld [vmem:[%s1 + $0x190] sm:$0xf]
  %v121 = vld [vmem:[%s1 + $0x194] sm:$0xf]
  %v122 = vld [vmem:[%s1 + $0x198] sm:$0xf]
  %v123 = vld [vmem:[%s1 + $0x19c] sm:$0xf]
  %v124 = vld [vmem:[%s1 + $0x1a0] sm:$0xf]
  %v125 = vld [vmem:[%s1 + $0x1a4] sm:$0xf]
  %v126 = vld [vmem:[%s1 + $0x1a8] sm:$0xf]
  %v127 = vld [vmem:[%s1 + $0x1ac] sm:$0xf]
  %v128 = vld [vmem:[%s1 + $0x1b0] sm:$0xf]
  %v129 = vld [vmem:[%s1 + $0x1b4] sm:$0xf]
  %v130 = vld [vmem:[%s1 + $0x1b8] sm:$0xf]
  %v131 = vld [vmem:[%s1 + $0x1bc] sm:$0xf]
  %v132 = vld [vmem:[%s1 + $0x1c0] sm:$0xf]
  %v133 = vld [vmem:[%s1 + $0x1c4] sm:$0xf]
  %v134 = vld [vmem:[%s1 + $0x1c8] sm:$0xf]
  %v135 = vld [vmem:[%s1 + $0x1cc] sm:$0xf]
  %v136 = vld [vmem:[%s1 + $0x1d0] sm:$0xf]
  %v137 = vld [vmem:[%s1 + $0x1d4] sm:$0xf]
  %v138 = vld [vmem:[%s1 + $0x1d8] sm:$0xf]
  %v139 = vld [vmem:[%s1 + $0x1dc] sm:$0xf]
  %v140 = vld [vmem:[%s1 + $0x1e0] sm:$0xf]
  %v141 = vld [vmem:[%s1 + $0x1e4] sm:$0xf]
  %v142 = vld [vmem:[%s1 + $0x1e8] sm:$0xf]
  %v143 = vld [vmem:[%s1 + $0x1ec] sm:$0xf]
  %v144 = vld [vmem:[%s1 + $0x1f0] sm:$0xf]
  %v145 = vld [vmem:[%s1 + $0x1f4] sm:$0xf]
  %v146 = vld [vmem:[%s1 + $0x1f8] sm:$0xf]
  %v147 = vld [vmem:[%s1 + $0x1fc] sm:$0xf]
  %v156 = vunpack.c.l.b16 %v12
  %v157 = vunpack.c.h.b16 %v12
  %v158 = vunpack.c.l.b16 %v13
  %v159 = vunpack.c.h.b16 %v13
  %v160 = vunpack.c.l.b16 %v14
  %v161 = vunpack.c.h.b16 %v14
  %v162 = vunpack.c.l.b16 %v15
  %v163 = vunpack.c.h.b16 %v15
  %v164 = vunpack.c.l.b16 %v16
  %v165 = vunpack.c.h.b16 %v16
  %v166 = vunpack.c.l.b16 %v17
  %v167 = vunpack.c.h.b16 %v17
  %v168 = vunpack.c.l.b16 %v18
  %v169 = vunpack.c.h.b16 %v18
  %v170 = vunpack.c.l.b16 %v19
  %v171 = vunpack.c.h.b16 %v19
  %v172 = vpack.c.b16 %v164, %v156
  %v173 = vpack.c.b16 %v165, %v157
  %v174 = vpack.c.b16 %v166, %v158
  %v175 = vpack.c.b16 %v167, %v159
  %v176 = vpack.c.b16 %v168, %v160
  %v177 = vpack.c.b16 %v169, %v161
  %v178 = vpack.c.b16 %v170, %v162
  %v179 = vpack.c.b16 %v171, %v163
  %v316 = vunpack.c.l.b16 %v20
  %v317 = vunpack.c.l.b16 %v21
  %v318 = vunpack.c.l.b16 %v22
  %v319 = vunpack.c.l.b16 %v23
  %v320 = vunpack.c.l.b16 %v24
  %v321 = vunpack.c.l.b16 %v25
  %v322 = vunpack.c.l.b16 %v26
  %v323 = vunpack.c.l.b16 %v27
  %v324 = vunpack.c.l.b16 %v28
  %v325 = vunpack.c.l.b16 %v29
  %v326 = vunpack.c.l.b16 %v30
  %v327 = vunpack.c.l.b16 %v31
  %v328 = vunpack.c.l.b16 %v32
  %v329 = vunpack.c.l.b16 %v33
  %v330 = vunpack.c.l.b16 %v34
  %v331 = vunpack.c.l.b16 %v35
  %v332 = vunpack.c.l.b16 %v36
  %v333 = vunpack.c.l.b16 %v37
  %v334 = vunpack.c.l.b16 %v38
  %v335 = vunpack.c.l.b16 %v39
  %v336 = vunpack.c.l.b16 %v40
  %v337 = vunpack.c.l.b16 %v41
  %v338 = vunpack.c.l.b16 %v42
  %v339 = vunpack.c.l.b16 %v43
  %v340 = vunpack.c.l.b16 %v44
  %v341 = vunpack.c.l.b16 %v45
  %v342 = vunpack.c.l.b16 %v46
  %v343 = vunpack.c.l.b16 %v47
  %v344 = vunpack.c.l.b16 %v48
  %v345 = vunpack.c.l.b16 %v49
  %v346 = vunpack.c.l.b16 %v50
  %v347 = vunpack.c.l.b16 %v51
  %v348 = vunpack.c.l.b16 %v52
  %v349 = vunpack.c.l.b16 %v53
  %v350 = vunpack.c.l.b16 %v54
  %v351 = vunpack.c.l.b16 %v55
  %v352 = vunpack.c.l.b16 %v56
  %v353 = vunpack.c.l.b16 %v57
  %v354 = vunpack.c.l.b16 %v58
  %v355 = vunpack.c.l.b16 %v59
  %v356 = vunpack.c.l.b16 %v60
  %v357 = vunpack.c.l.b16 %v61
  %v358 = vunpack.c.l.b16 %v62
  %v359 = vunpack.c.l.b16 %v63
  %v360 = vunpack.c.l.b16 %v64
  %v361 = vunpack.c.l.b16 %v65
  %v362 = vunpack.c.l.b16 %v66
  %v363 = vunpack.c.l.b16 %v67
  %v364 = vunpack.c.l.b16 %v68
  %v365 = vunpack.c.l.b16 %v69
  %v366 = vunpack.c.l.b16 %v70
  %v367 = vunpack.c.l.b16 %v71
  %v368 = vunpack.c.l.b16 %v72
  %v369 = vunpack.c.l.b16 %v73
  %v370 = vunpack.c.l.b16 %v74
  %v371 = vunpack.c.l.b16 %v75
  %v372 = vunpack.c.l.b16 %v76
  %v373 = vunpack.c.l.b16 %v77
  %v374 = vunpack.c.l.b16 %v78
  %v375 = vunpack.c.l.b16 %v79
  %v376 = vunpack.c.l.b16 %v80
  %v377 = vunpack.c.l.b16 %v81
  %v378 = vunpack.c.l.b16 %v82
  %v379 = vunpack.c.l.b16 %v83
  %v380 = vunpack.c.l.b16 %v84
  %v381 = vunpack.c.l.b16 %v85
  %v382 = vunpack.c.l.b16 %v86
  %v383 = vunpack.c.l.b16 %v87
  %v384 = vunpack.c.l.b16 %v88
  %v385 = vunpack.c.l.b16 %v89
  %v386 = vunpack.c.l.b16 %v90
  %v387 = vunpack.c.l.b16 %v91
  %v388 = vunpack.c.l.b16 %v92
  %v389 = vunpack.c.l.b16 %v93
  %v390 = vunpack.c.l.b16 %v94
  %v391 = vunpack.c.l.b16 %v95
  %v392 = vunpack.c.l.b16 %v96
  %v393 = vunpack.c.l.b16 %v97
  %v394 = vunpack.c.l.b16 %v98
  %v395 = vunpack.c.l.b16 %v99
  %v396 = vunpack.c.l.b16 %v100
  %v397 = vunpack.c.l.b16 %v101
  %v398 = vunpack.c.l.b16 %v102
  %v399 = vunpack.c.l.b16 %v103
  %v400 = vunpack.c.l.b16 %v104
  %v401 = vunpack.c.l.b16 %v105
  %v402 = vunpack.c.l.b16 %v106
  %v403 = vunpack.c.l.b16 %v107
  %v404 = vunpack.c.l.b16 %v108
  %v405 = vunpack.c.l.b16 %v109
  %v406 = vunpack.c.l.b16 %v110
  %v407 = vunpack.c.l.b16 %v111
  %v408 = vunpack.c.l.b16 %v112
  %v409 = vunpack.c.l.b16 %v113
  %v410 = vunpack.c.l.b16 %v114
  %v411 = vunpack.c.l.b16 %v115
  %v412 = vunpack.c.l.b16 %v116
  %v413 = vunpack.c.l.b16 %v117
  %v414 = vunpack.c.l.b16 %v118
  %v415 = vunpack.c.l.b16 %v119
  %v416 = vunpack.c.l.b16 %v120
  %v417 = vunpack.c.l.b16 %v121
  %v418 = vunpack.c.l.b16 %v122
  %v419 = vunpack.c.l.b16 %v123
  %v420 = vunpack.c.l.b16 %v124
  %v421 = vunpack.c.l.b16 %v125
  %v422 = vunpack.c.l.b16 %v126
  %v423 = vunpack.c.l.b16 %v127
  %v424 = vunpack.c.l.b16 %v128
  %v425 = vunpack.c.l.b16 %v129
  %v426 = vunpack.c.l.b16 %v130
  %v427 = vunpack.c.l.b16 %v131
  %v428 = vunpack.c.l.b16 %v132
  %v429 = vunpack.c.l.b16 %v133
  %v430 = vunpack.c.l.b16 %v134
  %v431 = vunpack.c.l.b16 %v135
  %v432 = vunpack.c.l.b16 %v136
  %v433 = vunpack.c.l.b16 %v137
  %v434 = vunpack.c.l.b16 %v138
  %v435 = vunpack.c.l.b16 %v139
  %v436 = vunpack.c.l.b16 %v140
  %v437 = vunpack.c.l.b16 %v141
  %v438 = vunpack.c.l.b16 %v142
  %v439 = vunpack.c.l.b16 %v143
  %v440 = vunpack.c.l.b16 %v144
  %v441 = vunpack.c.l.b16 %v145
  %v442 = vunpack.c.l.b16 %v146
  %v443 = vunpack.c.l.b16 %v147
  %v444 = vpack.c.b16 %v317, %v316
  %v445 = vpack.c.b16 %v319, %v318
  %v446 = vpack.c.b16 %v321, %v320
  %v447 = vpack.c.b16 %v323, %v322
  %v448 = vpack.c.b16 %v325, %v324
  %v449 = vpack.c.b16 %v327, %v326
  %v450 = vpack.c.b16 %v329, %v328
  %v451 = vpack.c.b16 %v331, %v330
  %v452 = vpack.c.b16 %v333, %v332
  %v453 = vpack.c.b16 %v335, %v334
  %v454 = vpack.c.b16 %v337, %v336
  %v455 = vpack.c.b16 %v339, %v338
  %v456 = vpack.c.b16 %v341, %v340
  %v457 = vpack.c.b16 %v343, %v342
  %v458 = vpack.c.b16 %v345, %v344
  %v459 = vpack.c.b16 %v347, %v346
  %v460 = vpack.c.b16 %v349, %v348
  %v461 = vpack.c.b16 %v351, %v350
  %v462 = vpack.c.b16 %v353, %v352
  %v463 = vpack.c.b16 %v355, %v354
  %v464 = vpack.c.b16 %v357, %v356
  %v465 = vpack.c.b16 %v359, %v358
  %v466 = vpack.c.b16 %v361, %v360
  %v467 = vpack.c.b16 %v363, %v362
  %v468 = vpack.c.b16 %v365, %v364
  %v469 = vpack.c.b16 %v367, %v366
  %v470 = vpack.c.b16 %v369, %v368
  %v471 = vpack.c.b16 %v371, %v370
  %v472 = vpack.c.b16 %v373, %v372
  %v473 = vpack.c.b16 %v375, %v374
  %v474 = vpack.c.b16 %v377, %v376
  %v475 = vpack.c.b16 %v379, %v378
  %v476 = vpack.c.b16 %v381, %v380
  %v477 = vpack.c.b16 %v383, %v382
  %v478 = vpack.c.b16 %v385, %v384
  %v479 = vpack.c.b16 %v387, %v386
  %v480 = vpack.c.b16 %v389, %v388
  %v481 = vpack.c.b16 %v391, %v390
  %v482 = vpack.c.b16 %v393, %v392
  %v483 = vpack.c.b16 %v395, %v394
  %v484 = vpack.c.b16 %v397, %v396
  %v485 = vpack.c.b16 %v399, %v398
  %v486 = vpack.c.b16 %v401, %v400
  %v487 = vpack.c.b16 %v403, %v402
  %v488 = vpack.c.b16 %v405, %v404
  %v489 = vpack.c.b16 %v407, %v406
  %v490 = vpack.c.b16 %v409, %v408
  %v491 = vpack.c.b16 %v411, %v410
  %v492 = vpack.c.b16 %v413, %v412
  %v493 = vpack.c.b16 %v415, %v414
  %v494 = vpack.c.b16 %v417, %v416
  %v495 = vpack.c.b16 %v419, %v418
  %v496 = vpack.c.b16 %v421, %v420
  %v497 = vpack.c.b16 %v423, %v422
  %v498 = vpack.c.b16 %v425, %v424
  %v499 = vpack.c.b16 %v427, %v426
  %v500 = vpack.c.b16 %v429, %v428
  %v501 = vpack.c.b16 %v431, %v430
  %v502 = vpack.c.b16 %v433, %v432
  %v503 = vpack.c.b16 %v435, %v434
  %v504 = vpack.c.b16 %v437, %v436
  %v505 = vpack.c.b16 %v439, %v438
  %v506 = vpack.c.b16 %v441, %v440
  %v507 = vpack.c.b16 %v443, %v442
  %572 = vmatprep.subr.bf16.mxu0 0
  %573 = vmatpush1.bf16.msra.mxu0 %v451
  %574 = vmatprep.subr.bf16.mxu0 0
  %575 = vmatpush1.bf16.msra.mxu0 %v450
  %576 = vmatprep.subr.bf16.mxu0 0
  %577 = vmatpush1.bf16.msra.mxu0 %v449
  %578 = vmatprep.subr.bf16.mxu0 0
  %579 = vmatpush1.bf16.msra.mxu0 %v448
  %580 = vmatprep.subr.bf16.mxu0 0
  %581 = vmatpush1.bf16.msra.mxu0 %v447
  %582 = vmatprep.subr.bf16.mxu0 0
  %583 = vmatpush1.bf16.msra.mxu0 %v446
  %584 = vmatprep.subr.bf16.mxu0 0
  %585 = vmatpush1.bf16.msra.mxu0 %v445
  %586 = vmatprep.subr.bf16.mxu0 0
  %587 = vmatpush1.bf16.msra.mxu0 %v444
  %588 = vmatprep.subr.bf16.mxu0 0
  %589 = vmatpush2.bf16.msra.mxu0 %v459
  %590 = vmatprep.subr.bf16.mxu0 0
  %591 = vmatpush2.bf16.msra.mxu0 %v458
  %592 = vmatprep.subr.bf16.mxu0 0
  %593 = vmatpush2.bf16.msra.mxu0 %v457
  %594 = vmatprep.subr.bf16.mxu0 0
  %595 = vmatpush2.bf16.msra.mxu0 %v456
  %596 = vmatprep.subr.bf16.mxu0 0
  %597 = vmatpush2.bf16.msra.mxu0 %v455
  %598 = vmatprep.subr.bf16.mxu0 0
  %599 = vmatpush2.bf16.msra.mxu0 %v454
  %600 = vmatprep.subr.bf16.mxu0 0
  %601 = vmatpush2.bf16.msra.mxu0 %v453
  %602 = vmatprep.subr.bf16.mxu0 0
  %603 = vmatpush2.bf16.msra.mxu0 %v452
  %604 = vmatprep.mubr.bf16.mxu0 %v173
  %605 = vmatmul.mubr.bf16.gmra.mxu0 %v172
  %v606 = vpop.f32.mrf.mxu0
  %v607 = vadd.f32 0.0, %v606
  %v608 = vpop.f32.mrf.mxu0
  %v609 = vpop.f32.mrf.mxu0
  %v610 = vadd.f32 0.0, %v609
  %v611 = vpop.f32.mrf.mxu0
  %612 = vdwg.mxu0
  %613 = vmatprep.subr.bf16.mxu0 0
  %614 = vmatpush1.bf16.msra.mxu0 %v467
  %615 = vmatprep.subr.bf16.mxu0 0
  %616 = vmatpush1.bf16.msra.mxu0 %v466
  %617 = vmatprep.subr.bf16.mxu0 0
  %618 = vmatpush1.bf16.msra.mxu0 %v465
  %619 = vmatprep.subr.bf16.mxu0 0
  %620 = vmatpush1.bf16.msra.mxu0 %v464
  %621 = vmatprep.subr.bf16.mxu0 0
  %622 = vmatpush1.bf16.msra.mxu0 %v463
  %623 = vmatprep.subr.bf16.mxu0 0
  %624 = vmatpush1.bf16.msra.mxu0 %v462
  %625 = vmatprep.subr.bf16.mxu0 0
  %626 = vmatpush1.bf16.msra.mxu0 %v461
  %627 = vmatprep.subr.bf16.mxu0 0
  %628 = vmatpush1.bf16.msra.mxu0 %v460
  %629 = vmatprep.subr.bf16.mxu0 0
  %630 = vmatpush2.bf16.msra.mxu0 %v475
  %631 = vmatprep.subr.bf16.mxu0 0
  %632 = vmatpush2.bf16.msra.mxu0 %v474
  %633 = vmatprep.subr.bf16.mxu0 0
  %634 = vmatpush2.bf16.msra.mxu0 %v473
  %635 = vmatprep.subr.bf16.mxu0 0
  %636 = vmatpush2.bf16.msra.mxu0 %v472
  %637 = vmatprep.subr.bf16.mxu0 0
  %638 = vmatpush2.bf16.msra.mxu0 %v471
  %639 = vmatprep.subr.bf16.mxu0 0
  %640 = vmatpush2.bf16.msra.mxu0 %v470
  %641 = vmatprep.subr.bf16.mxu0 0
  %642 = vmatpush2.bf16.msra.mxu0 %v469
  %643 = vmatprep.subr.bf16.mxu0 0
  %644 = vmatpush2.bf16.msra.mxu0 %v468
  %645 = vmatprep.mubr.bf16.mxu0 %v175
  %646 = vmatmul.mubr.bf16.gmra.mxu0 %v174
  %v647 = vpop.f32.mrf.mxu0
  %v648 = vadd.f32 %v607, %v647
  %v649 = vpop.f32.mrf.mxu0
  %v650 = vpop.f32.mrf.mxu0
  %v651 = vadd.f32 %v610, %v650
  %v652 = vpop.f32.mrf.mxu0
  %653 = vdwg.mxu0
  %654 = vmatprep.subr.bf16.mxu0 0
  %655 = vmatpush1.bf16.msra.mxu0 %v483
  %656 = vmatprep.subr.bf16.mxu0 0
  %657 = vmatpush1.bf16.msra.mxu0 %v482
  %658 = vmatprep.subr.bf16.mxu0 0
  %659 = vmatpush1.bf16.msra.mxu0 %v481
  %660 = vmatprep.subr.bf16.mxu0 0
  %661 = vmatpush1.bf16.msra.mxu0 %v480
  %662 = vmatprep.subr.bf16.mxu0 0
  %663 = vmatpush1.bf16.msra.mxu0 %v479
  %664 = vmatprep.subr.bf16.mxu0 0
  %665 = vmatpush1.bf16.msra.mxu0 %v478
  %666 = vmatprep.subr.bf16.mxu0 0
  %667 = vmatpush1.bf16.msra.mxu0 %v477
  %668 = vmatprep.subr.bf16.mxu0 0
  %669 = vmatpush1.bf16.msra.mxu0 %v476
  %670 = vmatprep.subr.bf16.mxu0 0
  %671 = vmatpush2.bf16.msra.mxu0 %v491
  %672 = vmatprep.subr.bf16.mxu0 0
  %673 = vmatpush2.bf16.msra.mxu0 %v490
  %674 = vmatprep.subr.bf16.mxu0 0
  %675 = vmatpush2.bf16.msra.mxu0 %v489
  %676 = vmatprep.subr.bf16.mxu0 0
  %677 = vmatpush2.bf16.msra.mxu0 %v488
  %678 = vmatprep.subr.bf16.mxu0 0
  %679 = vmatpush2.bf16.msra.mxu0 %v487
  %680 = vmatprep.subr.bf16.mxu0 0
  %681 = vmatpush2.bf16.msra.mxu0 %v486
  %682 = vmatprep.subr.bf16.mxu0 0
  %683 = vmatpush2.bf16.msra.mxu0 %v485
  %684 = vmatprep.subr.bf16.mxu0 0
  %685 = vmatpush2.bf16.msra.mxu0 %v484
  %686 = vmatprep.mubr.bf16.mxu0 %v177
  %687 = vmatmul.mubr.bf16.gmra.mxu0 %v176
  %v688 = vpop.f32.mrf.mxu0
  %v689 = vadd.f32 %v648, %v688
  %v690 = vpop.f32.mrf.mxu0
  %v691 = vpop.f32.mrf.mxu0
  %v692 = vadd.f32 %v651, %v691
  %v693 = vpop.f32.mrf.mxu0
  %694 = vdwg.mxu0
  %695 = vmatprep.subr.bf16.mxu0 0
  %696 = vmatpush1.bf16.msra.mxu0 %v499
  %697 = vmatprep.subr.bf16.mxu0 0
  %698 = vmatpush1.bf16.msra.mxu0 %v498
  %699 = vmatprep.subr.bf16.mxu0 0
  %700 = vmatpush1.bf16.msra.mxu0 %v497
  %701 = vmatprep.subr.bf16.mxu0 0
  %702 = vmatpush1.bf16.msra.mxu0 %v496
  %703 = vmatprep.subr.bf16.mxu0 0
  %704 = vmatpush1.bf16.msra.mxu0 %v495
  %705 = vmatprep.subr.bf16.mxu0 0
  %706 = vmatpush1.bf16.msra.mxu0 %v494
  %707 = vmatprep.subr.bf16.mxu0 0
  %708 = vmatpush1.bf16.msra.mxu0 %v493
  %709 = vmatprep.subr.bf16.mxu0 0
  %710 = vmatpush1.bf16.msra.mxu0 %v492
  %711 = vmatprep.subr.bf16.mxu0 0
  %712 = vmatpush2.bf16.msra.mxu0 %v507
  %713 = vmatprep.subr.bf16.mxu0 0
  %714 = vmatpush2.bf16.msra.mxu0 %v506
  %715 = vmatprep.subr.bf16.mxu0 0
  %716 = vmatpush2.bf16.msra.mxu0 %v505
  %717 = vmatprep.subr.bf16.mxu0 0
  %718 = vmatpush2.bf16.msra.mxu0 %v504
  %719 = vmatprep.subr.bf16.mxu0 0
  %720 = vmatpush2.bf16.msra.mxu0 %v503
  %721 = vmatprep.subr.bf16.mxu0 0
  %722 = vmatpush2.bf16.msra.mxu0 %v502
  %723 = vmatprep.subr.bf16.mxu0 0
  %724 = vmatpush2.bf16.msra.mxu0 %v501
  %725 = vmatprep.subr.bf16.mxu0 0
  %726 = vmatpush2.bf16.msra.mxu0 %v500
  %727 = vmatprep.mubr.bf16.mxu0 %v179
  %728 = vmatmul.mubr.bf16.gmra.mxu0 %v178
  %v729 = vpop.f32.mrf.mxu0
  %v730 = vadd.f32 %v689, %v729
  %v731 = vpop.f32.mrf.mxu0
  %v732 = vpop.f32.mrf.mxu0
  %v733 = vadd.f32 %v692, %v732
  %v734 = vpop.f32.mrf.mxu0
  %735 = vdwg.mxu0
  %736 = vst [vmem:[%s2] sm:$0xff] %v730
  %737 = vst [vmem:[%s2 + $0x8] sm:$0xff] %v733
  // Predicated region
  $region10: #{wgan_discriminator_forward.9} parent=0 // pred_check
    _
  $region11: #{wgan_discriminator_forward.9} parent=0 // pred_check_branch
    %739 = sbr.rel (0) target = $region13
  $region12: #{wgan_discriminator_forward.9} parent=0 // pred_region
    _
  $region13: #{wgan_discriminator_forward.9} parent=0 // pred_fallthru
    _
  // Predicated region
  $region14: #{wgan_discriminator_forward.9} parent=0 // pred_check
    _
  $region15: #{wgan_discriminator_forward.9} parent=0 // pred_check_branch
    %741 = sbr.rel (0) target = $region17
  $region16: #{wgan_discriminator_forward.9} parent=0 // pred_region
    _
  $region17: #{wgan_discriminator_forward.9} parent=0 // pred_fallthru
    _

</llo_original>
